<compile_context>
chip_gen: v7x
topology: tpu7x:2x2x1
jax: 0.10.0
libtpu: 0.0.40
codegen_flags: <defaults>
</compile_context>

<pallas_src>
import jax
import jax.numpy as jnp
from jax import lax
from jax.experimental import pallas as pl
from jax.experimental.pallas import tpu as pltpu

NHEAD = 10
LN_EPS = 1e-5


def _layer_norm(x, w, b):
    mu = jnp.mean(x, axis=-1, keepdims=True)
    xc = x - mu
    var = jnp.mean(xc * xc, axis=-1, keepdims=True)
    return xc * lax.rsqrt(var + LN_EPS) * w + b


def transformer_kernel(
    x_ref,
    wqkv_ref, bqkv_ref,
    wo_ref, bo_ref,
    ln1_w_ref, ln1_b_ref,
    ff1_w_ref, ff1_b_ref, ff2_w_ref, ff2_b_ref,
    ln2_w_ref, ln2_b_ref,
    head_w_ref, head_b_ref,
    mask_he_ref, grp_ref, grp_t_ref,
    out_ref,
):
    x = x_ref[...].astype(jnp.float32)               # [BB, S, E]
    BB, S, E = x.shape
    H = NHEAD
    hd = E // H
    HS = H * S
    cdt = wqkv_ref.dtype                              # matmul operand dtype (f32 or bf16)
    col = wqkv_ref.shape[1] // 3                       # 128-aligned column-block stride

    x2 = x.reshape(BB * S, E)                          # [BS, E]

    # ---- fused QKV projection; q/k/v column blocks live at 128-aligned
    # offsets so the slices below are pure vreg-group selections.
    qkv = jnp.dot(x2.astype(cdt), wqkv_ref[...],
                  preferred_element_type=jnp.float32) + bqkv_ref[...]
    q2 = qkv[:, 0:E]                                   # 1/sqrt(hd) folded into wq/bq
    k2 = qkv[:, col:col + E]
    v2 = qkv[:, 2 * col:2 * col + E]

    q3 = q2.reshape(BB, S, E)
    k3 = k2.reshape(BB, S, E)
    v3 = v2.reshape(BB, S, E)

    # ---- all-head attention via head-feature-masked K/V stacks (no hd=4
    # lane slicing).  mask_he[h, e] = (e // hd == h), precomputed in wrapper.
    mask_he = mask_he_ref[...]                         # [H, E]
    k_stack = (k3[:, None, :, :] * mask_he[None, :, None, :]).reshape(BB, HS, E)
    v_stack = (v3[:, None, :, :] * mask_he[None, :, None, :]).reshape(BB, HS, E)

    # scores: s[b, i, h*S + j] = <q_h[b, i, :], k_h[b, j, :]>
    s = jnp.einsum('bie,bme->bim', q3.astype(cdt), k_stack.astype(cdt),
                   preferred_element_type=jnp.float32)          # [BB, S, HS]
    s2 = s.reshape(BB * S, HS)
    s2 = s2 - jnp.max(s2, axis=-1, keepdims=True)      # per-row shift (valid per head)
    e2 = jnp.exp(s2)

    # per-head softmax denominators via group-indicator matmuls (constants
    # precomputed in the wrapper); reciprocal goes to the EUP slot.
    denom = jnp.dot(e2, grp_ref[...], preferred_element_type=jnp.float32)   # [BS, H]
    inv_b = jnp.dot(pl.reciprocal(denom, approx=True), grp_t_ref[...],
                    preferred_element_type=jnp.float32)                     # [BS, HS]
    p3 = (e2 * inv_b).reshape(BB, S, HS)

    # o[b, i, e] = sum_j softmax_h(s)[i, j] * v_h[b, j, e]   (e in head h)
    o3 = jnp.einsum('bim,bme->bie', p3.astype(cdt), v_stack.astype(cdt),
                    preferred_element_type=jnp.float32)          # [BB, S, E]

    attn2 = jnp.dot(o3.reshape(BB * S, E).astype(cdt), wo_ref[...],
                    preferred_element_type=jnp.float32) + bo_ref[...]

    # dropout (eval mode) = identity.
    h1 = _layer_norm(x2 + attn2, ln1_w_ref[...], ln1_b_ref[...])

    # ---- feed-forward (relu, dim_feedforward=2048)
    f = jnp.dot(h1.astype(cdt), ff1_w_ref[...],
                preferred_element_type=jnp.float32) + ff1_b_ref[...]
    f = jnp.maximum(f, 0.0)
    f = jnp.dot(f.astype(cdt), ff2_w_ref[...],
                preferred_element_type=jnp.float32) + ff2_b_ref[...]
    h2 = _layer_norm(h1 + f, ln2_w_ref[...], ln2_b_ref[...])

    # ---- mean over sequence: sublane reduction (XLU), not a matmul
    pooled = jnp.mean(h2.reshape(BB, S, E), axis=1)              # [BB, E]

    # ---- fused classification heads -> lane-dense 128-wide output
    logits = jnp.dot(pooled.astype(cdt), head_w_ref[...],
                     preferred_element_type=jnp.float32) + head_b_ref[...]
    out_ref[...] = logits.reshape(BB, 1, logits.shape[-1])


def _full_spec(shape):
    zeros = (0,) * len(shape)
    return pl.BlockSpec(shape, lambda i: zeros)


def _choose_batch_block(B, S, max_rows=1024):
    # Largest divisor of B with bb*S <= max_rows (v7x VMEM-safe FF intermediate)
    # and grid >= 2 whenever B >= 2 (pipelining + both v7x TensorCores).
    best = 1
    for bb in range(1, B + 1):
        if B % bb:
            continue
        if bb * S > max_rows:
            continue
        if B >= 2 and B // bb < 2:
            continue
        best = bb
    return best


def transformer_forward(x_emb, p, *, batch_block=None, use_bf16=True):
    B, S, E = x_emb.shape
    H = NHEAD
    assert E % H == 0, "emb_dim must be divisible by nhead"
    hd = E // H
    HS = H * S
    A = p['fc_article_w'].shape[0]
    C = p['fc_charge_w'].shape[0]
    n_out = A + C + 1
    OUT_PAD = ((n_out + 127) // 128) * 128

    bb = _choose_batch_block(B, S) if batch_block is None else batch_block
    assert B % bb == 0

    wdt = jnp.bfloat16 if use_bf16 else jnp.float32
    scale = 1.0 / float(hd) ** 0.5

    # ---- one-time wrapper-side layout plumbing (outside the kernel) ----
    in_w, in_b = p['in_proj_w'], p['in_proj_b']        # [3E, E], [1, 3E]
    wq_t = in_w[:E].T * scale                          # fold attention scale
    wk_t = in_w[E:2 * E].T
    wv_t = in_w[2 * E:].T
    bq = in_b[:, :E] * scale
    bk = in_b[:, E:2 * E]
    bv = in_b[:, 2 * E:]

    # fused QKV weight with 128-aligned column blocks -> lane-group slices
    col = ((E + 127) // 128) * 128
    wqkv = jnp.zeros((E, 3 * col), jnp.float32)
    wqkv = wqkv.at[:, 0:E].set(wq_t)
    wqkv = wqkv.at[:, col:col + E].set(wk_t)
    wqkv = wqkv.at[:, 2 * col:2 * col + E].set(wv_t)
    bqkv = jnp.zeros((1, 3 * col), jnp.float32)
    bqkv = bqkv.at[:, 0:E].set(bq)
    bqkv = bqkv.at[:, col:col + E].set(bk)
    bqkv = bqkv.at[:, 2 * col:2 * col + E].set(bv)

    wo_t = p['out_proj_w'].T
    ff1_t = p['ff1_w'].T                                # [E, FF]
    ff2_t = p['ff2_w'].T                                # [FF, E]
    FF = ff1_t.shape[1]

    head_w = jnp.concatenate([p['fc_article_w'], p['fc_charge_w'],
                              p['fc_judge_w']], axis=0)             # [A+C+1, E]
    head_w_t = jnp.pad(head_w.T, ((0, 0), (0, OUT_PAD - n_out)))     # [E, 128]
    head_b = jnp.pad(jnp.concatenate([p['fc_article_b'], p['fc_charge_b'],
                                      p['fc_judge_b']], axis=1),
                     ((0, 0), (0, OUT_PAD - n_out)))                 # [1, 128]

    # constants hoisted out of the kernel (built once, not per grid step)
    mask_he = (jnp.arange(E)[None, :] // hd
               == jnp.arange(H)[:, None]).astype(jnp.float32)        # [H, E]
    grp = (jnp.arange(HS)[:, None] // S
           == jnp.arange(H)[None, :]).astype(jnp.float32)            # [HS, H]
    grp_t = grp.T                                                    # [H, HS]

    # matmul-operand dtype (bf16 on v6e/v7x-friendly path); everything
    # elementwise stays f32.
    wqkv_c = wqkv.astype(wdt)
    wo_c = wo_t.astype(wdt)
    ff1_c = ff1_t.astype(wdt)
    ff2_c = ff2_t.astype(wdt)
    head_c = head_w_t.astype(wdt)

    in_specs = [
        pl.BlockSpec((bb, S, E), lambda i: (i, 0, 0)),
        _full_spec((E, 3 * col)), _full_spec((1, 3 * col)),   # fused qkv
        _full_spec((E, E)), _full_spec((1, E)),               # out proj
        _full_spec((1, E)), _full_spec((1, E)),               # ln1
        _full_spec((E, FF)), _full_spec((1, FF)),             # ff1
        _full_spec((FF, E)), _full_spec((1, E)),              # ff2
        _full_spec((1, E)), _full_spec((1, E)),               # ln2
        _full_spec((E, OUT_PAD)), _full_spec((1, OUT_PAD)),   # fused heads
        _full_spec((H, E)), _full_spec((HS, H)), _full_spec((H, HS)),  # constants
    ]

    out = pl.pallas_call(
        transformer_kernel,
        out_shape=jax.ShapeDtypeStruct((B, 1, OUT_PAD), jnp.float32),
        grid=(B // bb,),
        in_specs=in_specs,
        out_specs=pl.BlockSpec((bb, 1, OUT_PAD), lambda i: (i, 0, 0)),
        compiler_params=pltpu.CompilerParams(
            dimension_semantics=("parallel",),
            vmem_limit_bytes=48 * 1024 * 1024),
    )(x_emb, wqkv_c, bqkv, wo_c, p['out_proj_b'],
      p['ln1_w'], p['ln1_b'], ff1_c, p['ff1_b'], ff2_c, p['ff2_b'],
      p['ln2_w'], p['ln2_b'], head_c, head_b,
      mask_he, grp, grp_t)

    out = out[:, 0, :]
    return {'article': out[:, :A],
            'charge': out[:, A:A + C],
            'judge': out[:, A + C:A + C + 1]}


# ---------- pure-JAX reference (standard multi-head formulation) ----------
def reference_forward(x, p):
    B, S, E = x.shape
    H, hd = NHEAD, E // NHEAD
    qkv = x @ p['in_proj_w'].T + p['in_proj_b'][0]
    q, k, v = qkv[..., :E], qkv[..., E:2 * E], qkv[..., 2 * E:]
    split = lambda t: t.reshape(B, S, H, hd).transpose(0, 2, 1, 3)
    q, k, v = split(q), split(k), split(v)
    s = jnp.einsum('bhqd,bhkd->bhqk', q, k) / jnp.sqrt(float(hd))
    att = jax.nn.softmax(s, axis=-1)
    o = jnp.einsum('bhqk,bhkd->bhqd', att, v)
    o = o.transpose(0, 2, 1, 3).reshape(B, S, E)
    o = o @ p['out_proj_w'].T + p['out_proj_b'][0]
    h1 = _layer_norm(x + o, p['ln1_w'][0], p['ln1_b'][0])
    f = jax.nn.relu(h1 @ p['ff1_w'].T + p['ff1_b'][0])
    f = f @ p['ff2_w'].T + p['ff2_b'][0]
    h2 = _layer_norm(h1 + f, p['ln2_w'][0], p['ln2_b'][0])
    pooled = h2.mean(axis=1)
    return {'article': pooled @ p['fc_article_w'].T + p['fc_article_b'][0],
            'charge': pooled @ p['fc_charge_w'].T + p['fc_charge_b'][0],
            'judge': pooled @ p['fc_judge_w'].T + p['fc_judge_b'][0]}


def init_params(key, vocab, emb, ff, n_art, n_chg):
    ks = jax.random.split(key, 12)
    s = 0.02
    w = lambda k, shape: jax.random.normal(k, shape, jnp.float32) * s
    return {
        'embedding': w(ks[0], (vocab, emb)),          # synthetic "pretrained" vectors
        'in_proj_w': w(ks[1], (3 * emb, emb)),
        'in_proj_b': jnp.zeros((1, 3 * emb), jnp.float32),
        'out_proj_w': w(ks[2], (emb, emb)),
        'out_proj_b': jnp.zeros((1, emb), jnp.float32),
        'ln1_w': jnp.ones((1, emb), jnp.float32),
        'ln1_b': jnp.zeros((1, emb), jnp.float32),
        'ff1_w': w(ks[3], (ff, emb)),
        'ff1_b': w(ks[4], (1, ff)),
        'ff2_w': w(ks[5], (emb, ff)),
        'ff2_b': w(ks[6], (1, emb)),
        'ln2_w': jnp.ones((1, emb), jnp.float32),
        'ln2_b': jnp.zeros((1, emb), jnp.float32),
        'fc_article_w': w(ks[7], (n_art, emb)),
        'fc_article_b': w(ks[8], (1, n_art)),
        'fc_charge_w': w(ks[9], (n_chg, emb)),
        'fc_charge_b': w(ks[10], (1, n_chg)),
        'fc_judge_w': w(ks[11], (1, emb)),
        'fc_judge_b': jnp.zeros((1, 1), jnp.float32),
    }


if __name__ == "__main__":
    # Small shapes consistent with the module: emb_dim must divide nhead=10.
    B, S = 2, 8
    VOCAB, EMB, FF = 64, 40, 2048           # FF = TransformerEncoderLayer default
    N_ARTICLE, N_CHARGE = 10, 6             # len(maps['article2idx']), len(maps['charge2idx'])

    key = jax.random.PRNGKey(0)
    kp, kt = jax.random.split(key)
    params = init_params(kp, VOCAB, EMB, FF, N_ARTICLE, N_CHARGE)

    # data['fact']['input_ids'] -> embedding lookup (plain-JAX glue)
    input_ids = jax.random.randint(kt, (B, S), 0, VOCAB)
    x_emb = params['embedding'][input_ids]          # [B, S, EMB]

    ref = reference_forward(x_emb, params)

    # f32-operand path: near bit-tight vs the f32 reference.
    out32 = jax.block_until_ready(transformer_forward(x_emb, params, use_bf16=False))
    # bf16-operand / f32-accumulate path (default, MXU-rate path on v6e/v7x).
    out16 = jax.block_until_ready(transformer_forward(x_emb, params, use_bf16=True))

    for name in ('article', 'charge', 'judge'):
        assert out32[name].shape == ref[name].shape, name
        assert bool(jnp.all(jnp.isfinite(out32[name]))), name
        assert bool(jnp.allclose(out32[name], ref[name], rtol=5e-3, atol=5e-3)), name
        assert out16[name].shape == ref[name].shape, name
        assert bool(jnp.all(jnp.isfinite(out16[name]))), name
        assert bool(jnp.allclose(out16[name], ref[name], rtol=2e-2, atol=2e-2)), (name, 'bf16')

    print("KERNEL_OK")
</pallas_src>

<mosaic_0001>
module attributes {stable_mosaic.version = 11 : i64} {
  func.func @transformer_kernel(%arg0: i32, %arg1: memref<1x8x40xf32, #tpu.memory_space<vmem>>, %arg2: memref<40x384xf32, #tpu.memory_space<vmem>>, %arg3: memref<1x384xf32, #tpu.memory_space<vmem>>, %arg4: memref<40x40xf32, #tpu.memory_space<vmem>>, %arg5: memref<1x40xf32, #tpu.memory_space<vmem>>, %arg6: memref<1x40xf32, #tpu.memory_space<vmem>>, %arg7: memref<1x40xf32, #tpu.memory_space<vmem>>, %arg8: memref<40x2048xf32, #tpu.memory_space<vmem>>, %arg9: memref<1x2048xf32, #tpu.memory_space<vmem>>, %arg10: memref<2048x40xf32, #tpu.memory_space<vmem>>, %arg11: memref<1x40xf32, #tpu.memory_space<vmem>>, %arg12: memref<1x40xf32, #tpu.memory_space<vmem>>, %arg13: memref<1x40xf32, #tpu.memory_space<vmem>>, %arg14: memref<40x128xf32, #tpu.memory_space<vmem>>, %arg15: memref<1x128xf32, #tpu.memory_space<vmem>>, %arg16: memref<10x40xf32, #tpu.memory_space<vmem>>, %arg17: memref<80x10xf32, #tpu.memory_space<vmem>>, %arg18: memref<10x80xf32, #tpu.memory_space<vmem>>, %arg19: memref<1x1x128xf32, #tpu.memory_space<vmem>>) attributes {dimension_semantics = [#tpu.dimension_semantics<parallel>], iteration_bounds = array<i64: 2>, scalar_prefetch = 0 : i64, scratch_operands = 0 : i64, tpu.core_type = #tpu.core_type<tc>, window_params = [{transform_indices = @transform_0, window_bounds = array<i64: 1, 8, 40>}, {pipeline_mode = #tpu.pipeline_mode<synchronous>, transform_indices = @transform_1, window_bounds = array<i64: 40, 384>}, {pipeline_mode = #tpu.pipeline_mode<synchronous>, transform_indices = @transform_2, window_bounds = array<i64: 1, 384>}, {pipeline_mode = #tpu.pipeline_mode<synchronous>, transform_indices = @transform_3, window_bounds = array<i64: 40, 40>}, {pipeline_mode = #tpu.pipeline_mode<synchronous>, transform_indices = @transform_4, window_bounds = array<i64: 1, 40>}, {pipeline_mode = #tpu.pipeline_mode<synchronous>, transform_indices = @transform_5, window_bounds = array<i64: 1, 40>}, {pipeline_mode = #tpu.pipeline_mode<synchronous>, transform_indices = @transform_6, window_bounds = array<i64: 1, 40>}, {pipeline_mode = #tpu.pipeline_mode<synchronous>, transform_indices = @transform_7, window_bounds = array<i64: 40, 2048>}, {pipeline_mode = #tpu.pipeline_mode<synchronous>, transform_indices = @transform_8, window_bounds = array<i64: 1, 2048>}, {pipeline_mode = #tpu.pipeline_mode<synchronous>, transform_indices = @transform_9, window_bounds = array<i64: 2048, 40>}, {pipeline_mode = #tpu.pipeline_mode<synchronous>, transform_indices = @transform_10, window_bounds = array<i64: 1, 40>}, {pipeline_mode = #tpu.pipeline_mode<synchronous>, transform_indices = @transform_11, window_bounds = array<i64: 1, 40>}, {pipeline_mode = #tpu.pipeline_mode<synchronous>, transform_indices = @transform_12, window_bounds = array<i64: 1, 40>}, {pipeline_mode = #tpu.pipeline_mode<synchronous>, transform_indices = @transform_13, window_bounds = array<i64: 40, 128>}, {pipeline_mode = #tpu.pipeline_mode<synchronous>, transform_indices = @transform_14, window_bounds = array<i64: 1, 128>}, {pipeline_mode = #tpu.pipeline_mode<synchronous>, transform_indices = @transform_15, window_bounds = array<i64: 10, 40>}, {pipeline_mode = #tpu.pipeline_mode<synchronous>, transform_indices = @transform_16, window_bounds = array<i64: 80, 10>}, {pipeline_mode = #tpu.pipeline_mode<synchronous>, transform_indices = @transform_17, window_bounds = array<i64: 10, 80>}, {transform_indices = @transform_18, window_bounds = array<i64: 1, 1, 128>}]} {
    %c0 = arith.constant 0 : index
    %c0_0 = arith.constant 0 : index
    %c0_1 = arith.constant 0 : index
    %0 = vector.load %arg1[%c0, %c0_0, %c0_1] : memref<1x8x40xf32, #tpu.memory_space<vmem>>, vector<1x8x40xf32>
    %1 = vector.shape_cast %0 : vector<1x8x40xf32> to vector<8x40xf32>
    %c0_2 = arith.constant 0 : index
    %c0_3 = arith.constant 0 : index
    %2 = vector.load %arg2[%c0_2, %c0_3] : memref<40x384xf32, #tpu.memory_space<vmem>>, vector<40x384xf32>
    %cst = arith.constant dense<0.000000e+00> : vector<8x384xf32>
    %3 = tpu.matmul %1, %2, %cst {dimension_numbers = #tpu.dot_dimension_numbers<[1], [0], [0], [1], [0, 0, 1, 1], [], []>} : vector<8x40xf32>, vector<40x384xf32>, vector<8x384xf32> -> vector<8x384xf32>
    %c0_4 = arith.constant 0 : index
    %c0_5 = arith.constant 0 : index
    %4 = vector.load %arg3[%c0_4, %c0_5] : memref<1x384xf32, #tpu.memory_space<vmem>>, vector<1x384xf32>
    %5 = vector.broadcast %4 : vector<1x384xf32> to vector<8x384xf32>
    %6 = arith.addf %3, %5 : vector<8x384xf32>
    %7 = vector.extract_strided_slice %6 {offsets = [0, 0], sizes = [8, 40], strides = [1, 1]} : vector<8x384xf32> to vector<8x40xf32>
    %8 = vector.extract_strided_slice %6 {offsets = [0, 128], sizes = [8, 40], strides = [1, 1]} : vector<8x384xf32> to vector<8x40xf32>
    %9 = vector.extract_strided_slice %6 {offsets = [0, 256], sizes = [8, 40], strides = [1, 1]} : vector<8x384xf32> to vector<8x40xf32>
    %10 = vector.shape_cast %7 : vector<8x40xf32> to vector<1x8x40xf32>
    %11 = vector.shape_cast %8 : vector<8x40xf32> to vector<1x8x40xf32>
    %12 = vector.shape_cast %9 : vector<8x40xf32> to vector<1x8x40xf32>
    %c0_6 = arith.constant 0 : index
    %c0_7 = arith.constant 0 : index
    %13 = vector.load %arg16[%c0_6, %c0_7] : memref<10x40xf32, #tpu.memory_space<vmem>>, vector<10x40xf32>
    %14 = vector.shape_cast %11 : vector<1x8x40xf32> to vector<1x1x8x40xf32>
    %15 = vector.shape_cast %13 : vector<10x40xf32> to vector<1x10x1x40xf32>
    %16 = vector.broadcast %14 : vector<1x1x8x40xf32> to vector<1x10x8x40xf32>
    %17 = vector.broadcast %15 : vector<1x10x1x40xf32> to vector<1x10x8x40xf32>
    %18 = arith.mulf %16, %17 : vector<1x10x8x40xf32>
    %19 = vector.shape_cast %18 : vector<1x10x8x40xf32> to vector<1x80x40xf32>
    %20 = vector.shape_cast %12 : vector<1x8x40xf32> to vector<1x1x8x40xf32>
    %21 = vector.shape_cast %13 : vector<10x40xf32> to vector<1x10x1x40xf32>
    %22 = vector.broadcast %20 : vector<1x1x8x40xf32> to vector<1x10x8x40xf32>
    %23 = vector.broadcast %21 : vector<1x10x1x40xf32> to vector<1x10x8x40xf32>
    %24 = arith.mulf %22, %23 : vector<1x10x8x40xf32>
    %25 = vector.shape_cast %24 : vector<1x10x8x40xf32> to vector<1x80x40xf32>
    "tpu.trace_start"() <{level = 10 : i32, message = "bie,bme->bim"}> : () -> ()
    %cst_8 = arith.constant dense<0.000000e+00> : vector<1x8x80xf32>
    %26 = tpu.matmul %10, %19, %cst_8 {dimension_numbers = #tpu.dot_dimension_numbers<[2], [2], [1], [1], [0, 0, 0, 1, 1, 1], [0], [0]>} : vector<1x8x40xf32>, vector<1x80x40xf32>, vector<1x8x80xf32> -> vector<1x8x80xf32>
    "tpu.trace_stop"() : () -> ()
    %27 = vector.shape_cast %26 : vector<1x8x80xf32> to vector<8x80xf32>
    %cst_9 = arith.constant dense<0xFF800000> : vector<8xf32>
    %28 = vector.multi_reduction <maximumf>, %27, %cst_9 [1] : vector<8x80xf32> to vector<8xf32>
    %29 = vector.shape_cast %28 : vector<8xf32> to vector<8x1xf32>
    %30 = vector.broadcast %29 : vector<8x1xf32> to vector<8x80xf32>
    %31 = arith.subf %27, %30 : vector<8x80xf32>
    %32 = math.exp %31 : vector<8x80xf32>
    %c0_10 = arith.constant 0 : index
    %c0_11 = arith.constant 0 : index
    %33 = vector.load %arg17[%c0_10, %c0_11] : memref<80x10xf32, #tpu.memory_space<vmem>>, vector<80x10xf32>
    %cst_12 = arith.constant dense<0.000000e+00> : vector<8x10xf32>
    %34 = tpu.matmul %32, %33, %cst_12 {dimension_numbers = #tpu.dot_dimension_numbers<[1], [0], [0], [1], [0, 0, 1, 1], [], []>} : vector<8x80xf32>, vector<80x10xf32>, vector<8x10xf32> -> vector<8x10xf32>
    %35 = tpu.reciprocal %34 {approx = true} : vector<8x10xf32> -> vector<8x10xf32>
    %c0_13 = arith.constant 0 : index
    %c0_14 = arith.constant 0 : index
    %36 = vector.load %arg18[%c0_13, %c0_14] : memref<10x80xf32, #tpu.memory_space<vmem>>, vector<10x80xf32>
    %cst_15 = arith.constant dense<0.000000e+00> : vector<8x80xf32>
    %37 = tpu.matmul %35, %36, %cst_15 {dimension_numbers = #tpu.dot_dimension_numbers<[1], [0], [0], [1], [0, 0, 1, 1], [], []>} : vector<8x10xf32>, vector<10x80xf32>, vector<8x80xf32> -> vector<8x80xf32>
    %38 = arith.mulf %32, %37 : vector<8x80xf32>
    %39 = vector.shape_cast %38 : vector<8x80xf32> to vector<1x8x80xf32>
    "tpu.trace_start"() <{level = 10 : i32, message = "bim,bme->bie"}> : () -> ()
    %cst_16 = arith.constant dense<0.000000e+00> : vector<1x8x40xf32>
    %40 = tpu.matmul %39, %25, %cst_16 {dimension_numbers = #tpu.dot_dimension_numbers<[2], [1], [1], [2], [0, 0, 0, 1, 1, 2], [0], [0]>} : vector<1x8x80xf32>, vector<1x80x40xf32>, vector<1x8x40xf32> -> vector<1x8x40xf32>
    "tpu.trace_stop"() : () -> ()
    %41 = vector.shape_cast %40 : vector<1x8x40xf32> to vector<8x40xf32>
    %c0_17 = arith.constant 0 : index
    %c0_18 = arith.constant 0 : index
    %42 = vector.load %arg4[%c0_17, %c0_18] : memref<40x40xf32, #tpu.memory_space<vmem>>, vector<40x40xf32>
    %cst_19 = arith.constant dense<0.000000e+00> : vector<8x40xf32>
    %43 = tpu.matmul %41, %42, %cst_19 {dimension_numbers = #tpu.dot_dimension_numbers<[1], [0], [0], [1], [0, 0, 1, 1], [], []>} : vector<8x40xf32>, vector<40x40xf32>, vector<8x40xf32> -> vector<8x40xf32>
    %c0_20 = arith.constant 0 : index
    %c0_21 = arith.constant 0 : index
    %44 = vector.load %arg5[%c0_20, %c0_21] : memref<1x40xf32, #tpu.memory_space<vmem>>, vector<1x40xf32>
    %45 = vector.broadcast %44 : vector<1x40xf32> to vector<8x40xf32>
    %46 = arith.addf %43, %45 : vector<8x40xf32>
    %47 = arith.addf %1, %46 : vector<8x40xf32>
    %c0_22 = arith.constant 0 : index
    %c0_23 = arith.constant 0 : index
    %48 = vector.load %arg6[%c0_22, %c0_23] : memref<1x40xf32, #tpu.memory_space<vmem>>, vector<1x40xf32>
    %c0_24 = arith.constant 0 : index
    %c0_25 = arith.constant 0 : index
    %49 = vector.load %arg7[%c0_24, %c0_25] : memref<1x40xf32, #tpu.memory_space<vmem>>, vector<1x40xf32>
    %cst_26 = arith.constant dense<0.000000e+00> : vector<8xf32>
    %50 = vector.multi_reduction <add>, %47, %cst_26 [1] : vector<8x40xf32> to vector<8xf32>
    %51 = vector.shape_cast %50 : vector<8xf32> to vector<8x1xf32>
    %cst_27 = arith.constant 4.000000e+01 : f32
    %52 = vector.broadcast %cst_27 : f32 to vector<8x1xf32>
    %53 = arith.divf %51, %52 : vector<8x1xf32>
    %54 = vector.broadcast %53 : vector<8x1xf32> to vector<8x40xf32>
    %55 = arith.subf %47, %54 : vector<8x40xf32>
    %56 = arith.mulf %55, %55 : vector<8x40xf32>
    %cst_28 = arith.constant dense<0.000000e+00> : vector<8xf32>
    %57 = vector.multi_reduction <add>, %56, %cst_28 [1] : vector<8x40xf32> to vector<8xf32>
    %58 = vector.shape_cast %57 : vector<8xf32> to vector<8x1xf32>
    %cst_29 = arith.constant 4.000000e+01 : f32
    %59 = vector.broadcast %cst_29 : f32 to vector<8x1xf32>
    %60 = arith.divf %58, %59 : vector<8x1xf32>
    %cst_30 = arith.constant 9.99999974E-6 : f32
    %61 = vector.broadcast %cst_30 : f32 to vector<8x1xf32>
    %62 = arith.addf %60, %61 : vector<8x1xf32>
    %63 = math.rsqrt %62 : vector<8x1xf32>
    %64 = vector.broadcast %63 : vector<8x1xf32> to vector<8x40xf32>
    %65 = arith.mulf %55, %64 : vector<8x40xf32>
    %66 = vector.broadcast %48 : vector<1x40xf32> to vector<8x40xf32>
    %67 = arith.mulf %65, %66 : vector<8x40xf32>
    %68 = vector.broadcast %49 : vector<1x40xf32> to vector<8x40xf32>
    %69 = arith.addf %67, %68 : vector<8x40xf32>
    %c0_31 = arith.constant 0 : index
    %c0_32 = arith.constant 0 : index
    %70 = vector.load %arg8[%c0_31, %c0_32] : memref<40x2048xf32, #tpu.memory_space<vmem>>, vector<40x2048xf32>
    %cst_33 = arith.constant dense<0.000000e+00> : vector<8x2048xf32>
    %71 = tpu.matmul %69, %70, %cst_33 {dimension_numbers = #tpu.dot_dimension_numbers<[1], [0], [0], [1], [0, 0, 1, 1], [], []>} : vector<8x40xf32>, vector<40x2048xf32>, vector<8x2048xf32> -> vector<8x2048xf32>
    %c0_34 = arith.constant 0 : index
    %c0_35 = arith.constant 0 : index
    %72 = vector.load %arg9[%c0_34, %c0_35] : memref<1x2048xf32, #tpu.memory_space<vmem>>, vector<1x2048xf32>
    %73 = vector.broadcast %72 : vector<1x2048xf32> to vector<8x2048xf32>
    %74 = arith.addf %71, %73 : vector<8x2048xf32>
    %cst_36 = arith.constant 0.000000e+00 : f32
    %75 = vector.broadcast %cst_36 : f32 to vector<8x2048xf32>
    %76 = arith.maximumf %74, %75 : vector<8x2048xf32>
    %c0_37 = arith.constant 0 : index
    %c0_38 = arith.constant 0 : index
    %77 = vector.load %arg10[%c0_37, %c0_38] : memref<2048x40xf32, #tpu.memory_space<vmem>>, vector<2048x40xf32>
    %cst_39 = arith.constant dense<0.000000e+00> : vector<8x40xf32>
    %78 = tpu.matmul %76, %77, %cst_39 {dimension_numbers = #tpu.dot_dimension_numbers<[1], [0], [0], [1], [0, 0, 1, 1], [], []>} : vector<8x2048xf32>, vector<2048x40xf32>, vector<8x40xf32> -> vector<8x40xf32>
    %c0_40 = arith.constant 0 : index
    %c0_41 = arith.constant 0 : index
    %79 = vector.load %arg11[%c0_40, %c0_41] : memref<1x40xf32, #tpu.memory_space<vmem>>, vector<1x40xf32>
    %80 = vector.broadcast %79 : vector<1x40xf32> to vector<8x40xf32>
    %81 = arith.addf %78, %80 : vector<8x40xf32>
    %82 = arith.addf %69, %81 : vector<8x40xf32>
    %c0_42 = arith.constant 0 : index
    %c0_43 = arith.constant 0 : index
    %83 = vector.load %arg12[%c0_42, %c0_43] : memref<1x40xf32, #tpu.memory_space<vmem>>, vector<1x40xf32>
    %c0_44 = arith.constant 0 : index
    %c0_45 = arith.constant 0 : index
    %84 = vector.load %arg13[%c0_44, %c0_45] : memref<1x40xf32, #tpu.memory_space<vmem>>, vector<1x40xf32>
    %cst_46 = arith.constant dense<0.000000e+00> : vector<8xf32>
    %85 = vector.multi_reduction <add>, %82, %cst_46 [1] : vector<8x40xf32> to vector<8xf32>
    %86 = vector.shape_cast %85 : vector<8xf32> to vector<8x1xf32>
    %cst_47 = arith.constant 4.000000e+01 : f32
    %87 = vector.broadcast %cst_47 : f32 to vector<8x1xf32>
    %88 = arith.divf %86, %87 : vector<8x1xf32>
    %89 = vector.broadcast %88 : vector<8x1xf32> to vector<8x40xf32>
    %90 = arith.subf %82, %89 : vector<8x40xf32>
    %91 = arith.mulf %90, %90 : vector<8x40xf32>
    %cst_48 = arith.constant dense<0.000000e+00> : vector<8xf32>
    %92 = vector.multi_reduction <add>, %91, %cst_48 [1] : vector<8x40xf32> to vector<8xf32>
    %93 = vector.shape_cast %92 : vector<8xf32> to vector<8x1xf32>
    %cst_49 = arith.constant 4.000000e+01 : f32
    %94 = vector.broadcast %cst_49 : f32 to vector<8x1xf32>
    %95 = arith.divf %93, %94 : vector<8x1xf32>
    %cst_50 = arith.constant 9.99999974E-6 : f32
    %96 = vector.broadcast %cst_50 : f32 to vector<8x1xf32>
    %97 = arith.addf %95, %96 : vector<8x1xf32>
    %98 = math.rsqrt %97 : vector<8x1xf32>
    %99 = vector.broadcast %98 : vector<8x1xf32> to vector<8x40xf32>
    %100 = arith.mulf %90, %99 : vector<8x40xf32>
    %101 = vector.broadcast %83 : vector<1x40xf32> to vector<8x40xf32>
    %102 = arith.mulf %100, %101 : vector<8x40xf32>
    %103 = vector.broadcast %84 : vector<1x40xf32> to vector<8x40xf32>
    %104 = arith.addf %102, %103 : vector<8x40xf32>
    %105 = vector.shape_cast %104 : vector<8x40xf32> to vector<1x8x40xf32>
    %cst_51 = arith.constant dense<0.000000e+00> : vector<1x40xf32>
    %106 = vector.multi_reduction <add>, %105, %cst_51 [1] : vector<1x8x40xf32> to vector<1x40xf32>
    %cst_52 = arith.constant 8.000000e+00 : f32
    %107 = vector.broadcast %cst_52 : f32 to vector<1x40xf32>
    %108 = arith.divf %106, %107 : vector<1x40xf32>
    %c0_53 = arith.constant 0 : index
    %c0_54 = arith.constant 0 : index
    %109 = vector.load %arg14[%c0_53, %c0_54] : memref<40x128xf32, #tpu.memory_space<vmem>>, vector<40x128xf32>
    %cst_55 = arith.constant dense<0.000000e+00> : vector<1x128xf32>
    %110 = tpu.matmul %108, %109, %cst_55 {dimension_numbers = #tpu.dot_dimension_numbers<[1], [0], [0], [1], [0, 0, 1, 1], [], []>} : vector<1x40xf32>, vector<40x128xf32>, vector<1x128xf32> -> vector<1x128xf32>
    %c0_56 = arith.constant 0 : index
    %c0_57 = arith.constant 0 : index
    %111 = vector.load %arg15[%c0_56, %c0_57] : memref<1x128xf32, #tpu.memory_space<vmem>>, vector<1x128xf32>
    %112 = arith.addf %110, %111 : vector<1x128xf32>
    %113 = vector.shape_cast %112 : vector<1x128xf32> to vector<1x1x128xf32>
    %c0_58 = arith.constant 0 : index
    %c0_59 = arith.constant 0 : index
    %c0_60 = arith.constant 0 : index
    %114 = vector.load %arg19[%c0_58, %c0_59, %c0_60] : memref<1x1x128xf32, #tpu.memory_space<vmem>>, vector<1x1x128xf32>
    tpu.vector_store %arg19[%c0_58, %c0_59, %c0_60], %113 {strides = array<i32>} : memref<1x1x128xf32, #tpu.memory_space<vmem>>, vector<1x1x128xf32>,
    return
  }
  func.func @transform_0(%arg0: i32) -> (i32, i32, i32) {
    %c0_i32 = arith.constant 0 : i32
    %c0_i32_0 = arith.constant 0 : i32
    %c0_i32_1 = arith.constant 0 : i32
    return %arg0, %c0_i32, %c0_i32_0 : i32, i32, i32
  }
  func.func @transform_1(%arg0: i32) -> (i32, i32) {
    %c0_i32 = arith.constant 0 : i32
    %c0_i32_0 = arith.constant 0 : i32
    %c0_i32_1 = arith.constant 0 : i32
    return %c0_i32, %c0_i32_0 : i32, i32
  }
  func.func @transform_2(%arg0: i32) -> (i32, i32) {
    %c0_i32 = arith.constant 0 : i32
    %c0_i32_0 = arith.constant 0 : i32
    %c0_i32_1 = arith.constant 0 : i32
    return %c0_i32, %c0_i32_0 : i32, i32
  }
  func.func @transform_3(%arg0: i32) -> (i32, i32) {
    %c0_i32 = arith.constant 0 : i32
    %c0_i32_0 = arith.constant 0 : i32
    %c0_i32_1 = arith.constant 0 : i32
    return %c0_i32, %c0_i32_0 : i32, i32
  }
  func.func @transform_4(%arg0: i32) -> (i32, i32) {
    %c0_i32 = arith.constant 0 : i32
    %c0_i32_0 = arith.constant 0 : i32
    %c0_i32_1 = arith.constant 0 : i32
    return %c0_i32, %c0_i32_0 : i32, i32
  }
  func.func @transform_5(%arg0: i32) -> (i32, i32) {
    %c0_i32 = arith.constant 0 : i32
    %c0_i32_0 = arith.constant 0 : i32
    %c0_i32_1 = arith.constant 0 : i32
    return %c0_i32, %c0_i32_0 : i32, i32
  }
  func.func @transform_6(%arg0: i32) -> (i32, i32) {
    %c0_i32 = arith.constant 0 : i32
    %c0_i32_0 = arith.constant 0 : i32
    %c0_i32_1 = arith.constant 0 : i32
    return %c0_i32, %c0_i32_0 : i32, i32
  }
  func.func @transform_7(%arg0: i32) -> (i32, i32) {
    %c0_i32 = arith.constant 0 : i32
    %c0_i32_0 = arith.constant 0 : i32
    %c0_i32_1 = arith.constant 0 : i32
    return %c0_i32, %c0_i32_0 : i32, i32
  }
  func.func @transform_8(%arg0: i32) -> (i32, i32) {
    %c0_i32 = arith.constant 0 : i32
    %c0_i32_0 = arith.constant 0 : i32
    %c0_i32_1 = arith.constant 0 : i32
    return %c0_i32, %c0_i32_0 : i32, i32
  }
  func.func @transform_9(%arg0: i32) -> (i32, i32) {
    %c0_i32 = arith.constant 0 : i32
    %c0_i32_0 = arith.constant 0 : i32
    %c0_i32_1 = arith.constant 0 : i32
    return %c0_i32, %c0_i32_0 : i32, i32
  }
  func.func @transform_10(%arg0: i32) -> (i32, i32) {
    %c0_i32 = arith.constant 0 : i32
    %c0_i32_0 = arith.constant 0 : i32
    %c0_i32_1 = arith.constant 0 : i32
    return %c0_i32, %c0_i32_0 : i32, i32
  }
  func.func @transform_11(%arg0: i32) -> (i32, i32) {
    %c0_i32 = arith.constant 0 : i32
    %c0_i32_0 = arith.constant 0 : i32
    %c0_i32_1 = arith.constant 0 : i32
    return %c0_i32, %c0_i32_0 : i32, i32
  }
  func.func @transform_12(%arg0: i32) -> (i32, i32) {
    %c0_i32 = arith.constant 0 : i32
    %c0_i32_0 = arith.constant 0 : i32
    %c0_i32_1 = arith.constant 0 : i32
    return %c0_i32, %c0_i32_0 : i32, i32
  }
  func.func @transform_13(%arg0: i32) -> (i32, i32) {
    %c0_i32 = arith.constant 0 : i32
    %c0_i32_0 = arith.constant 0 : i32
    %c0_i32_1 = arith.constant 0 : i32
    return %c0_i32, %c0_i32_0 : i32, i32
  }
  func.func @transform_14(%arg0: i32) -> (i32, i32) {
    %c0_i32 = arith.constant 0 : i32
    %c0_i32_0 = arith.constant 0 : i32
    %c0_i32_1 = arith.constant 0 : i32
    return %c0_i32, %c0_i32_0 : i32, i32
  }
  func.func @transform_15(%arg0: i32) -> (i32, i32) {
    %c0_i32 = arith.constant 0 : i32
    %c0_i32_0 = arith.constant 0 : i32
    %c0_i32_1 = arith.constant 0 : i32
    return %c0_i32, %c0_i32_0 : i32, i32
  }
  func.func @transform_16(%arg0: i32) -> (i32, i32) {
    %c0_i32 = arith.constant 0 : i32
    %c0_i32_0 = arith.constant 0 : i32
    %c0_i32_1 = arith.constant 0 : i32
    return %c0_i32, %c0_i32_0 : i32, i32
  }
  func.func @transform_17(%arg0: i32) -> (i32, i32) {
    %c0_i32 = arith.constant 0 : i32
    %c0_i32_0 = arith.constant 0 : i32
    %c0_i32_1 = arith.constant 0 : i32
    return %c0_i32, %c0_i32_0 : i32, i32
  }
  func.func @transform_18(%arg0: i32) -> (i32, i32, i32) {
    %c0_i32 = arith.constant 0 : i32
    %c0_i32_0 = arith.constant 0 : i32
    %c0_i32_1 = arith.constant 0 : i32
    return %arg0, %c0_i32, %c0_i32_0 : i32, i32, i32
  }
}

</mosaic_0001>

<llo_original>
// kernel: tpu_custom_call.1
$region0: #{tpu_custom_call.1}
  #allocation0 [shape = 'u32[]', space=smem, size = 0x4, offset = 0x4, fixed_abs, tag = 'smem constant byte address 0x4 - core index']
  #allocation1 [shape = 'u32[144,128]{1,0:T(1,128)}', space=vmem, size = 0x12000, scoped, tag = 'internal scratch']
  %s0 = inlined_call_operand.vmem [shape: f32[2,8,40], index: 0, kind: input, shape index: {}]
  %s1 = inlined_call_operand.vmem [shape: f32[40,384], index: 1, kind: input, shape index: {}]
  %s2 = inlined_call_operand.vmem [shape: f32[1,384], index: 2, kind: input, shape index: {}]
  %s3 = inlined_call_operand.vmem [shape: f32[40,40], index: 3, kind: input, shape index: {}]
  %s4 = inlined_call_operand.vmem [shape: f32[1,40], index: 4, kind: input, shape index: {}]
  %s5 = inlined_call_operand.vmem [shape: f32[1,40], index: 5, kind: input, shape index: {}]
  %s6 = inlined_call_operand.vmem [shape: f32[1,40], index: 6, kind: input, shape index: {}]
  %s7 = inlined_call_operand.vmem [shape: f32[40,2048], index: 7, kind: input, shape index: {}]
  %s8 = inlined_call_operand.vmem [shape: f32[1,2048], index: 8, kind: input, shape index: {}]
  %s9 = inlined_call_operand.vmem [shape: f32[2048,40], index: 9, kind: input, shape index: {}]
  %s10 = inlined_call_operand.vmem [shape: f32[1,40], index: 10, kind: input, shape index: {}]
  %s11 = inlined_call_operand.vmem [shape: f32[1,40], index: 11, kind: input, shape index: {}]
  %s12 = inlined_call_operand.vmem [shape: f32[1,40], index: 12, kind: input, shape index: {}]
  %s13 = inlined_call_operand.vmem [shape: f32[40,128], index: 13, kind: input, shape index: {}]
  %s14 = inlined_call_operand.vmem [shape: f32[1,128], index: 14, kind: input, shape index: {}]
  %s15 = inlined_call_operand.vmem [shape: f32[10,40], index: 15, kind: input, shape index: {}]
  %s16 = inlined_call_operand.vmem [shape: f32[80,10], index: 16, kind: input, shape index: {}]
  %s17 = inlined_call_operand.vmem [shape: f32[10,80], index: 17, kind: input, shape index: {}]
  %s18 = inlined_call_operand.hbm [shape: f32[2,1,128], index: 18, kind: output, shape index: {}]
  %s19 = sld [smem:[#allocation0]]
  $region105: #{tpu_custom_call.1} parent=0
    _
  %s21 = ssub.s32 1, %s19
  %s22 = scalar_select 0, %s21, %s19
  $region1: #{tpu_custom_call.1} parent=0
    #allocation2 [shape = 'u8[1024]{0}', space=vmem, size = 0x400, scoped, tag = 'output window, operand 0']
    #allocation3 [shape = 's32[2]{0}', space=sflag, size = 0x8, scoped, tag = 'scoped memory for tpu_custom_call.1']
    %23 = vsyncpa [#allocation3], 0
    %s24 = scalar_lea.sflag [#allocation3], 1
    %25 = vsyncpa %s24, 0
    loop: start=0, step=1, limit=4
    $region2: #{tpu_custom_call.1} parent=1 // loop_pre_header
      _
    $region3: #{tpu_custom_call.1} parent=1 // loop_header
      %s27 = sphi 0, %s31
      %p28 = scmp.ge.s32.totalorder %s27, 4
      %s37 = sphi 0, %s39
      %s40 = sphi 0, %s37
      %s41 = sphi 0, %s40
      %s57 = sphi 0, %s41
      %s61 = sphi 0, %s61
      %s63 = sphi 0, %s61
      %s64 = sphi 0, %s63
      %s78 = sphi 0, %s64
      %s82 = sphi 0, %s82
      %s84 = sphi 0, %s82
      %s85 = sphi 0, %s84
      %s99 = sphi 0, %s85
      %s103 = sphi 0, %s103
      %s105 = sphi 0, %s103
      %s106 = sphi 0, %s105
      %s120 = sphi 0, %s106
      %s124 = sphi 0, %s124
      %s126 = sphi 0, %s124
      %s127 = sphi 0, %s126
      %s141 = sphi 0, %s127
      %s145 = sphi 0, %s145
      %s147 = sphi 0, %s145
      %s148 = sphi 0, %s147
      %s162 = sphi 0, %s148
      %s166 = sphi 0, %s166
      %s168 = sphi 0, %s166
      %s169 = sphi 0, %s168
      %s183 = sphi 0, %s169
      %s187 = sphi 0, %s187
      %s189 = sphi 0, %s187
      %s190 = sphi 0, %s189
      %s204 = sphi 0, %s190
      %s208 = sphi 0, %s208
      %s210 = sphi 0, %s208
      %s211 = sphi 0, %s210
      %s225 = sphi 0, %s211
      %s229 = sphi 0, %s229
      %s231 = sphi 0, %s229
      %s232 = sphi 0, %s231
      %s246 = sphi 0, %s232
      %s250 = sphi 0, %s250
      %s252 = sphi 0, %s250
      %s253 = sphi 0, %s252
      %s267 = sphi 0, %s253
      %s271 = sphi 0, %s271
      %s273 = sphi 0, %s271
      %s274 = sphi 0, %s273
      %s288 = sphi 0, %s274
      %s292 = sphi 0, %s292
      %s294 = sphi 0, %s292
      %s295 = sphi 0, %s294
      %s309 = sphi 0, %s295
      %s313 = sphi 0, %s313
      %s315 = sphi 0, %s313
      %s316 = sphi 0, %s315
      %s330 = sphi 0, %s316
      %s334 = sphi 0, %s334
      %s336 = sphi 0, %s334
      %s337 = sphi 0, %s336
      %s351 = sphi 0, %s337
      %s355 = sphi 0, %s355
      %s357 = sphi 0, %s355
      %s358 = sphi 0, %s357
      %s372 = sphi 0, %s358
      %s376 = sphi 0, %s376
      %s378 = sphi 0, %s376
      %s379 = sphi 0, %s378
      %s393 = sphi 0, %s379
      %s397 = sphi 0, %s397
      %s399 = sphi 0, %s397
      %s400 = sphi 0, %s399
      %s414 = sphi 0, %s400
      %s420 = sphi 0, %s422
      %s423 = sphi 0, %s420
      %s424 = sphi 0, %s423
      %s440 = sphi 0, %s424
    $region4: #{tpu_custom_call.1} parent=1 // loop_header_branch
      %30 = sbr.rel (%p28) target = $region8
    $region5: #{tpu_custom_call.1} parent=1 // loop_body
      %s32 = ssub.s32 %s27, 1
      %s33 = ssub.s32 %s27, 2
      %s34 = sadd.s32 %s27, 1
      %s35 = ssub.s32 %s27, %s34
      %p36 = scmp.eq.s32.totalorder %s35, 0
      %s38 = sadd.s32 %s37, 1
      %s39 = scalar_select %p36, %s37, %s38
      %p42 = pneg %p36
      %p43 = scmp.eq.s32.totalorder %s27, 1
      %p44 = por %p42, %p43
      %p45 = scmp.ne.s32.totalorder %s37, %s40
      %p46 = scmp.eq.s32.totalorder %s27, 0
      %p47 = por %p45, %p46
      %p48 = scmp.ne.s32.totalorder %s37, %s40
      %p49 = scmp.eq.s32.totalorder %s32, 1
      %p50 = por %p48, %p49
      %p51 = scmp.ne.s32.totalorder %s40, %s41
      %p52 = scmp.eq.s32.totalorder %s32, 0
      %p53 = por %p51, %p52
      %p54 = scmp.ne.s32.totalorder %s40, %s41
      %p55 = scmp.eq.s32.totalorder %s33, 1
      %p56 = por %p54, %p55
      %p58 = scmp.ne.s32.totalorder %s41, %s57
      %p59 = scmp.eq.s32.totalorder %s33, 0
      %p60 = por %p58, %p59
      %s62 = sadd.s32 %s61, 1
      %p65 = scmp.eq.s32.totalorder %s27, 1
      %p66 = scmp.ne.s32.totalorder %s61, %s63
      %p67 = scmp.eq.s32.totalorder %s27, 0
      %p68 = por %p66, %p67
      %p69 = scmp.ne.s32.totalorder %s61, %s63
      %p70 = scmp.eq.s32.totalorder %s32, 1
      %p71 = por %p69, %p70
      %p72 = scmp.ne.s32.totalorder %s63, %s64
      %p73 = scmp.eq.s32.totalorder %s32, 0
      %p74 = por %p72, %p73
      %p75 = scmp.ne.s32.totalorder %s63, %s64
      %p76 = scmp.eq.s32.totalorder %s33, 1
      %p77 = por %p75, %p76
      %p79 = scmp.ne.s32.totalorder %s64, %s78
      %p80 = scmp.eq.s32.totalorder %s33, 0
      %p81 = por %p79, %p80
      %s83 = sadd.s32 %s82, 1
      %p86 = scmp.eq.s32.totalorder %s27, 1
      %p87 = scmp.ne.s32.totalorder %s82, %s84
      %p88 = scmp.eq.s32.totalorder %s27, 0
      %p89 = por %p87, %p88
      %p90 = scmp.ne.s32.totalorder %s82, %s84
      %p91 = scmp.eq.s32.totalorder %s32, 1
      %p92 = por %p90, %p91
      %p93 = scmp.ne.s32.totalorder %s84, %s85
      %p94 = scmp.eq.s32.totalorder %s32, 0
      %p95 = por %p93, %p94
      %p96 = scmp.ne.s32.totalorder %s84, %s85
      %p97 = scmp.eq.s32.totalorder %s33, 1
      %p98 = por %p96, %p97
      %p100 = scmp.ne.s32.totalorder %s85, %s99
      %p101 = scmp.eq.s32.totalorder %s33, 0
      %p102 = por %p100, %p101
      %s104 = sadd.s32 %s103, 1
      %p107 = scmp.eq.s32.totalorder %s27, 1
      %p108 = scmp.ne.s32.totalorder %s103, %s105
      %p109 = scmp.eq.s32.totalorder %s27, 0
      %p110 = por %p108, %p109
      %p111 = scmp.ne.s32.totalorder %s103, %s105
      %p112 = scmp.eq.s32.totalorder %s32, 1
      %p113 = por %p111, %p112
      %p114 = scmp.ne.s32.totalorder %s105, %s106
      %p115 = scmp.eq.s32.totalorder %s32, 0
      %p116 = por %p114, %p115
      %p117 = scmp.ne.s32.totalorder %s105, %s106
      %p118 = scmp.eq.s32.totalorder %s33, 1
      %p119 = por %p117, %p118
      %p121 = scmp.ne.s32.totalorder %s106, %s120
      %p122 = scmp.eq.s32.totalorder %s33, 0
      %p123 = por %p121, %p122
      %s125 = sadd.s32 %s124, 1
      %p128 = scmp.eq.s32.totalorder %s27, 1
      %p129 = scmp.ne.s32.totalorder %s124, %s126
      %p130 = scmp.eq.s32.totalorder %s27, 0
      %p131 = por %p129, %p130
      %p132 = scmp.ne.s32.totalorder %s124, %s126
      %p133 = scmp.eq.s32.totalorder %s32, 1
      %p134 = por %p132, %p133
      %p135 = scmp.ne.s32.totalorder %s126, %s127
      %p136 = scmp.eq.s32.totalorder %s32, 0
      %p137 = por %p135, %p136
      %p138 = scmp.ne.s32.totalorder %s126, %s127
      %p139 = scmp.eq.s32.totalorder %s33, 1
      %p140 = por %p138, %p139
      %p142 = scmp.ne.s32.totalorder %s127, %s141
      %p143 = scmp.eq.s32.totalorder %s33, 0
      %p144 = por %p142, %p143
      %s146 = sadd.s32 %s145, 1
      %p149 = scmp.eq.s32.totalorder %s27, 1
      %p150 = scmp.ne.s32.totalorder %s145, %s147
      %p151 = scmp.eq.s32.totalorder %s27, 0
      %p152 = por %p150, %p151
      %p153 = scmp.ne.s32.totalorder %s145, %s147
      %p154 = scmp.eq.s32.totalorder %s32, 1
      %p155 = por %p153, %p154
      %p156 = scmp.ne.s32.totalorder %s147, %s148
      %p157 = scmp.eq.s32.totalorder %s32, 0
      %p158 = por %p156, %p157
      %p159 = scmp.ne.s32.totalorder %s147, %s148
      %p160 = scmp.eq.s32.totalorder %s33, 1
      %p161 = por %p159, %p160
      %p163 = scmp.ne.s32.totalorder %s148, %s162
      %p164 = scmp.eq.s32.totalorder %s33, 0
      %p165 = por %p163, %p164
      %s167 = sadd.s32 %s166, 1
      %p170 = scmp.eq.s32.totalorder %s27, 1
      %p171 = scmp.ne.s32.totalorder %s166, %s168
      %p172 = scmp.eq.s32.totalorder %s27, 0
      %p173 = por %p171, %p172
      %p174 = scmp.ne.s32.totalorder %s166, %s168
      %p175 = scmp.eq.s32.totalorder %s32, 1
      %p176 = por %p174, %p175
      %p177 = scmp.ne.s32.totalorder %s168, %s169
      %p178 = scmp.eq.s32.totalorder %s32, 0
      %p179 = por %p177, %p178
      %p180 = scmp.ne.s32.totalorder %s168, %s169
      %p181 = scmp.eq.s32.totalorder %s33, 1
      %p182 = por %p180, %p181
      %p184 = scmp.ne.s32.totalorder %s169, %s183
      %p185 = scmp.eq.s32.totalorder %s33, 0
      %p186 = por %p184, %p185
      %s188 = sadd.s32 %s187, 1
      %p191 = scmp.eq.s32.totalorder %s27, 1
      %p192 = scmp.ne.s32.totalorder %s187, %s189
      %p193 = scmp.eq.s32.totalorder %s27, 0
      %p194 = por %p192, %p193
      %p195 = scmp.ne.s32.totalorder %s187, %s189
      %p196 = scmp.eq.s32.totalorder %s32, 1
      %p197 = por %p195, %p196
      %p198 = scmp.ne.s32.totalorder %s189, %s190
      %p199 = scmp.eq.s32.totalorder %s32, 0
      %p200 = por %p198, %p199
      %p201 = scmp.ne.s32.totalorder %s189, %s190
      %p202 = scmp.eq.s32.totalorder %s33, 1
      %p203 = por %p201, %p202
      %p205 = scmp.ne.s32.totalorder %s190, %s204
      %p206 = scmp.eq.s32.totalorder %s33, 0
      %p207 = por %p205, %p206
      %s209 = sadd.s32 %s208, 1
      %p212 = scmp.eq.s32.totalorder %s27, 1
      %p213 = scmp.ne.s32.totalorder %s208, %s210
      %p214 = scmp.eq.s32.totalorder %s27, 0
      %p215 = por %p213, %p214
      %p216 = scmp.ne.s32.totalorder %s208, %s210
      %p217 = scmp.eq.s32.totalorder %s32, 1
      %p218 = por %p216, %p217
      %p219 = scmp.ne.s32.totalorder %s210, %s211
      %p220 = scmp.eq.s32.totalorder %s32, 0
      %p221 = por %p219, %p220
      %p222 = scmp.ne.s32.totalorder %s210, %s211
      %p223 = scmp.eq.s32.totalorder %s33, 1
      %p224 = por %p222, %p223
      %p226 = scmp.ne.s32.totalorder %s211, %s225
      %p227 = scmp.eq.s32.totalorder %s33, 0
      %p228 = por %p226, %p227
      %s230 = sadd.s32 %s229, 1
      %p233 = scmp.eq.s32.totalorder %s27, 1
      %p234 = scmp.ne.s32.totalorder %s229, %s231
      %p235 = scmp.eq.s32.totalorder %s27, 0
      %p236 = por %p234, %p235
      %p237 = scmp.ne.s32.totalorder %s229, %s231
      %p238 = scmp.eq.s32.totalorder %s32, 1
      %p239 = por %p237, %p238
      %p240 = scmp.ne.s32.totalorder %s231, %s232
      %p241 = scmp.eq.s32.totalorder %s32, 0
      %p242 = por %p240, %p241
      %p243 = scmp.ne.s32.totalorder %s231, %s232
      %p244 = scmp.eq.s32.totalorder %s33, 1
      %p245 = por %p243, %p244
      %p247 = scmp.ne.s32.totalorder %s232, %s246
      %p248 = scmp.eq.s32.totalorder %s33, 0
      %p249 = por %p247, %p248
      %s251 = sadd.s32 %s250, 1
      %p254 = scmp.eq.s32.totalorder %s27, 1
      %p255 = scmp.ne.s32.totalorder %s250, %s252
      %p256 = scmp.eq.s32.totalorder %s27, 0
      %p257 = por %p255, %p256
      %p258 = scmp.ne.s32.totalorder %s250, %s252
      %p259 = scmp.eq.s32.totalorder %s32, 1
      %p260 = por %p258, %p259
      %p261 = scmp.ne.s32.totalorder %s252, %s253
      %p262 = scmp.eq.s32.totalorder %s32, 0
      %p263 = por %p261, %p262
      %p264 = scmp.ne.s32.totalorder %s252, %s253
      %p265 = scmp.eq.s32.totalorder %s33, 1
      %p266 = por %p264, %p265
      %p268 = scmp.ne.s32.totalorder %s253, %s267
      %p269 = scmp.eq.s32.totalorder %s33, 0
      %p270 = por %p268, %p269
      %s272 = sadd.s32 %s271, 1
      %p275 = scmp.eq.s32.totalorder %s27, 1
      %p276 = scmp.ne.s32.totalorder %s271, %s273
      %p277 = scmp.eq.s32.totalorder %s27, 0
      %p278 = por %p276, %p277
      %p279 = scmp.ne.s32.totalorder %s271, %s273
      %p280 = scmp.eq.s32.totalorder %s32, 1
      %p281 = por %p279, %p280
      %p282 = scmp.ne.s32.totalorder %s273, %s274
      %p283 = scmp.eq.s32.totalorder %s32, 0
      %p284 = por %p282, %p283
      %p285 = scmp.ne.s32.totalorder %s273, %s274
      %p286 = scmp.eq.s32.totalorder %s33, 1
      %p287 = por %p285, %p286
      %p289 = scmp.ne.s32.totalorder %s274, %s288
      %p290 = scmp.eq.s32.totalorder %s33, 0
      %p291 = por %p289, %p290
      %s293 = sadd.s32 %s292, 1
      %p296 = scmp.eq.s32.totalorder %s27, 1
      %p297 = scmp.ne.s32.totalorder %s292, %s294
      %p298 = scmp.eq.s32.totalorder %s27, 0
      %p299 = por %p297, %p298
      %p300 = scmp.ne.s32.totalorder %s292, %s294
      %p301 = scmp.eq.s32.totalorder %s32, 1
      %p302 = por %p300, %p301
      %p303 = scmp.ne.s32.totalorder %s294, %s295
      %p304 = scmp.eq.s32.totalorder %s32, 0
      %p305 = por %p303, %p304
      %p306 = scmp.ne.s32.totalorder %s294, %s295
      %p307 = scmp.eq.s32.totalorder %s33, 1
      %p308 = por %p306, %p307
      %p310 = scmp.ne.s32.totalorder %s295, %s309
      %p311 = scmp.eq.s32.totalorder %s33, 0
      %p312 = por %p310, %p311
      %s314 = sadd.s32 %s313, 1
      %p317 = scmp.eq.s32.totalorder %s27, 1
      %p318 = scmp.ne.s32.totalorder %s313, %s315
      %p319 = scmp.eq.s32.totalorder %s27, 0
      %p320 = por %p318, %p319
      %p321 = scmp.ne.s32.totalorder %s313, %s315
      %p322 = scmp.eq.s32.totalorder %s32, 1
      %p323 = por %p321, %p322
      %p324 = scmp.ne.s32.totalorder %s315, %s316
      %p325 = scmp.eq.s32.totalorder %s32, 0
      %p326 = por %p324, %p325
      %p327 = scmp.ne.s32.totalorder %s315, %s316
      %p328 = scmp.eq.s32.totalorder %s33, 1
      %p329 = por %p327, %p328
      %p331 = scmp.ne.s32.totalorder %s316, %s330
      %p332 = scmp.eq.s32.totalorder %s33, 0
      %p333 = por %p331, %p332
      %s335 = sadd.s32 %s334, 1
      %p338 = scmp.eq.s32.totalorder %s27, 1
      %p339 = scmp.ne.s32.totalorder %s334, %s336
      %p340 = scmp.eq.s32.totalorder %s27, 0
      %p341 = por %p339, %p340
      %p342 = scmp.ne.s32.totalorder %s334, %s336
      %p343 = scmp.eq.s32.totalorder %s32, 1
      %p344 = por %p342, %p343
      %p345 = scmp.ne.s32.totalorder %s336, %s337
      %p346 = scmp.eq.s32.totalorder %s32, 0
      %p347 = por %p345, %p346
      %p348 = scmp.ne.s32.totalorder %s336, %s337
      %p349 = scmp.eq.s32.totalorder %s33, 1
      %p350 = por %p348, %p349
      %p352 = scmp.ne.s32.totalorder %s337, %s351
      %p353 = scmp.eq.s32.totalorder %s33, 0
      %p354 = por %p352, %p353
      %s356 = sadd.s32 %s355, 1
      %p359 = scmp.eq.s32.totalorder %s27, 1
      %p360 = scmp.ne.s32.totalorder %s355, %s357
      %p361 = scmp.eq.s32.totalorder %s27, 0
      %p362 = por %p360, %p361
      %p363 = scmp.ne.s32.totalorder %s355, %s357
      %p364 = scmp.eq.s32.totalorder %s32, 1
      %p365 = por %p363, %p364
      %p366 = scmp.ne.s32.totalorder %s357, %s358
      %p367 = scmp.eq.s32.totalorder %s32, 0
      %p368 = por %p366, %p367
      %p369 = scmp.ne.s32.totalorder %s357, %s358
      %p370 = scmp.eq.s32.totalorder %s33, 1
      %p371 = por %p369, %p370
      %p373 = scmp.ne.s32.totalorder %s358, %s372
      %p374 = scmp.eq.s32.totalorder %s33, 0
      %p375 = por %p373, %p374
      %s377 = sadd.s32 %s376, 1
      %p380 = scmp.eq.s32.totalorder %s27, 1
      %p381 = scmp.ne.s32.totalorder %s376, %s378
      %p382 = scmp.eq.s32.totalorder %s27, 0
      %p383 = por %p381, %p382
      %p384 = scmp.ne.s32.totalorder %s376, %s378
      %p385 = scmp.eq.s32.totalorder %s32, 1
      %p386 = por %p384, %p385
      %p387 = scmp.ne.s32.totalorder %s378, %s379
      %p388 = scmp.eq.s32.totalorder %s32, 0
      %p389 = por %p387, %p388
      %p390 = scmp.ne.s32.totalorder %s378, %s379
      %p391 = scmp.eq.s32.totalorder %s33, 1
      %p392 = por %p390, %p391
      %p394 = scmp.ne.s32.totalorder %s379, %s393
      %p395 = scmp.eq.s32.totalorder %s33, 0
      %p396 = por %p394, %p395
      %s398 = sadd.s32 %s397, 1
      %p401 = scmp.eq.s32.totalorder %s27, 1
      %p402 = scmp.ne.s32.totalorder %s397, %s399
      %p403 = scmp.eq.s32.totalorder %s27, 0
      %p404 = por %p402, %p403
      %p405 = scmp.ne.s32.totalorder %s397, %s399
      %p406 = scmp.eq.s32.totalorder %s32, 1
      %p407 = por %p405, %p406
      %p408 = scmp.ne.s32.totalorder %s399, %s400
      %p409 = scmp.eq.s32.totalorder %s32, 0
      %p410 = por %p408, %p409
      %p411 = scmp.ne.s32.totalorder %s399, %s400
      %p412 = scmp.eq.s32.totalorder %s33, 1
      %p413 = por %p411, %p412
      %p415 = scmp.ne.s32.totalorder %s400, %s414
      %p416 = scmp.eq.s32.totalorder %s33, 0
      %p417 = por %p415, %p416
      %s418 = ssub.s32 %s27, %s34
      %p419 = scmp.eq.s32.totalorder %s418, 0
      %s421 = sadd.s32 %s420, 1
      %s422 = scalar_select %p419, %s420, %s421
      %p425 = pneg %p419
      %p426 = scmp.eq.s32.totalorder %s27, 1
      %p427 = por %p425, %p426
      %p428 = scmp.ne.s32.totalorder %s420, %s423
      %p429 = scmp.eq.s32.totalorder %s27, 0
      %p430 = por %p428, %p429
      %p431 = scmp.ne.s32.totalorder %s420, %s423
      %p432 = scmp.eq.s32.totalorder %s32, 1
      %p433 = por %p431, %p432
      %p434 = scmp.ne.s32.totalorder %s423, %s424
      %p435 = scmp.eq.s32.totalorder %s32, 0
      %p436 = por %p434, %p435
      %p437 = scmp.ne.s32.totalorder %s423, %s424
      %p438 = scmp.eq.s32.totalorder %s33, 1
      %p439 = por %p437, %p438
      %p441 = scmp.ne.s32.totalorder %s424, %s440
      %p442 = scmp.eq.s32.totalorder %s33, 0
      %p443 = por %p441, %p442
      %p444 = scmp.le.s32.totalorder 1, %s27
      %p445 = scmp.lt.s32.totalorder %s27, 3
      %p446 = pnand %p444, %p445
      %p447 = pneg %p446
      // Predicated region
      $region9: #{tpu_custom_call.1} parent=5 // pred_check
        _
      $region10: #{tpu_custom_call.1} parent=5 // pred_check_branch
        %449 = sbr.rel (%p446) target = $region12
      $region11: #{tpu_custom_call.1} parent=5 // pred_region
        %s450 = ssub.s32 %s27, 1
        // Predicated region
        $region13: #{tpu_custom_call.1} parent=11 // pred_check
          %p451 = pneg %p74
        $region14: #{tpu_custom_call.1} parent=11 // pred_check_branch
          %453 = sbr.rel (%p451) target = $region16
        $region15: #{tpu_custom_call.1} parent=11 // pred_region
          _
        $region16: #{tpu_custom_call.1} parent=11 // pred_fallthru
          _
        // Predicated region
        $region17: #{tpu_custom_call.1} parent=11 // pred_check
          %p454 = pneg %p95
        $region18: #{tpu_custom_call.1} parent=11 // pred_check_branch
          %456 = sbr.rel (%p454) target = $region20
        $region19: #{tpu_custom_call.1} parent=11 // pred_region
          _
        $region20: #{tpu_custom_call.1} parent=11 // pred_fallthru
          _
        // Predicated region
        $region21: #{tpu_custom_call.1} parent=11 // pred_check
          %p457 = pneg %p116
        $region22: #{tpu_custom_call.1} parent=11 // pred_check_branch
          %459 = sbr.rel (%p457) target = $region24
        $region23: #{tpu_custom_call.1} parent=11 // pred_region
          _
        $region24: #{tpu_custom_call.1} parent=11 // pred_fallthru
          _
        // Predicated region
        $region25: #{tpu_custom_call.1} parent=11 // pred_check
          %p460 = pneg %p137
        $region26: #{tpu_custom_call.1} parent=11 // pred_check_branch
          %462 = sbr.rel (%p460) target = $region28
        $region27: #{tpu_custom_call.1} parent=11 // pred_region
          _
        $region28: #{tpu_custom_call.1} parent=11 // pred_fallthru
          _
        // Predicated region
        $region29: #{tpu_custom_call.1} parent=11 // pred_check
          %p463 = pneg %p158
        $region30: #{tpu_custom_call.1} parent=11 // pred_check_branch
          %465 = sbr.rel (%p463) target = $region32
        $region31: #{tpu_custom_call.1} parent=11 // pred_region
          _
        $region32: #{tpu_custom_call.1} parent=11 // pred_fallthru
          _
        // Predicated region
        $region33: #{tpu_custom_call.1} parent=11 // pred_check
          %p466 = pneg %p179
        $region34: #{tpu_custom_call.1} parent=11 // pred_check_branch
          %468 = sbr.rel (%p466) target = $region36
        $region35: #{tpu_custom_call.1} parent=11 // pred_region
          _
        $region36: #{tpu_custom_call.1} parent=11 // pred_fallthru
          _
        // Predicated region
        $region37: #{tpu_custom_call.1} parent=11 // pred_check
          %p469 = pneg %p200
        $region38: #{tpu_custom_call.1} parent=11 // pred_check_branch
          %471 = sbr.rel (%p469) target = $region40
        $region39: #{tpu_custom_call.1} parent=11 // pred_region
          _
        $region40: #{tpu_custom_call.1} parent=11 // pred_fallthru
          _
        // Predicated region
        $region41: #{tpu_custom_call.1} parent=11 // pred_check
          %p472 = pneg %p221
        $region42: #{tpu_custom_call.1} parent=11 // pred_check_branch
          %474 = sbr.rel (%p472) target = $region44
        $region43: #{tpu_custom_call.1} parent=11 // pred_region
          _
        $region44: #{tpu_custom_call.1} parent=11 // pred_fallthru
          _
        // Predicated region
        $region45: #{tpu_custom_call.1} parent=11 // pred_check
          %p475 = pneg %p242
        $region46: #{tpu_custom_call.1} parent=11 // pred_check_branch
          %477 = sbr.rel (%p475) target = $region48
        $region47: #{tpu_custom_call.1} parent=11 // pred_region
          _
        $region48: #{tpu_custom_call.1} parent=11 // pred_fallthru
          _
        // Predicated region
        $region49: #{tpu_custom_call.1} parent=11 // pred_check
          %p478 = pneg %p263
        $region50: #{tpu_custom_call.1} parent=11 // pred_check_branch
          %480 = sbr.rel (%p478) target = $region52
        $region51: #{tpu_custom_call.1} parent=11 // pred_region
          _
        $region52: #{tpu_custom_call.1} parent=11 // pred_fallthru
          _
        // Predicated region
        $region53: #{tpu_custom_call.1} parent=11 // pred_check
          %p481 = pneg %p284
        $region54: #{tpu_custom_call.1} parent=11 // pred_check_branch
          %483 = sbr.rel (%p481) target = $region56
        $region55: #{tpu_custom_call.1} parent=11 // pred_region
          _
        $region56: #{tpu_custom_call.1} parent=11 // pred_fallthru
          _
        // Predicated region
        $region57: #{tpu_custom_call.1} parent=11 // pred_check
          %p484 = pneg %p305
        $region58: #{tpu_custom_call.1} parent=11 // pred_check_branch
          %486 = sbr.rel (%p484) target = $region60
        $region59: #{tpu_custom_call.1} parent=11 // pred_region
          _
        $region60: #{tpu_custom_call.1} parent=11 // pred_fallthru
          _
        // Predicated region
        $region61: #{tpu_custom_call.1} parent=11 // pred_check
          %p487 = pneg %p326
        $region62: #{tpu_custom_call.1} parent=11 // pred_check_branch
          %489 = sbr.rel (%p487) target = $region64
        $region63: #{tpu_custom_call.1} parent=11 // pred_region
          _
        $region64: #{tpu_custom_call.1} parent=11 // pred_fallthru
          _
        // Predicated region
        $region65: #{tpu_custom_call.1} parent=11 // pred_check
          %p490 = pneg %p347
        $region66: #{tpu_custom_call.1} parent=11 // pred_check_branch
          %492 = sbr.rel (%p490) target = $region68
        $region67: #{tpu_custom_call.1} parent=11 // pred_region
          _
        $region68: #{tpu_custom_call.1} parent=11 // pred_fallthru
          _
        // Predicated region
        $region69: #{tpu_custom_call.1} parent=11 // pred_check
          %p493 = pneg %p368
        $region70: #{tpu_custom_call.1} parent=11 // pred_check_branch
          %495 = sbr.rel (%p493) target = $region72
        $region71: #{tpu_custom_call.1} parent=11 // pred_region
          _
        $region72: #{tpu_custom_call.1} parent=11 // pred_fallthru
          _
        // Predicated region
        $region73: #{tpu_custom_call.1} parent=11 // pred_check
          %p496 = pneg %p389
        $region74: #{tpu_custom_call.1} parent=11 // pred_check_branch
          %498 = sbr.rel (%p496) target = $region76
        $region75: #{tpu_custom_call.1} parent=11 // pred_region
          _
        $region76: #{tpu_custom_call.1} parent=11 // pred_fallthru
          _
        // Predicated region
        $region77: #{tpu_custom_call.1} parent=11 // pred_check
          %p499 = pneg %p410
        $region78: #{tpu_custom_call.1} parent=11 // pred_check_branch
          %501 = sbr.rel (%p499) target = $region80
        $region79: #{tpu_custom_call.1} parent=11 // pred_region
          _
        $region80: #{tpu_custom_call.1} parent=11 // pred_fallthru
          _
      $region12: #{tpu_custom_call.1} parent=5 // pred_fallthru
        _
      %p502 = scmp.lt.s32.totalorder %s27, 2
      // Predicated region
      $region81: #{tpu_custom_call.1} parent=5 // pred_check
        %p503 = pneg %p502
      $region82: #{tpu_custom_call.1} parent=5 // pred_check_branch
        %505 = sbr.rel (%p503) target = $region84
      $region83: #{tpu_custom_call.1} parent=5 // pred_region
        // Predicated region
        $region85: #{tpu_custom_call.1} parent=83 // pred_check
          %p506 = pneg %p47
        $region86: #{tpu_custom_call.1} parent=83 // pred_check_branch
          %508 = sbr.rel (%p506) target = $region88
        $region87: #{tpu_custom_call.1} parent=83 // pred_region
          %p509 = scmp.lt.s32.totalorder %s27, 1
          %s510 = scalar_select %p509, %s27, 1
          %s511 = smul.addr %s510, 8
          %s512 = scalar_lea.vmem %s0, %s511
        $region88: #{tpu_custom_call.1} parent=83 // pred_fallthru
          _
      $region84: #{tpu_custom_call.1} parent=5 // pred_fallthru
        _
      %p513 = scmp.le.s32.totalorder 1, %s27
      %p514 = scmp.lt.s32.totalorder %s27, 3
      %p515 = pnand %p513, %p514
      %p516 = pneg %p515
      // Predicated region
      $region89: #{tpu_custom_call.1} parent=5 // pred_check
        _
      $region90: #{tpu_custom_call.1} parent=5 // pred_check_branch
        %518 = sbr.rel (%p515) target = $region92
      $region91: #{tpu_custom_call.1} parent=5 // pred_region
        %s519 = ssub.s32 %s27, 1
        %p520 = scmp.lt.s32.totalorder %s32, 1
        %s521 = scalar_select %p520, %s32, 1
        %s522 = smul.addr %s521, 8
        %s523 = scalar_lea.vmem %s0, %s522
        %p524 = pneg %p53
        %p525 = pneg %p50
        %p526 = pneg %p74
        %p527 = pneg %p71
        %p528 = pneg %p95
        %p529 = pneg %p92
        %p530 = pneg %p116
        %p531 = pneg %p113
        %p532 = pneg %p137
        %p533 = pneg %p134
        %p534 = pneg %p158
        %p535 = pneg %p155
        %p536 = pneg %p179
        %p537 = pneg %p176
        %p538 = pneg %p200
        %p539 = pneg %p197
        %p540 = pneg %p221
        %p541 = pneg %p218
        %p542 = pneg %p242
        %p543 = pneg %p239
        %p544 = pneg %p263
        %p545 = pneg %p260
        %p546 = pneg %p284
        %p547 = pneg %p281
        %p548 = pneg %p305
        %p549 = pneg %p302
        %p550 = pneg %p326
        %p551 = pneg %p323
        %p552 = pneg %p347
        %p553 = pneg %p344
        %p554 = pneg %p368
        %p555 = pneg %p365
        %p556 = pneg %p389
        %p557 = pneg %p386
        %p558 = pneg %p410
        %p559 = pneg %p407
        %p560 = pneg %p436
        %p561 = pneg %p433
        %s562 = sand.u32 %s423, 1
        %s563 = scalar_lea.sflag [#allocation3], %s562
        %s564 = sand.u32 %s423, 1
        %s565 = scalar_lea.vmem [#allocation2], %s564
        %p566 = scmp.lt.s32.totalorder %s32, 1
        %s567 = scalar_select %p566, %s32, 1
        %s568 = smul.addr %s567, 8
        %s569 = scalar_lea.vmem %s0, %s568
        %v570 = vld [vmem:[%s569] sm:$0xff]
        %v571 = vld [vmem:[%s1] sm:$0xff]
        %v572 = vld [vmem:[%s1 + $0x8] sm:$0xff]
        %v573 = vld [vmem:[%s1 + $0x10] sm:$0xff]
        %v574 = vld [vmem:[%s1 + $0x18] sm:$0xff]
        %v575 = vld [vmem:[%s1 + $0x20] sm:$0xff]
        %v576 = vld [vmem:[%s1 + $0x28] sm:$0xff]
        %v577 = vld [vmem:[%s1 + $0x30] sm:$0xff]
        %v578 = vld [vmem:[%s1 + $0x38] sm:$0xff]
        %v579 = vld [vmem:[%s1 + $0x40] sm:$0xff]
        %v580 = vld [vmem:[%s1 + $0x48] sm:$0xff]
        %v581 = vld [vmem:[%s1 + $0x50] sm:$0xff]
        %v582 = vld [vmem:[%s1 + $0x58] sm:$0xff]
        %v583 = vld [vmem:[%s1 + $0x60] sm:$0xff]
        %v584 = vld [vmem:[%s1 + $0x68] sm:$0xff]
        %v585 = vld [vmem:[%s1 + $0x70] sm:$0xff]
        %v586 = vld [vmem:[%s2] sm:$0x7]
        %v588 = vlaneseq
        %v589 = vshrl.u32 %v588, 7
        %v590 = vsub.s32 0, %v589
        %v591 = vrot.slane %v586, %v590
        %v592 = vlaneseq
        %v593 = vshrl.u32 %v592, 7
        %v594 = vsub.s32 1, %v593
        %v595 = vrot.slane %v586, %v594
        %v596 = vlaneseq
        %v597 = vshrl.u32 %v596, 7
        %v598 = vsub.s32 2, %v597
        %v599 = vrot.slane %v586, %v598
        %vm603 = vcmask 326656
        %v605 = vsel %vm603, %v570, 0
        %607 = vmatprep.subr.mxu0 %v572
        %608 = vmatpush1.msra.mxu0 %v571
        %609 = vmatprep.subr.mxu0 %v575
        %610 = vmatpush1.msra.mxu0 %v574
        %611 = vmatprep.subr.mxu0 %v578
        %612 = vmatpush1.msra.mxu0 %v577
        %613 = vmatprep.subr.mxu0 %v581
        %614 = vmatpush1.msra.mxu0 %v580
        %615 = vmatprep.subr.mxu0 %v584
        %616 = vmatpush1.msra.mxu0 %v583
        %617 = vmatprep.subr.mxu0 0.0
        %618 = vmatpush1.msra.mxu0 0.0
        %619 = vmatprep.subr.mxu0 0.0
        %620 = vmatpush1.msra.mxu0 0.0
        %621 = vmatprep.subr.mxu0 0.0
        %622 = vmatpush1.msra.mxu0 0.0
        %623 = vmatprep.subr.mxu0 0.0
        %624 = vmatpush1.msra.mxu0 0.0
        %625 = vmatprep.subr.mxu0 0.0
        %626 = vmatpush1.msra.mxu0 0.0
        %627 = vmatprep.subr.mxu0 0.0
        %628 = vmatpush1.msra.mxu0 0.0
        %629 = vmatprep.subr.mxu0 0.0
        %630 = vmatpush1.msra.mxu0 0.0
        %631 = vmatprep.subr.mxu0 0.0
        %632 = vmatpush1.msra.mxu0 0.0
        %633 = vmatprep.subr.mxu0 0.0
        %634 = vmatpush1.msra.mxu0 0.0
        %635 = vmatprep.subr.mxu0 0.0
        %636 = vmatpush1.msra.mxu0 0.0
        %637 = vmatprep.subr.mxu0 0.0
        %638 = vmatpush1.msra.mxu0 0.0
        %639 = vmatprep.subr.mxu0 0.0
        %640 = vmatpush1.msra.mxu0 0.0
        %641 = vmatprep.subr.mxu0 0.0
        %642 = vmatpush1.msra.mxu0 0.0
        %643 = vmatprep.subr.mxu0 0.0
        %644 = vmatpush1.msra.mxu0 0.0
        %645 = vmatprep.subr.mxu0 0.0
        %646 = vmatpush1.msra.mxu0 0.0
        %647 = vmatprep.subr.mxu0 0.0
        %648 = vmatpush1.msra.mxu0 0.0
        %649 = vmatprep.subr.mxu0 0.0
        %650 = vmatpush1.msra.mxu0 0.0
        %651 = vmatprep.subr.mxu0 0.0
        %652 = vmatpush1.msra.mxu0 0.0
        %653 = vmatprep.subr.mxu0 0.0
        %654 = vmatpush1.msra.mxu0 0.0
        %655 = vmatprep.subr.mxu0 0.0
        %656 = vmatpush1.msra.mxu0 0.0
        %657 = vmatprep.subr.mxu0 0.0
        %658 = vmatpush1.msra.mxu0 0.0
        %659 = vmatprep.subr.mxu0 0.0
        %660 = vmatpush1.msra.mxu0 0.0
        %661 = vmatprep.subr.mxu0 0.0
        %662 = vmatpush1.msra.mxu0 0.0
        %663 = vmatprep.subr.mxu0 0.0
        %664 = vmatpush1.msra.mxu0 0.0
        %665 = vmatprep.subr.mxu0 0.0
        %666 = vmatpush1.msra.mxu0 0.0
        %667 = vmatprep.subr.mxu0 0.0
        %668 = vmatpush1.msra.mxu0 0.0
        %669 = vmatprep.subr.mxu0 0.0
        %670 = vmatpush1.msra.mxu0 0.0
        %671 = vmatprep.mubr.f32.mxu0 0.0
        %672 = vmatmul.mubr.f32.gmra.mrb[0].mxu0 %v605
        %v673 = vpop.f32.mrb[0].mxu0
        %v674 = vadd.f32 %v591, %v673
        %v675 = vpop.f32.mrb[0].mxu0
        %v676 = vadd.f32 %v595, %v675
        %677 = vdwg.mxu0
        %678 = vmatprep.subr.mxu0 0.0
        %679 = vmatpush1.msra.mxu0 %v573
        %680 = vmatprep.subr.mxu0 0.0
        %681 = vmatpush1.msra.mxu0 %v576
        %682 = vmatprep.subr.mxu0 0.0
        %683 = vmatpush1.msra.mxu0 %v579
        %684 = vmatprep.subr.mxu0 0.0
        %685 = vmatpush1.msra.mxu0 %v582
        %686 = vmatprep.subr.mxu0 0.0
        %687 = vmatpush1.msra.mxu0 %v585
        %688 = vmatprep.subr.mxu0 0.0
        %689 = vmatpush1.msra.mxu0 0.0
        %690 = vmatprep.subr.mxu0 0.0
        %691 = vmatpush1.msra.mxu0 0.0
        %692 = vmatprep.subr.mxu0 0.0
        %693 = vmatpush1.msra.mxu0 0.0
        %694 = vmatprep.subr.mxu0 0.0
        %695 = vmatpush1.msra.mxu0 0.0
        %696 = vmatprep.subr.mxu0 0.0
        %697 = vmatpush1.msra.mxu0 0.0
        %698 = vmatprep.subr.mxu0 0.0
        %699 = vmatpush1.msra.mxu0 0.0
        %700 = vmatprep.subr.mxu0 0.0
        %701 = vmatpush1.msra.mxu0 0.0
        %702 = vmatprep.subr.mxu0 0.0
        %703 = vmatpush1.msra.mxu0 0.0
        %704 = vmatprep.subr.mxu0 0.0
        %705 = vmatpush1.msra.mxu0 0.0
        %706 = vmatprep.subr.mxu0 0.0
        %707 = vmatpush1.msra.mxu0 0.0
        %708 = vmatprep.subr.mxu0 0.0
        %709 = vmatpush1.msra.mxu0 0.0
        %710 = vmatprep.subr.mxu0 0.0
        %711 = vmatpush1.msra.mxu0 0.0
        %712 = vmatprep.subr.mxu0 0.0
        %713 = vmatpush1.msra.mxu0 0.0
        %714 = vmatprep.subr.mxu0 0.0
        %715 = vmatpush1.msra.mxu0 0.0
        %716 = vmatprep.subr.mxu0 0.0
        %717 = vmatpush1.msra.mxu0 0.0
        %718 = vmatprep.subr.mxu0 0.0
        %719 = vmatpush1.msra.mxu0 0.0
        %720 = vmatprep.subr.mxu0 0.0
        %721 = vmatpush1.msra.mxu0 0.0
        %722 = vmatprep.subr.mxu0 0.0
        %723 = vmatpush1.msra.mxu0 0.0
        %724 = vmatprep.subr.mxu0 0.0
        %725 = vmatpush1.msra.mxu0 0.0
        %726 = vmatprep.subr.mxu0 0.0
        %727 = vmatpush1.msra.mxu0 0.0
        %728 = vmatprep.subr.mxu0 0.0
        %729 = vmatpush1.msra.mxu0 0.0
        %730 = vmatprep.subr.mxu0 0.0
        %731 = vmatpush1.msra.mxu0 0.0
        %732 = vmatprep.subr.mxu0 0.0
        %733 = vmatpush1.msra.mxu0 0.0
        %734 = vmatprep.subr.mxu0 0.0
        %735 = vmatpush1.msra.mxu0 0.0
        %736 = vmatprep.subr.mxu0 0.0
        %737 = vmatpush1.msra.mxu0 0.0
        %738 = vmatprep.subr.mxu0 0.0
        %739 = vmatpush1.msra.mxu0 0.0
        %740 = vmatprep.subr.mxu0 0.0
        %741 = vmatpush1.msra.mxu0 0.0
        %742 = vmatprep.mubr.f32.mxu0 0.0
        %743 = vmatmul.mubr.f32.gmra.mrb[0].mxu0 %v605
        %v744 = vpop.f32.mrb[0].mxu0
        %v745 = vadd.f32 %v599, %v744
        %v746 = vpop.f32.mrb[0].mxu0
        %747 = vdwg.mxu0
        %v748 = vld [vmem:[%s15] sm:$0xff]
        %v749 = vld [vmem:[%s15 + $0x8] sm:$0x3]
        %v752 = vcombine.high %v748, %v748
        %v754 = vunpack.c.l.s4 1966171168
        %v755 = vunpack.c.0.s8 %v754
        %v756 = vlaneseq
        %v757 = vshrl.u32 %v756, 7
        %v758 = vsub.s32 %v755, %v757
        %v759 = vrot.slane %v748, %v758
        %v761 = vunpack.c.l.s4 1966171168
        %v762 = vunpack.c.0.s8 %v761
        %v763 = vlaneseq
        %v764 = vshrl.u32 %v763, 7
        %v765 = vsub.s32 %v762, %v764
        %v766 = vrot.slane %v752, %v765
        %v767 = vcombine.high %v759, %v759
        %v768 = vcombine.high %v766, %v766
        %v770 = vunpack.c.l.s4 1966171168
        %v771 = vunpack.c.0.s8 %v770
        %v772 = vlaneseq
        %v773 = vshrl.u32 %v772, 7
        %v774 = vsub.s32 %v771, %v773
        %v775 = vrot.slane %v759, %v774
        %v777 = vunpack.c.l.s4 1966171168
        %v778 = vunpack.c.0.s8 %v777
        %v779 = vlaneseq
        %v780 = vshrl.u32 %v779, 7
        %v781 = vsub.s32 %v778, %v780
        %v782 = vrot.slane %v766, %v781
        %v784 = vunpack.c.l.s4 1966171168
        %v785 = vunpack.c.0.s8 %v784
        %v786 = vlaneseq
        %v787 = vshrl.u32 %v786, 7
        %v788 = vsub.s32 %v785, %v787
        %v789 = vrot.slane %v767, %v788
        %v791 = vunpack.c.l.s4 1966171168
        %v792 = vunpack.c.0.s8 %v791
        %v793 = vlaneseq
        %v794 = vshrl.u32 %v793, 7
        %v795 = vsub.s32 %v792, %v794
        %v796 = vrot.slane %v768, %v795
        %v797 = vcombine.high %v775, %v775
        %v798 = vcombine.high %v782, %v782
        %v799 = vcombine.high %v789, %v789
        %v800 = vcombine.high %v796, %v796
        %v802 = vunpack.c.l.s4 1966171168
        %v803 = vunpack.c.0.s8 %v802
        %v804 = vlaneseq
        %v805 = vshrl.u32 %v804, 7
        %v806 = vsub.s32 %v803, %v805
        %v807 = vrot.slane %v749, %v806
        %v808 = vcombine.high %v807, %v807
        %v810 = vunpack.c.l.s4 1966171168
        %v811 = vunpack.c.0.s8 %v810
        %v812 = vlaneseq
        %v813 = vshrl.u32 %v812, 7
        %v814 = vsub.s32 %v811, %v813
        %v815 = vrot.slane %v807, %v814
        %v817 = vunpack.c.l.s4 1966171168
        %v818 = vunpack.c.0.s8 %v817
        %v819 = vlaneseq
        %v820 = vshrl.u32 %v819, 7
        %v821 = vsub.s32 %v818, %v820
        %v822 = vrot.slane %v808, %v821
        %v823 = vlaneseq
        %v824 = vshrl.u32 %v823, 7
        %v825 = vsub.s32 0, %v824
        %v826 = vrot.slane %v775, %v825
        %v827 = vlaneseq
        %v828 = vshrl.u32 %v827, 7
        %v829 = vsub.s32 0, %v828
        %v830 = vrot.slane %v789, %v829
        %v831 = vlaneseq
        %v832 = vshrl.u32 %v831, 7
        %v833 = vsub.s32 0, %v832
        %v834 = vrot.slane %v797, %v833
        %v835 = vlaneseq
        %v836 = vshrl.u32 %v835, 7
        %v837 = vsub.s32 0, %v836
        %v838 = vrot.slane %v799, %v837
        %v839 = vlaneseq
        %v840 = vshrl.u32 %v839, 7
        %v841 = vsub.s32 0, %v840
        %v842 = vrot.slane %v782, %v841
        %v843 = vlaneseq
        %v844 = vshrl.u32 %v843, 7
        %v845 = vsub.s32 0, %v844
        %v846 = vrot.slane %v796, %v845
        %v847 = vlaneseq
        %v848 = vshrl.u32 %v847, 7
        %v849 = vsub.s32 0, %v848
        %v850 = vrot.slane %v798, %v849
        %v851 = vlaneseq
        %v852 = vshrl.u32 %v851, 7
        %v853 = vsub.s32 0, %v852
        %v854 = vrot.slane %v800, %v853
        %v855 = vlaneseq
        %v856 = vshrl.u32 %v855, 7
        %v857 = vsub.s32 0, %v856
        %v858 = vrot.slane %v815, %v857
        %v859 = vlaneseq
        %v860 = vshrl.u32 %v859, 7
        %v861 = vsub.s32 0, %v860
        %v862 = vrot.slane %v822, %v861
        %v873 = vmul.f32 %v676, %v826
        %v874 = vmul.f32 %v676, %v830
        %v875 = vmul.f32 %v676, %v834
        %v876 = vmul.f32 %v676, %v838
        %v877 = vmul.f32 %v676, %v842
        %v878 = vmul.f32 %v676, %v846
        %v879 = vmul.f32 %v676, %v850
        %v880 = vmul.f32 %v676, %v854
        %v881 = vmul.f32 %v676, %v858
        %v882 = vmul.f32 %v676, %v862
        %v883 = vmul.f32 %v745, %v826
        %v884 = vmul.f32 %v745, %v830
        %v885 = vmul.f32 %v745, %v834
        %v886 = vmul.f32 %v745, %v838
        %v887 = vmul.f32 %v745, %v842
        %v888 = vmul.f32 %v745, %v846
        %v889 = vmul.f32 %v745, %v850
        %v890 = vmul.f32 %v745, %v854
        %v891 = vmul.f32 %v745, %v858
        %v892 = vmul.f32 %v745, %v862
        %v894 = vsel %vm603, %v674, 0
        %v897 = vsel %vm603, %v873, 0
        %v900 = vsel %vm603, %v874, 0
        %v903 = vsel %vm603, %v875, 0
        %v906 = vsel %vm603, %v876, 0
        %v909 = vsel %vm603, %v877, 0
        %v912 = vsel %vm603, %v878, 0
        %v915 = vsel %vm603, %v879, 0
        %v918 = vsel %vm603, %v880, 0
        %v921 = vsel %vm603, %v881, 0
        %v924 = vsel %vm603, %v882, 0
        %926 = vmatprep.subr.mxu0 0.0
        %927 = vmatpush1.xpose.msra.mxu0 %v897
        %928 = vmatprep.subr.mxu0 0.0
        %929 = vmatpush1.xpose.msra.mxu0 %v900
        %930 = vmatprep.subr.mxu0 0.0
        %931 = vmatpush1.xpose.msra.mxu0 %v903
        %932 = vmatprep.subr.mxu0 0.0
        %933 = vmatpush1.xpose.msra.mxu0 %v906
        %934 = vmatprep.subr.mxu0 0.0
        %935 = vmatpush1.xpose.msra.mxu0 %v909
        %936 = vmatprep.subr.mxu0 0.0
        %937 = vmatpush1.xpose.msra.mxu0 %v912
        %938 = vmatprep.subr.mxu0 0.0
        %939 = vmatpush1.xpose.msra.mxu0 %v915
        %940 = vmatprep.subr.mxu0 0.0
        %941 = vmatpush1.xpose.msra.mxu0 %v918
        %942 = vmatprep.subr.mxu0 0.0
        %943 = vmatpush1.xpose.msra.mxu0 %v921
        %944 = vmatprep.subr.mxu0 0.0
        %945 = vmatpush1.xpose.msra.mxu0 %v924
        %946 = vmatprep.subr.mxu0 0.0
        %947 = vmatpush1.xpose.msra.mxu0 0.0
        %948 = vmatprep.subr.mxu0 0.0
        %949 = vmatpush1.xpose.msra.mxu0 0.0
        %950 = vmatprep.subr.mxu0 0.0
        %951 = vmatpush1.xpose.msra.mxu0 0.0
        %952 = vmatprep.subr.mxu0 0.0
        %953 = vmatpush1.xpose.msra.mxu0 0.0
        %954 = vmatprep.subr.mxu0 0.0
        %955 = vmatpush1.xpose.msra.mxu0 0.0
        %956 = vmatprep.subr.mxu0 0.0
        %957 = vmatpush1.xpose.msra.mxu0 0.0
        %958 = vmatprep.subr.mxu0 0.0
        %959 = vmatpush1.xpose.msra.mxu0 0.0
        %960 = vmatprep.subr.mxu0 0.0
        %961 = vmatpush1.xpose.msra.mxu0 0.0
        %962 = vmatprep.subr.mxu0 0.0
        %963 = vmatpush1.xpose.msra.mxu0 0.0
        %964 = vmatprep.subr.mxu0 0.0
        %965 = vmatpush1.xpose.msra.mxu0 0.0
        %966 = vmatprep.subr.mxu0 0.0
        %967 = vmatpush1.xpose.msra.mxu0 0.0
        %968 = vmatprep.subr.mxu0 0.0
        %969 = vmatpush1.xpose.msra.mxu0 0.0
        %970 = vmatprep.subr.mxu0 0.0
        %971 = vmatpush1.xpose.msra.mxu0 0.0
        %972 = vmatprep.subr.mxu0 0.0
        %973 = vmatpush1.xpose.msra.mxu0 0.0
        %974 = vmatprep.subr.mxu0 0.0
        %975 = vmatpush1.xpose.msra.mxu0 0.0
        %976 = vmatprep.subr.mxu0 0.0
        %977 = vmatpush1.xpose.msra.mxu0 0.0
        %978 = vmatprep.subr.mxu0 0.0
        %979 = vmatpush1.xpose.msra.mxu0 0.0
        %980 = vmatprep.subr.mxu0 0.0
        %981 = vmatpush1.xpose.msra.mxu0 0.0
        %982 = vmatprep.subr.mxu0 0.0
        %983 = vmatpush1.xpose.msra.mxu0 0.0
        %984 = vmatprep.subr.mxu0 0.0
        %985 = vmatpush1.xpose.msra.mxu0 0.0
        %986 = vmatprep.subr.mxu0 0.0
        %987 = vmatpush1.xpose.msra.mxu0 0.0
        %988 = vmatprep.subr.mxu0 0.0
        %989 = vmatpush1.xpose.msra.mxu0 0.0
        %990 = vmatprep.mubr.f32.mxu0 0.0
        %991 = vmatmul.mubr.f32.gmra.mrb[0].mxu0 %v894
        %v992 = vpop.f32.mrb[0].mxu0
        %v993 = vadd.f32 0.0, %v992
        %v994 = vpop.f32.mrb[0].mxu0
        %995 = vdwg.mxu0
        %vm996 = vcmask 654336
        %v997 = vsel %vm996, %v993, -inf
        %998 = vmax.xlane.f32.xlu0 %v997
        %v999 = vpop.xlane.xlu0 %998
        %v1000 = vsub.f32 %v993, %v999
        %v1001 = vmul.f32 %v1000, 1.442695
        %v1002 = vpow.pop %v1001
        %v1003 = vld [vmem:[%s16] sm:$0xff]
        %v1004 = vld [vmem:[%s16 + $0x8] sm:$0xff]
        %v1005 = vld [vmem:[%s16 + $0x10] sm:$0xff]
        %v1006 = vld [vmem:[%s16 + $0x18] sm:$0xff]
        %v1007 = vld [vmem:[%s16 + $0x20] sm:$0xff]
        %v1008 = vld [vmem:[%s16 + $0x28] sm:$0xff]
        %v1009 = vld [vmem:[%s16 + $0x30] sm:$0xff]
        %v1010 = vld [vmem:[%s16 + $0x38] sm:$0xff]
        %v1011 = vld [vmem:[%s16 + $0x40] sm:$0xff]
        %v1012 = vld [vmem:[%s16 + $0x48] sm:$0xff]
        %v1014 = vsel %vm996, %v1002, 0
        %1016 = vmatprep.subr.mxu0 0.0
        %1017 = vmatpush1.msra.mxu0 %v1003
        %1018 = vmatprep.subr.mxu0 0.0
        %1019 = vmatpush1.msra.mxu0 %v1004
        %1020 = vmatprep.subr.mxu0 0.0
        %1021 = vmatpush1.msra.mxu0 %v1005
        %1022 = vmatprep.subr.mxu0 0.0
        %1023 = vmatpush1.msra.mxu0 %v1006
        %1024 = vmatprep.subr.mxu0 0.0
        %1025 = vmatpush1.msra.mxu0 %v1007
        %1026 = vmatprep.subr.mxu0 0.0
        %1027 = vmatpush1.msra.mxu0 %v1008
        %1028 = vmatprep.subr.mxu0 0.0
        %1029 = vmatpush1.msra.mxu0 %v1009
        %1030 = vmatprep.subr.mxu0 0.0
        %1031 = vmatpush1.msra.mxu0 %v1010
        %1032 = vmatprep.subr.mxu0 0.0
        %1033 = vmatpush1.msra.mxu0 %v1011
        %1034 = vmatprep.subr.mxu0 0.0
        %1035 = vmatpush1.msra.mxu0 %v1012
        %1036 = vmatprep.subr.mxu0 0.0
        %1037 = vmatpush1.msra.mxu0 0.0
        %1038 = vmatprep.subr.mxu0 0.0
        %1039 = vmatpush1.msra.mxu0 0.0
        %1040 = vmatprep.subr.mxu0 0.0
        %1041 = vmatpush1.msra.mxu0 0.0
        %1042 = vmatprep.subr.mxu0 0.0
        %1043 = vmatpush1.msra.mxu0 0.0
        %1044 = vmatprep.subr.mxu0 0.0
        %1045 = vmatpush1.msra.mxu0 0.0
        %1046 = vmatprep.subr.mxu0 0.0
        %1047 = vmatpush1.msra.mxu0 0.0
        %1048 = vmatprep.subr.mxu0 0.0
        %1049 = vmatpush1.msra.mxu0 0.0
        %1050 = vmatprep.subr.mxu0 0.0
        %1051 = vmatpush1.msra.mxu0 0.0
        %1052 = vmatprep.subr.mxu0 0.0
        %1053 = vmatpush1.msra.mxu0 0.0
        %1054 = vmatprep.subr.mxu0 0.0
        %1055 = vmatpush1.msra.mxu0 0.0
        %1056 = vmatprep.subr.mxu0 0.0
        %1057 = vmatpush1.msra.mxu0 0.0
        %1058 = vmatprep.subr.mxu0 0.0
        %1059 = vmatpush1.msra.mxu0 0.0
        %1060 = vmatprep.subr.mxu0 0.0
        %1061 = vmatpush1.msra.mxu0 0.0
        %1062 = vmatprep.subr.mxu0 0.0
        %1063 = vmatpush1.msra.mxu0 0.0
        %1064 = vmatprep.subr.mxu0 0.0
        %1065 = vmatpush1.msra.mxu0 0.0
        %1066 = vmatprep.subr.mxu0 0.0
        %1067 = vmatpush1.msra.mxu0 0.0
        %1068 = vmatprep.subr.mxu0 0.0
        %1069 = vmatpush1.msra.mxu0 0.0
        %1070 = vmatprep.subr.mxu0 0.0
        %1071 = vmatpush1.msra.mxu0 0.0
        %1072 = vmatprep.subr.mxu0 0.0
        %1073 = vmatpush1.msra.mxu0 0.0
        %1074 = vmatprep.subr.mxu0 0.0
        %1075 = vmatpush1.msra.mxu0 0.0
        %1076 = vmatprep.subr.mxu0 0.0
        %1077 = vmatpush1.msra.mxu0 0.0
        %1078 = vmatprep.subr.mxu0 0.0
        %1079 = vmatpush1.msra.mxu0 0.0
        %1080 = vmatprep.mubr.f32.mxu0 0.0
        %1081 = vmatmul.mubr.f32.gmra.mrb[0].mxu0 %v1014
        %v1082 = vpop.f32.mrb[0].mxu0
        %v1083 = vadd.f32 0.0, %v1082
        %v1084 = vpop.f32.mrb[0].mxu0
        %1085 = vdwg.mxu0
        %v1086 = vrcp.pop %v1083
        %v1087 = vld [vmem:[%s17] sm:$0xff]
        %v1088 = vld [vmem:[%s17 + $0x8] sm:$0x3]
        %vm1089 = vcmask 80896
        %v1091 = vsel %vm1089, %v1086, 0
        %vm1093 = vcmask 1041408
        %v1095 = vsel %vm1093, %v1088, 0
        %1097 = vmatprep.subr.mxu0 0.0
        %1098 = vmatpush1.msra.mxu0 %v1087
        %1099 = vmatprep.subr.mxu0 0.0
        %1100 = vmatpush1.msra.mxu0 %v1095
        %1101 = vmatprep.subr.mxu0 0.0
        %1102 = vmatpush1.msra.mxu0 0.0
        %1103 = vmatprep.subr.mxu0 0.0
        %1104 = vmatpush1.msra.mxu0 0.0
        %1105 = vmatprep.subr.mxu0 0.0
        %1106 = vmatpush1.msra.mxu0 0.0
        %1107 = vmatprep.subr.mxu0 0.0
        %1108 = vmatpush1.msra.mxu0 0.0
        %1109 = vmatprep.subr.mxu0 0.0
        %1110 = vmatpush1.msra.mxu0 0.0
        %1111 = vmatprep.subr.mxu0 0.0
        %1112 = vmatpush1.msra.mxu0 0.0
        %1113 = vmatprep.subr.mxu0 0.0
        %1114 = vmatpush1.msra.mxu0 0.0
        %1115 = vmatprep.subr.mxu0 0.0
        %1116 = vmatpush1.msra.mxu0 0.0
        %1117 = vmatprep.subr.mxu0 0.0
        %1118 = vmatpush1.msra.mxu0 0.0
        %1119 = vmatprep.subr.mxu0 0.0
        %1120 = vmatpush1.msra.mxu0 0.0
        %1121 = vmatprep.subr.mxu0 0.0
        %1122 = vmatpush1.msra.mxu0 0.0
        %1123 = vmatprep.subr.mxu0 0.0
        %1124 = vmatpush1.msra.mxu0 0.0
        %1125 = vmatprep.subr.mxu0 0.0
        %1126 = vmatpush1.msra.mxu0 0.0
        %1127 = vmatprep.subr.mxu0 0.0
        %1128 = vmatpush1.msra.mxu0 0.0
        %1129 = vmatprep.subr.mxu0 0.0
        %1130 = vmatpush1.msra.mxu0 0.0
        %1131 = vmatprep.subr.mxu0 0.0
        %1132 = vmatpush1.msra.mxu0 0.0
        %1133 = vmatprep.subr.mxu0 0.0
        %1134 = vmatpush1.msra.mxu0 0.0
        %1135 = vmatprep.subr.mxu0 0.0
        %1136 = vmatpush1.msra.mxu0 0.0
        %1137 = vmatprep.subr.mxu0 0.0
        %1138 = vmatpush1.msra.mxu0 0.0
        %1139 = vmatprep.subr.mxu0 0.0
        %1140 = vmatpush1.msra.mxu0 0.0
        %1141 = vmatprep.subr.mxu0 0.0
        %1142 = vmatpush1.msra.mxu0 0.0
        %1143 = vmatprep.subr.mxu0 0.0
        %1144 = vmatpush1.msra.mxu0 0.0
        %1145 = vmatprep.subr.mxu0 0.0
        %1146 = vmatpush1.msra.mxu0 0.0
        %1147 = vmatprep.subr.mxu0 0.0
        %1148 = vmatpush1.msra.mxu0 0.0
        %1149 = vmatprep.subr.mxu0 0.0
        %1150 = vmatpush1.msra.mxu0 0.0
        %1151 = vmatprep.subr.mxu0 0.0
        %1152 = vmatpush1.msra.mxu0 0.0
        %1153 = vmatprep.subr.mxu0 0.0
        %1154 = vmatpush1.msra.mxu0 0.0
        %1155 = vmatprep.subr.mxu0 0.0
        %1156 = vmatpush1.msra.mxu0 0.0
        %1157 = vmatprep.subr.mxu0 0.0
        %1158 = vmatpush1.msra.mxu0 0.0
        %1159 = vmatprep.subr.mxu0 0.0
        %1160 = vmatpush1.msra.mxu0 0.0
        %1161 = vmatprep.mubr.f32.mxu0 0.0
        %1162 = vmatmul.mubr.f32.gmra.mrb[0].mxu0 %v1091
        %v1163 = vpop.f32.mrb[0].mxu0
        %v1164 = vadd.f32 0.0, %v1163
        %v1165 = vpop.f32.mrb[0].mxu0
        %1166 = vdwg.mxu0
        %v1167 = vmul.f32 %v1002, %v1164
        %v1169 = vsel %vm996, %v1167, 0
        %1171 = vmatprep.subr.mxu0 0.0
        %1172 = vmatpush1.msra.mxu0 %v883
        %1173 = vmatprep.subr.mxu0 0.0
        %1174 = vmatpush1.msra.mxu0 %v884
        %1175 = vmatprep.subr.mxu0 0.0
        %1176 = vmatpush1.msra.mxu0 %v885
        %1177 = vmatprep.subr.mxu0 0.0
        %1178 = vmatpush1.msra.mxu0 %v886
        %1179 = vmatprep.subr.mxu0 0.0
        %1180 = vmatpush1.msra.mxu0 %v887
        %1181 = vmatprep.subr.mxu0 0.0
        %1182 = vmatpush1.msra.mxu0 %v888
        %1183 = vmatprep.subr.mxu0 0.0
        %1184 = vmatpush1.msra.mxu0 %v889
        %1185 = vmatprep.subr.mxu0 0.0
        %1186 = vmatpush1.msra.mxu0 %v890
        %1187 = vmatprep.subr.mxu0 0.0
        %1188 = vmatpush1.msra.mxu0 %v891
        %1189 = vmatprep.subr.mxu0 0.0
        %1190 = vmatpush1.msra.mxu0 %v892
        %1191 = vmatprep.subr.mxu0 0.0
        %1192 = vmatpush1.msra.mxu0 0.0
        %1193 = vmatprep.subr.mxu0 0.0
        %1194 = vmatpush1.msra.mxu0 0.0
        %1195 = vmatprep.subr.mxu0 0.0
        %1196 = vmatpush1.msra.mxu0 0.0
        %1197 = vmatprep.subr.mxu0 0.0
        %1198 = vmatpush1.msra.mxu0 0.0
        %1199 = vmatprep.subr.mxu0 0.0
        %1200 = vmatpush1.msra.mxu0 0.0
        %1201 = vmatprep.subr.mxu0 0.0
        %1202 = vmatpush1.msra.mxu0 0.0
        %1203 = vmatprep.subr.mxu0 0.0
        %1204 = vmatpush1.msra.mxu0 0.0
        %1205 = vmatprep.subr.mxu0 0.0
        %1206 = vmatpush1.msra.mxu0 0.0
        %1207 = vmatprep.subr.mxu0 0.0
        %1208 = vmatpush1.msra.mxu0 0.0
        %1209 = vmatprep.subr.mxu0 0.0
        %1210 = vmatpush1.msra.mxu0 0.0
        %1211 = vmatprep.subr.mxu0 0.0
        %1212 = vmatpush1.msra.mxu0 0.0
        %1213 = vmatprep.subr.mxu0 0.0
        %1214 = vmatpush1.msra.mxu0 0.0
        %1215 = vmatprep.subr.mxu0 0.0
        %1216 = vmatpush1.msra.mxu0 0.0
        %1217 = vmatprep.subr.mxu0 0.0
        %1218 = vmatpush1.msra.mxu0 0.0
        %1219 = vmatprep.subr.mxu0 0.0
        %1220 = vmatpush1.msra.mxu0 0.0
        %1221 = vmatprep.subr.mxu0 0.0
        %1222 = vmatpush1.msra.mxu0 0.0
        %1223 = vmatprep.subr.mxu0 0.0
        %1224 = vmatpush1.msra.mxu0 0.0
        %1225 = vmatprep.subr.mxu0 0.0
        %1226 = vmatpush1.msra.mxu0 0.0
        %1227 = vmatprep.subr.mxu0 0.0
        %1228 = vmatpush1.msra.mxu0 0.0
        %1229 = vmatprep.subr.mxu0 0.0
        %1230 = vmatpush1.msra.mxu0 0.0
        %1231 = vmatprep.subr.mxu0 0.0
        %1232 = vmatpush1.msra.mxu0 0.0
        %1233 = vmatprep.subr.mxu0 0.0
        %1234 = vmatpush1.msra.mxu0 0.0
        %1235 = vmatprep.mubr.f32.mxu0 0.0
        %1236 = vmatmul.mubr.f32.gmra.mrb[0].mxu0 %v1169
        %v1237 = vpop.f32.mrb[0].mxu0
        %v1238 = vadd.f32 0.0, %v1237
        %v1239 = vpop.f32.mrb[0].mxu0
        %1240 = vdwg.mxu0
        %v1241 = vld [vmem:[%s3] sm:$0xff]
        %v1242 = vld [vmem:[%s3 + $0x8] sm:$0xff]
        %v1243 = vld [vmem:[%s3 + $0x10] sm:$0xff]
        %v1244 = vld [vmem:[%s3 + $0x18] sm:$0xff]
        %v1245 = vld [vmem:[%s3 + $0x20] sm:$0xff]
        %v1246 = vld [vmem:[%s4] sm:$0x1]
        %v1248 = vlaneseq
        %v1249 = vshrl.u32 %v1248, 7
        %v1250 = vsub.s32 0, %v1249
        %v1251 = vrot.slane %v1246, %v1250
        %v1254 = vsel %vm603, %v1238, 0
        %1256 = vmatprep.subr.mxu0 0.0
        %1257 = vmatpush1.msra.mxu0 %v1241
        %1258 = vmatprep.subr.mxu0 0.0
        %1259 = vmatpush1.msra.mxu0 %v1242
        %1260 = vmatprep.subr.mxu0 0.0
        %1261 = vmatpush1.msra.mxu0 %v1243
        %1262 = vmatprep.subr.mxu0 0.0
        %1263 = vmatpush1.msra.mxu0 %v1244
        %1264 = vmatprep.subr.mxu0 0.0
        %1265 = vmatpush1.msra.mxu0 %v1245
        %1266 = vmatprep.subr.mxu0 0.0
        %1267 = vmatpush1.msra.mxu0 0.0
        %1268 = vmatprep.subr.mxu0 0.0
        %1269 = vmatpush1.msra.mxu0 0.0
        %1270 = vmatprep.subr.mxu0 0.0
        %1271 = vmatpush1.msra.mxu0 0.0
        %1272 = vmatprep.subr.mxu0 0.0
        %1273 = vmatpush1.msra.mxu0 0.0
        %1274 = vmatprep.subr.mxu0 0.0
        %1275 = vmatpush1.msra.mxu0 0.0
        %1276 = vmatprep.subr.mxu0 0.0
        %1277 = vmatpush1.msra.mxu0 0.0
        %1278 = vmatprep.subr.mxu0 0.0
        %1279 = vmatpush1.msra.mxu0 0.0
        %1280 = vmatprep.subr.mxu0 0.0
        %1281 = vmatpush1.msra.mxu0 0.0
        %1282 = vmatprep.subr.mxu0 0.0
        %1283 = vmatpush1.msra.mxu0 0.0
        %1284 = vmatprep.subr.mxu0 0.0
        %1285 = vmatpush1.msra.mxu0 0.0
        %1286 = vmatprep.subr.mxu0 0.0
        %1287 = vmatpush1.msra.mxu0 0.0
        %1288 = vmatprep.subr.mxu0 0.0
        %1289 = vmatpush1.msra.mxu0 0.0
        %1290 = vmatprep.subr.mxu0 0.0
        %1291 = vmatpush1.msra.mxu0 0.0
        %1292 = vmatprep.subr.mxu0 0.0
        %1293 = vmatpush1.msra.mxu0 0.0
        %1294 = vmatprep.subr.mxu0 0.0
        %1295 = vmatpush1.msra.mxu0 0.0
        %1296 = vmatprep.subr.mxu0 0.0
        %1297 = vmatpush1.msra.mxu0 0.0
        %1298 = vmatprep.subr.mxu0 0.0
        %1299 = vmatpush1.msra.mxu0 0.0
        %1300 = vmatprep.subr.mxu0 0.0
        %1301 = vmatpush1.msra.mxu0 0.0
        %1302 = vmatprep.subr.mxu0 0.0
        %1303 = vmatpush1.msra.mxu0 0.0
        %1304 = vmatprep.subr.mxu0 0.0
        %1305 = vmatpush1.msra.mxu0 0.0
        %1306 = vmatprep.subr.mxu0 0.0
        %1307 = vmatpush1.msra.mxu0 0.0
        %1308 = vmatprep.subr.mxu0 0.0
        %1309 = vmatpush1.msra.mxu0 0.0
        %1310 = vmatprep.subr.mxu0 0.0
        %1311 = vmatpush1.msra.mxu0 0.0
        %1312 = vmatprep.subr.mxu0 0.0
        %1313 = vmatpush1.msra.mxu0 0.0
        %1314 = vmatprep.subr.mxu0 0.0
        %1315 = vmatpush1.msra.mxu0 0.0
        %1316 = vmatprep.subr.mxu0 0.0
        %1317 = vmatpush1.msra.mxu0 0.0
        %1318 = vmatprep.subr.mxu0 0.0
        %1319 = vmatpush1.msra.mxu0 0.0
        %1320 = vmatprep.mubr.f32.mxu0 0.0
        %1321 = vmatmul.mubr.f32.gmra.mrb[0].mxu0 %v1254
        %v1322 = vpop.f32.mrb[0].mxu0
        %v1323 = vadd.f32 %v1251, %v1322
        %v1324 = vpop.f32.mrb[0].mxu0
        %1325 = vdwg.mxu0
        %v1326 = vadd.f32 %v570, %v1323
        %v1327 = vld [vmem:[%s5] sm:$0x1]
        %v1328 = vld [vmem:[%s6] sm:$0x1]
        %v1329 = vsel %vm603, %v1326, 0.0
        %1330 = vadd.xlane.f32.xlu0 %v1329
        %v1331 = vpop.xlane.xlu0 %1330
        %v1332 = vrcp.pop 40.0
        %v1333 = vmul.f32 %v1331, %v1332
        %v1334 = vsub.f32 %v1326, %v1333
        %v1335 = vmul.f32 %v1334, %v1334
        %v1336 = vsel %vm603, %v1335, 0.0
        %1337 = vadd.xlane.f32.xlu0 %v1336
        %v1338 = vpop.xlane.xlu0 %1337
        %v1339 = vmul.f32 %v1338, %v1332
        %v1340 = vadd.f32 %v1339, 1e-05
        %v1341 = vrsqrt.pop %v1340
        %v1342 = vmul.f32 %v1334, %v1341
        %v1344 = vlaneseq
        %v1345 = vshrl.u32 %v1344, 7
        %v1346 = vsub.s32 0, %v1345
        %v1347 = vrot.slane %v1327, %v1346
        %v1349 = vmul.f32 %v1342, %v1347
        %v1351 = vlaneseq
        %v1352 = vshrl.u32 %v1351, 7
        %v1353 = vsub.s32 0, %v1352
        %v1354 = vrot.slane %v1328, %v1353
        %v1356 = vadd.f32 %v1349, %v1354
        %v1357 = vld [vmem:[%s7] sm:$0xff]
        %v1358 = vld [vmem:[%s7 + $0x8] sm:$0xff]
        %v1359 = vld [vmem:[%s7 + $0x10] sm:$0xff]
        %v1360 = vld [vmem:[%s7 + $0x18] sm:$0xff]
        %v1361 = vld [vmem:[%s7 + $0x20] sm:$0xff]
        %v1362 = vld [vmem:[%s7 + $0x28] sm:$0xff]
        %v1363 = vld [vmem:[%s7 + $0x30] sm:$0xff]
        %v1364 = vld [vmem:[%s7 + $0x38] sm:$0xff]
        %v1365 = vld [vmem:[%s7 + $0x40] sm:$0xff]
        %v1366 = vld [vmem:[%s7 + $0x48] sm:$0xff]
        %v1367 = vld [vmem:[%s7 + $0x50] sm:$0xff]
        %v1368 = vld [vmem:[%s7 + $0x58] sm:$0xff]
        %v1369 = vld [vmem:[%s7 + $0x60] sm:$0xff]
        %v1370 = vld [vmem:[%s7 + $0x68] sm:$0xff]
        %v1371 = vld [vmem:[%s7 + $0x70] sm:$0xff]
        %v1372 = vld [vmem:[%s7 + $0x78] sm:$0xff]
        %v1373 = vld [vmem:[%s7 + $0x80] sm:$0xff]
        %v1374 = vld [vmem:[%s7 + $0x88] sm:$0xff]
        %v1375 = vld [vmem:[%s7 + $0x90] sm:$0xff]
        %v1376 = vld [vmem:[%s7 + $0x98] sm:$0xff]
        %v1377 = vld [vmem:[%s7 + $0xa0] sm:$0xff]
        %v1378 = vld [vmem:[%s7 + $0xa8] sm:$0xff]
        %v1379 = vld [vmem:[%s7 + $0xb0] sm:$0xff]
        %v1380 = vld [vmem:[%s7 + $0xb8] sm:$0xff]
        %v1381 = vld [vmem:[%s7 + $0xc0] sm:$0xff]
        %v1382 = vld [vmem:[%s7 + $0xc8] sm:$0xff]
        %v1383 = vld [vmem:[%s7 + $0xd0] sm:$0xff]
        %v1384 = vld [vmem:[%s7 + $0xd8] sm:$0xff]
        %v1385 = vld [vmem:[%s7 + $0xe0] sm:$0xff]
        %v1386 = vld [vmem:[%s7 + $0xe8] sm:$0xff]
        %v1387 = vld [vmem:[%s7 + $0xf0] sm:$0xff]
        %v1388 = vld [vmem:[%s7 + $0xf8] sm:$0xff]
        %v1389 = vld [vmem:[%s7 + $0x100] sm:$0xff]
        %v1390 = vld [vmem:[%s7 + $0x108] sm:$0xff]
        %v1391 = vld [vmem:[%s7 + $0x110] sm:$0xff]
        %v1392 = vld [vmem:[%s7 + $0x118] sm:$0xff]
        %v1393 = vld [vmem:[%s7 + $0x120] sm:$0xff]
        %v1394 = vld [vmem:[%s7 + $0x128] sm:$0xff]
        %v1395 = vld [vmem:[%s7 + $0x130] sm:$0xff]
        %v1396 = vld [vmem:[%s7 + $0x138] sm:$0xff]
        %v1397 = vld [vmem:[%s7 + $0x140] sm:$0xff]
        %v1398 = vld [vmem:[%s7 + $0x148] sm:$0xff]
        %v1399 = vld [vmem:[%s7 + $0x150] sm:$0xff]
        %v1400 = vld [vmem:[%s7 + $0x158] sm:$0xff]
        %v1401 = vld [vmem:[%s7 + $0x160] sm:$0xff]
        %v1402 = vld [vmem:[%s7 + $0x168] sm:$0xff]
        %v1403 = vld [vmem:[%s7 + $0x170] sm:$0xff]
        %v1404 = vld [vmem:[%s7 + $0x178] sm:$0xff]
        %v1405 = vld [vmem:[%s7 + $0x180] sm:$0xff]
        %v1406 = vld [vmem:[%s7 + $0x188] sm:$0xff]
        %v1407 = vld [vmem:[%s7 + $0x190] sm:$0xff]
        %v1408 = vld [vmem:[%s7 + $0x198] sm:$0xff]
        %v1409 = vld [vmem:[%s7 + $0x1a0] sm:$0xff]
        %v1410 = vld [vmem:[%s7 + $0x1a8] sm:$0xff]
        %v1411 = vld [vmem:[%s7 + $0x1b0] sm:$0xff]
        %v1412 = vld [vmem:[%s7 + $0x1b8] sm:$0xff]
        %v1413 = vld [vmem:[%s7 + $0x1c0] sm:$0xff]
        %v1414 = vld [vmem:[%s7 + $0x1c8] sm:$0xff]
        %v1415 = vld [vmem:[%s7 + $0x1d0] sm:$0xff]
        %v1416 = vld [vmem:[%s7 + $0x1d8] sm:$0xff]
        %v1417 = vld [vmem:[%s7 + $0x1e0] sm:$0xff]
        %v1418 = vld [vmem:[%s7 + $0x1e8] sm:$0xff]
        %v1419 = vld [vmem:[%s7 + $0x1f0] sm:$0xff]
        %v1420 = vld [vmem:[%s7 + $0x1f8] sm:$0xff]
        %v1421 = vld [vmem:[%s7 + $0x200] sm:$0xff]
        %v1422 = vld [vmem:[%s7 + $0x208] sm:$0xff]
        %v1423 = vld [vmem:[%s7 + $0x210] sm:$0xff]
        %v1424 = vld [vmem:[%s7 + $0x218] sm:$0xff]
        %v1425 = vld [vmem:[%s7 + $0x220] sm:$0xff]
        %v1426 = vld [vmem:[%s7 + $0x228] sm:$0xff]
        %v1427 = vld [vmem:[%s7 + $0x230] sm:$0xff]
        %v1428 = vld [vmem:[%s7 + $0x238] sm:$0xff]
        %v1429 = vld [vmem:[%s7 + $0x240] sm:$0xff]
        %v1430 = vld [vmem:[%s7 + $0x248] sm:$0xff]
        %v1431 = vld [vmem:[%s7 + $0x250] sm:$0xff]
        %v1432 = vld [vmem:[%s7 + $0x258] sm:$0xff]
        %v1433 = vld [vmem:[%s7 + $0x260] sm:$0xff]
        %v1434 = vld [vmem:[%s7 + $0x268] sm:$0xff]
        %v1435 = vld [vmem:[%s7 + $0x270] sm:$0xff]
        %v1436 = vld [vmem:[%s7 + $0x278] sm:$0xff]
        %v1437 = vld [vmem:[%s8] sm:$0xff]
        %v1438 = vld [vmem:[%s8 + $0x8] sm:$0xff]
        %v1441 = vlaneseq
        %v1442 = vshrl.u32 %v1441, 7
        %v1443 = vsub.s32 0, %v1442
        %v1444 = vrot.slane %v1437, %v1443
        %v1445 = vlaneseq
        %v1446 = vshrl.u32 %v1445, 7
        %v1447 = vsub.s32 1, %v1446
        %v1448 = vrot.slane %v1437, %v1447
        %v1449 = vlaneseq
        %v1450 = vshrl.u32 %v1449, 7
        %v1451 = vsub.s32 2, %v1450
        %v1452 = vrot.slane %v1437, %v1451
        %v1453 = vlaneseq
        %v1454 = vshrl.u32 %v1453, 7
        %v1455 = vsub.s32 3, %v1454
        %v1456 = vrot.slane %v1437, %v1455
        %v1457 = vlaneseq
        %v1458 = vshrl.u32 %v1457, 7
        %v1459 = vsub.s32 4, %v1458
        %v1460 = vrot.slane %v1437, %v1459
        %v1461 = vlaneseq
        %v1462 = vshrl.u32 %v1461, 7
        %v1463 = vsub.s32 5, %v1462
        %v1464 = vrot.slane %v1437, %v1463
        %v1465 = vlaneseq
        %v1466 = vshrl.u32 %v1465, 7
        %v1467 = vsub.s32 6, %v1466
        %v1468 = vrot.slane %v1437, %v1467
        %v1469 = vlaneseq
        %v1470 = vshrl.u32 %v1469, 7
        %v1471 = vsub.s32 7, %v1470
        %v1472 = vrot.slane %v1437, %v1471
        %v1473 = vlaneseq
        %v1474 = vshrl.u32 %v1473, 7
        %v1475 = vsub.s32 0, %v1474
        %v1476 = vrot.slane %v1438, %v1475
        %v1477 = vlaneseq
        %v1478 = vshrl.u32 %v1477, 7
        %v1479 = vsub.s32 1, %v1478
        %v1480 = vrot.slane %v1438, %v1479
        %v1481 = vlaneseq
        %v1482 = vshrl.u32 %v1481, 7
        %v1483 = vsub.s32 2, %v1482
        %v1484 = vrot.slane %v1438, %v1483
        %v1485 = vlaneseq
        %v1486 = vshrl.u32 %v1485, 7
        %v1487 = vsub.s32 3, %v1486
        %v1488 = vrot.slane %v1438, %v1487
        %v1489 = vlaneseq
        %v1490 = vshrl.u32 %v1489, 7
        %v1491 = vsub.s32 4, %v1490
        %v1492 = vrot.slane %v1438, %v1491
        %v1493 = vlaneseq
        %v1494 = vshrl.u32 %v1493, 7
        %v1495 = vsub.s32 5, %v1494
        %v1496 = vrot.slane %v1438, %v1495
        %v1497 = vlaneseq
        %v1498 = vshrl.u32 %v1497, 7
        %v1499 = vsub.s32 6, %v1498
        %v1500 = vrot.slane %v1438, %v1499
        %v1501 = vlaneseq
        %v1502 = vshrl.u32 %v1501, 7
        %v1503 = vsub.s32 7, %v1502
        %v1504 = vrot.slane %v1438, %v1503
        %v1522 = vsel %vm603, %v1356, 0
        %1524 = vmatprep.subr.mxu0 %v1358
        %1525 = vmatpush1.msra.mxu0 %v1357
        %1526 = vmatprep.subr.mxu0 %v1374
        %1527 = vmatpush1.msra.mxu0 %v1373
        %1528 = vmatprep.subr.mxu0 %v1390
        %1529 = vmatpush1.msra.mxu0 %v1389
        %1530 = vmatprep.subr.mxu0 %v1406
        %1531 = vmatpush1.msra.mxu0 %v1405
        %1532 = vmatprep.subr.mxu0 %v1422
        %1533 = vmatpush1.msra.mxu0 %v1421
        %1534 = vmatprep.subr.mxu0 0.0
        %1535 = vmatpush1.msra.mxu0 0.0
        %1536 = vmatprep.subr.mxu0 0.0
        %1537 = vmatpush1.msra.mxu0 0.0
        %1538 = vmatprep.subr.mxu0 0.0
        %1539 = vmatpush1.msra.mxu0 0.0
        %1540 = vmatprep.subr.mxu0 0.0
        %1541 = vmatpush1.msra.mxu0 0.0
        %1542 = vmatprep.subr.mxu0 0.0
        %1543 = vmatpush1.msra.mxu0 0.0
        %1544 = vmatprep.subr.mxu0 0.0
        %1545 = vmatpush1.msra.mxu0 0.0
        %1546 = vmatprep.subr.mxu0 0.0
        %1547 = vmatpush1.msra.mxu0 0.0
        %1548 = vmatprep.subr.mxu0 0.0
        %1549 = vmatpush1.msra.mxu0 0.0
        %1550 = vmatprep.subr.mxu0 0.0
        %1551 = vmatpush1.msra.mxu0 0.0
        %1552 = vmatprep.subr.mxu0 0.0
        %1553 = vmatpush1.msra.mxu0 0.0
        %1554 = vmatprep.subr.mxu0 0.0
        %1555 = vmatpush1.msra.mxu0 0.0
        %1556 = vmatprep.subr.mxu0 0.0
        %1557 = vmatpush1.msra.mxu0 0.0
        %1558 = vmatprep.subr.mxu0 0.0
        %1559 = vmatpush1.msra.mxu0 0.0
        %1560 = vmatprep.subr.mxu0 0.0
        %1561 = vmatpush1.msra.mxu0 0.0
        %1562 = vmatprep.subr.mxu0 0.0
        %1563 = vmatpush1.msra.mxu0 0.0
        %1564 = vmatprep.subr.mxu0 0.0
        %1565 = vmatpush1.msra.mxu0 0.0
        %1566 = vmatprep.subr.mxu0 0.0
        %1567 = vmatpush1.msra.mxu0 0.0
        %1568 = vmatprep.subr.mxu0 0.0
        %1569 = vmatpush1.msra.mxu0 0.0
        %1570 = vmatprep.subr.mxu0 0.0
        %1571 = vmatpush1.msra.mxu0 0.0
        %1572 = vmatprep.subr.mxu0 0.0
        %1573 = vmatpush1.msra.mxu0 0.0
        %1574 = vmatprep.subr.mxu0 0.0
        %1575 = vmatpush1.msra.mxu0 0.0
        %1576 = vmatprep.subr.mxu0 0.0
        %1577 = vmatpush1.msra.mxu0 0.0
        %1578 = vmatprep.subr.mxu0 0.0
        %1579 = vmatpush1.msra.mxu0 0.0
        %1580 = vmatprep.subr.mxu0 0.0
        %1581 = vmatpush1.msra.mxu0 0.0
        %1582 = vmatprep.subr.mxu0 0.0
        %1583 = vmatpush1.msra.mxu0 0.0
        %1584 = vmatprep.subr.mxu0 0.0
        %1585 = vmatpush1.msra.mxu0 0.0
        %1586 = vmatprep.subr.mxu0 0.0
        %1587 = vmatpush1.msra.mxu0 0.0
        %1588 = vmatprep.mubr.f32.mxu0 0.0
        %1589 = vmatmul.mubr.f32.gmra.mrb[0].mxu0 %v1522
        %v1590 = vpop.f32.mrb[0].mxu0
        %v1591 = vadd.f32 %v1444, %v1590
        %v1592 = vpop.f32.mrb[0].mxu0
        %v1593 = vadd.f32 %v1448, %v1592
        %1594 = vdwg.mxu0
        %1595 = vmatprep.subr.mxu0 %v1360
        %1596 = vmatpush1.msra.mxu0 %v1359
        %1597 = vmatprep.subr.mxu0 %v1376
        %1598 = vmatpush1.msra.mxu0 %v1375
        %1599 = vmatprep.subr.mxu0 %v1392
        %1600 = vmatpush1.msra.mxu0 %v1391
        %1601 = vmatprep.subr.mxu0 %v1408
        %1602 = vmatpush1.msra.mxu0 %v1407
        %1603 = vmatprep.subr.mxu0 %v1424
        %1604 = vmatpush1.msra.mxu0 %v1423
        %1605 = vmatprep.subr.mxu0 0.0
        %1606 = vmatpush1.msra.mxu0 0.0
        %1607 = vmatprep.subr.mxu0 0.0
        %1608 = vmatpush1.msra.mxu0 0.0
        %1609 = vmatprep.subr.mxu0 0.0
        %1610 = vmatpush1.msra.mxu0 0.0
        %1611 = vmatprep.subr.mxu0 0.0
        %1612 = vmatpush1.msra.mxu0 0.0
        %1613 = vmatprep.subr.mxu0 0.0
        %1614 = vmatpush1.msra.mxu0 0.0
        %1615 = vmatprep.subr.mxu0 0.0
        %1616 = vmatpush1.msra.mxu0 0.0
        %1617 = vmatprep.subr.mxu0 0.0
        %1618 = vmatpush1.msra.mxu0 0.0
        %1619 = vmatprep.subr.mxu0 0.0
        %1620 = vmatpush1.msra.mxu0 0.0
        %1621 = vmatprep.subr.mxu0 0.0
        %1622 = vmatpush1.msra.mxu0 0.0
        %1623 = vmatprep.subr.mxu0 0.0
        %1624 = vmatpush1.msra.mxu0 0.0
        %1625 = vmatprep.subr.mxu0 0.0
        %1626 = vmatpush1.msra.mxu0 0.0
        %1627 = vmatprep.subr.mxu0 0.0
        %1628 = vmatpush1.msra.mxu0 0.0
        %1629 = vmatprep.subr.mxu0 0.0
        %1630 = vmatpush1.msra.mxu0 0.0
        %1631 = vmatprep.subr.mxu0 0.0
        %1632 = vmatpush1.msra.mxu0 0.0
        %1633 = vmatprep.subr.mxu0 0.0
        %1634 = vmatpush1.msra.mxu0 0.0
        %1635 = vmatprep.subr.mxu0 0.0
        %1636 = vmatpush1.msra.mxu0 0.0
        %1637 = vmatprep.subr.mxu0 0.0
        %1638 = vmatpush1.msra.mxu0 0.0
        %1639 = vmatprep.subr.mxu0 0.0
        %1640 = vmatpush1.msra.mxu0 0.0
        %1641 = vmatprep.subr.mxu0 0.0
        %1642 = vmatpush1.msra.mxu0 0.0
        %1643 = vmatprep.subr.mxu0 0.0
        %1644 = vmatpush1.msra.mxu0 0.0
        %1645 = vmatprep.subr.mxu0 0.0
        %1646 = vmatpush1.msra.mxu0 0.0
        %1647 = vmatprep.subr.mxu0 0.0
        %1648 = vmatpush1.msra.mxu0 0.0
        %1649 = vmatprep.subr.mxu0 0.0
        %1650 = vmatpush1.msra.mxu0 0.0
        %1651 = vmatprep.subr.mxu0 0.0
        %1652 = vmatpush1.msra.mxu0 0.0
        %1653 = vmatprep.subr.mxu0 0.0
        %1654 = vmatpush1.msra.mxu0 0.0
        %1655 = vmatprep.subr.mxu0 0.0
        %1656 = vmatpush1.msra.mxu0 0.0
        %1657 = vmatprep.subr.mxu0 0.0
        %1658 = vmatpush1.msra.mxu0 0.0
        %1659 = vmatprep.mubr.f32.mxu0 0.0
        %1660 = vmatmul.mubr.f32.gmra.mrb[0].mxu0 %v1522
        %v1661 = vpop.f32.mrb[0].mxu0
        %v1662 = vadd.f32 %v1452, %v1661
        %v1663 = vpop.f32.mrb[0].mxu0
        %v1664 = vadd.f32 %v1456, %v1663
        %1665 = vdwg.mxu0
        %1666 = vmatprep.subr.mxu0 %v1362
        %1667 = vmatpush1.msra.mxu0 %v1361
        %1668 = vmatprep.subr.mxu0 %v1378
        %1669 = vmatpush1.msra.mxu0 %v1377
        %1670 = vmatprep.subr.mxu0 %v1394
        %1671 = vmatpush1.msra.mxu0 %v1393
        %1672 = vmatprep.subr.mxu0 %v1410
        %1673 = vmatpush1.msra.mxu0 %v1409
        %1674 = vmatprep.subr.mxu0 %v1426
        %1675 = vmatpush1.msra.mxu0 %v1425
        %1676 = vmatprep.subr.mxu0 0.0
        %1677 = vmatpush1.msra.mxu0 0.0
        %1678 = vmatprep.subr.mxu0 0.0
        %1679 = vmatpush1.msra.mxu0 0.0
        %1680 = vmatprep.subr.mxu0 0.0
        %1681 = vmatpush1.msra.mxu0 0.0
        %1682 = vmatprep.subr.mxu0 0.0
        %1683 = vmatpush1.msra.mxu0 0.0
        %1684 = vmatprep.subr.mxu0 0.0
        %1685 = vmatpush1.msra.mxu0 0.0
        %1686 = vmatprep.subr.mxu0 0.0
        %1687 = vmatpush1.msra.mxu0 0.0
        %1688 = vmatprep.subr.mxu0 0.0
        %1689 = vmatpush1.msra.mxu0 0.0
        %1690 = vmatprep.subr.mxu0 0.0
        %1691 = vmatpush1.msra.mxu0 0.0
        %1692 = vmatprep.subr.mxu0 0.0
        %1693 = vmatpush1.msra.mxu0 0.0
        %1694 = vmatprep.subr.mxu0 0.0
        %1695 = vmatpush1.msra.mxu0 0.0
        %1696 = vmatprep.subr.mxu0 0.0
        %1697 = vmatpush1.msra.mxu0 0.0
        %1698 = vmatprep.subr.mxu0 0.0
        %1699 = vmatpush1.msra.mxu0 0.0
        %1700 = vmatprep.subr.mxu0 0.0
        %1701 = vmatpush1.msra.mxu0 0.0
        %1702 = vmatprep.subr.mxu0 0.0
        %1703 = vmatpush1.msra.mxu0 0.0
        %1704 = vmatprep.subr.mxu0 0.0
        %1705 = vmatpush1.msra.mxu0 0.0
        %1706 = vmatprep.subr.mxu0 0.0
        %1707 = vmatpush1.msra.mxu0 0.0
        %1708 = vmatprep.subr.mxu0 0.0
        %1709 = vmatpush1.msra.mxu0 0.0
        %1710 = vmatprep.subr.mxu0 0.0
        %1711 = vmatpush1.msra.mxu0 0.0
        %1712 = vmatprep.subr.mxu0 0.0
        %1713 = vmatpush1.msra.mxu0 0.0
        %1714 = vmatprep.subr.mxu0 0.0
        %1715 = vmatpush1.msra.mxu0 0.0
        %1716 = vmatprep.subr.mxu0 0.0
        %1717 = vmatpush1.msra.mxu0 0.0
        %1718 = vmatprep.subr.mxu0 0.0
        %1719 = vmatpush1.msra.mxu0 0.0
        %1720 = vmatprep.subr.mxu0 0.0
        %1721 = vmatpush1.msra.mxu0 0.0
        %1722 = vmatprep.subr.mxu0 0.0
        %1723 = vmatpush1.msra.mxu0 0.0
        %1724 = vmatprep.subr.mxu0 0.0
        %1725 = vmatpush1.msra.mxu0 0.0
        %1726 = vmatprep.subr.mxu0 0.0
        %1727 = vmatpush1.msra.mxu0 0.0
        %1728 = vmatprep.subr.mxu0 0.0
        %1729 = vmatpush1.msra.mxu0 0.0
        %1730 = vmatprep.mubr.f32.mxu0 0.0
        %1731 = vmatmul.mubr.f32.gmra.mrb[0].mxu0 %v1522
        %v1732 = vpop.f32.mrb[0].mxu0
        %v1733 = vadd.f32 %v1460, %v1732
        %v1734 = vpop.f32.mrb[0].mxu0
        %v1735 = vadd.f32 %v1464, %v1734
        %1736 = vdwg.mxu0
        %1737 = vmatprep.subr.mxu0 %v1364
        %1738 = vmatpush1.msra.mxu0 %v1363
        %1739 = vmatprep.subr.mxu0 %v1380
        %1740 = vmatpush1.msra.mxu0 %v1379
        %1741 = vmatprep.subr.mxu0 %v1396
        %1742 = vmatpush1.msra.mxu0 %v1395
        %1743 = vmatprep.subr.mxu0 %v1412
        %1744 = vmatpush1.msra.mxu0 %v1411
        %1745 = vmatprep.subr.mxu0 %v1428
        %1746 = vmatpush1.msra.mxu0 %v1427
        %1747 = vmatprep.subr.mxu0 0.0
        %1748 = vmatpush1.msra.mxu0 0.0
        %1749 = vmatprep.subr.mxu0 0.0
        %1750 = vmatpush1.msra.mxu0 0.0
        %1751 = vmatprep.subr.mxu0 0.0
        %1752 = vmatpush1.msra.mxu0 0.0
        %1753 = vmatprep.subr.mxu0 0.0
        %1754 = vmatpush1.msra.mxu0 0.0
        %1755 = vmatprep.subr.mxu0 0.0
        %1756 = vmatpush1.msra.mxu0 0.0
        %1757 = vmatprep.subr.mxu0 0.0
        %1758 = vmatpush1.msra.mxu0 0.0
        %1759 = vmatprep.subr.mxu0 0.0
        %1760 = vmatpush1.msra.mxu0 0.0
        %1761 = vmatprep.subr.mxu0 0.0
        %1762 = vmatpush1.msra.mxu0 0.0
        %1763 = vmatprep.subr.mxu0 0.0
        %1764 = vmatpush1.msra.mxu0 0.0
        %1765 = vmatprep.subr.mxu0 0.0
        %1766 = vmatpush1.msra.mxu0 0.0
        %1767 = vmatprep.subr.mxu0 0.0
        %1768 = vmatpush1.msra.mxu0 0.0
        %1769 = vmatprep.subr.mxu0 0.0
        %1770 = vmatpush1.msra.mxu0 0.0
        %1771 = vmatprep.subr.mxu0 0.0
        %1772 = vmatpush1.msra.mxu0 0.0
        %1773 = vmatprep.subr.mxu0 0.0
        %1774 = vmatpush1.msra.mxu0 0.0
        %1775 = vmatprep.subr.mxu0 0.0
        %1776 = vmatpush1.msra.mxu0 0.0
        %1777 = vmatprep.subr.mxu0 0.0
        %1778 = vmatpush1.msra.mxu0 0.0
        %1779 = vmatprep.subr.mxu0 0.0
        %1780 = vmatpush1.msra.mxu0 0.0
        %1781 = vmatprep.subr.mxu0 0.0
        %1782 = vmatpush1.msra.mxu0 0.0
        %1783 = vmatprep.subr.mxu0 0.0
        %1784 = vmatpush1.msra.mxu0 0.0
        %1785 = vmatprep.subr.mxu0 0.0
        %1786 = vmatpush1.msra.mxu0 0.0
        %1787 = vmatprep.subr.mxu0 0.0
        %1788 = vmatpush1.msra.mxu0 0.0
        %1789 = vmatprep.subr.mxu0 0.0
        %1790 = vmatpush1.msra.mxu0 0.0
        %1791 = vmatprep.subr.mxu0 0.0
        %1792 = vmatpush1.msra.mxu0 0.0
        %1793 = vmatprep.subr.mxu0 0.0
        %1794 = vmatpush1.msra.mxu0 0.0
        %1795 = vmatprep.subr.mxu0 0.0
        %1796 = vmatpush1.msra.mxu0 0.0
        %1797 = vmatprep.subr.mxu0 0.0
        %1798 = vmatpush1.msra.mxu0 0.0
        %1799 = vmatprep.subr.mxu0 0.0
        %1800 = vmatpush1.msra.mxu0 0.0
        %1801 = vmatprep.mubr.f32.mxu0 0.0
        %1802 = vmatmul.mubr.f32.gmra.mrb[0].mxu0 %v1522
        %v1803 = vpop.f32.mrb[0].mxu0
        %v1804 = vadd.f32 %v1468, %v1803
        %v1805 = vpop.f32.mrb[0].mxu0
        %v1806 = vadd.f32 %v1472, %v1805
        %1807 = vdwg.mxu0
        %1808 = vmatprep.subr.mxu0 %v1366
        %1809 = vmatpush1.msra.mxu0 %v1365
        %1810 = vmatprep.subr.mxu0 %v1382
        %1811 = vmatpush1.msra.mxu0 %v1381
        %1812 = vmatprep.subr.mxu0 %v1398
        %1813 = vmatpush1.msra.mxu0 %v1397
        %1814 = vmatprep.subr.mxu0 %v1414
        %1815 = vmatpush1.msra.mxu0 %v1413
        %1816 = vmatprep.subr.mxu0 %v1430
        %1817 = vmatpush1.msra.mxu0 %v1429
        %1818 = vmatprep.subr.mxu0 0.0
        %1819 = vmatpush1.msra.mxu0 0.0
        %1820 = vmatprep.subr.mxu0 0.0
        %1821 = vmatpush1.msra.mxu0 0.0
        %1822 = vmatprep.subr.mxu0 0.0
        %1823 = vmatpush1.msra.mxu0 0.0
        %1824 = vmatprep.subr.mxu0 0.0
        %1825 = vmatpush1.msra.mxu0 0.0
        %1826 = vmatprep.subr.mxu0 0.0
        %1827 = vmatpush1.msra.mxu0 0.0
        %1828 = vmatprep.subr.mxu0 0.0
        %1829 = vmatpush1.msra.mxu0 0.0
        %1830 = vmatprep.subr.mxu0 0.0
        %1831 = vmatpush1.msra.mxu0 0.0
        %1832 = vmatprep.subr.mxu0 0.0
        %1833 = vmatpush1.msra.mxu0 0.0
        %1834 = vmatprep.subr.mxu0 0.0
        %1835 = vmatpush1.msra.mxu0 0.0
        %1836 = vmatprep.subr.mxu0 0.0
        %1837 = vmatpush1.msra.mxu0 0.0
        %1838 = vmatprep.subr.mxu0 0.0
        %1839 = vmatpush1.msra.mxu0 0.0
        %1840 = vmatprep.subr.mxu0 0.0
        %1841 = vmatpush1.msra.mxu0 0.0
        %1842 = vmatprep.subr.mxu0 0.0
        %1843 = vmatpush1.msra.mxu0 0.0
        %1844 = vmatprep.subr.mxu0 0.0
        %1845 = vmatpush1.msra.mxu0 0.0
        %1846 = vmatprep.subr.mxu0 0.0
        %1847 = vmatpush1.msra.mxu0 0.0
        %1848 = vmatprep.subr.mxu0 0.0
        %1849 = vmatpush1.msra.mxu0 0.0
        %1850 = vmatprep.subr.mxu0 0.0
        %1851 = vmatpush1.msra.mxu0 0.0
        %1852 = vmatprep.subr.mxu0 0.0
        %1853 = vmatpush1.msra.mxu0 0.0
        %1854 = vmatprep.subr.mxu0 0.0
        %1855 = vmatpush1.msra.mxu0 0.0
        %1856 = vmatprep.subr.mxu0 0.0
        %1857 = vmatpush1.msra.mxu0 0.0
        %1858 = vmatprep.subr.mxu0 0.0
        %1859 = vmatpush1.msra.mxu0 0.0
        %1860 = vmatprep.subr.mxu0 0.0
        %1861 = vmatpush1.msra.mxu0 0.0
        %1862 = vmatprep.subr.mxu0 0.0
        %1863 = vmatpush1.msra.mxu0 0.0
        %1864 = vmatprep.subr.mxu0 0.0
        %1865 = vmatpush1.msra.mxu0 0.0
        %1866 = vmatprep.subr.mxu0 0.0
        %1867 = vmatpush1.msra.mxu0 0.0
        %1868 = vmatprep.subr.mxu0 0.0
        %1869 = vmatpush1.msra.mxu0 0.0
        %1870 = vmatprep.subr.mxu0 0.0
        %1871 = vmatpush1.msra.mxu0 0.0
        %1872 = vmatprep.mubr.f32.mxu0 0.0
        %1873 = vmatmul.mubr.f32.gmra.mrb[0].mxu0 %v1522
        %v1874 = vpop.f32.mrb[0].mxu0
        %v1875 = vadd.f32 %v1476, %v1874
        %v1876 = vpop.f32.mrb[0].mxu0
        %v1877 = vadd.f32 %v1480, %v1876
        %1878 = vdwg.mxu0
        %1879 = vmatprep.subr.mxu0 %v1368
        %1880 = vmatpush1.msra.mxu0 %v1367
        %1881 = vmatprep.subr.mxu0 %v1384
        %1882 = vmatpush1.msra.mxu0 %v1383
        %1883 = vmatprep.subr.mxu0 %v1400
        %1884 = vmatpush1.msra.mxu0 %v1399
        %1885 = vmatprep.subr.mxu0 %v1416
        %1886 = vmatpush1.msra.mxu0 %v1415
        %1887 = vmatprep.subr.mxu0 %v1432
        %1888 = vmatpush1.msra.mxu0 %v1431
        %1889 = vmatprep.subr.mxu0 0.0
        %1890 = vmatpush1.msra.mxu0 0.0
        %1891 = vmatprep.subr.mxu0 0.0
        %1892 = vmatpush1.msra.mxu0 0.0
        %1893 = vmatprep.subr.mxu0 0.0
        %1894 = vmatpush1.msra.mxu0 0.0
        %1895 = vmatprep.subr.mxu0 0.0
        %1896 = vmatpush1.msra.mxu0 0.0
        %1897 = vmatprep.subr.mxu0 0.0
        %1898 = vmatpush1.msra.mxu0 0.0
        %1899 = vmatprep.subr.mxu0 0.0
        %1900 = vmatpush1.msra.mxu0 0.0
        %1901 = vmatprep.subr.mxu0 0.0
        %1902 = vmatpush1.msra.mxu0 0.0
        %1903 = vmatprep.subr.mxu0 0.0
        %1904 = vmatpush1.msra.mxu0 0.0
        %1905 = vmatprep.subr.mxu0 0.0
        %1906 = vmatpush1.msra.mxu0 0.0
        %1907 = vmatprep.subr.mxu0 0.0
        %1908 = vmatpush1.msra.mxu0 0.0
        %1909 = vmatprep.subr.mxu0 0.0
        %1910 = vmatpush1.msra.mxu0 0.0
        %1911 = vmatprep.subr.mxu0 0.0
        %1912 = vmatpush1.msra.mxu0 0.0
        %1913 = vmatprep.subr.mxu0 0.0
        %1914 = vmatpush1.msra.mxu0 0.0
        %1915 = vmatprep.subr.mxu0 0.0
        %1916 = vmatpush1.msra.mxu0 0.0
        %1917 = vmatprep.subr.mxu0 0.0
        %1918 = vmatpush1.msra.mxu0 0.0
        %1919 = vmatprep.subr.mxu0 0.0
        %1920 = vmatpush1.msra.mxu0 0.0
        %1921 = vmatprep.subr.mxu0 0.0
        %1922 = vmatpush1.msra.mxu0 0.0
        %1923 = vmatprep.subr.mxu0 0.0
        %1924 = vmatpush1.msra.mxu0 0.0
        %1925 = vmatprep.subr.mxu0 0.0
        %1926 = vmatpush1.msra.mxu0 0.0
        %1927 = vmatprep.subr.mxu0 0.0
        %1928 = vmatpush1.msra.mxu0 0.0
        %1929 = vmatprep.subr.mxu0 0.0
        %1930 = vmatpush1.msra.mxu0 0.0
        %1931 = vmatprep.subr.mxu0 0.0
        %1932 = vmatpush1.msra.mxu0 0.0
        %1933 = vmatprep.subr.mxu0 0.0
        %1934 = vmatpush1.msra.mxu0 0.0
        %1935 = vmatprep.subr.mxu0 0.0
        %1936 = vmatpush1.msra.mxu0 0.0
        %1937 = vmatprep.subr.mxu0 0.0
        %1938 = vmatpush1.msra.mxu0 0.0
        %1939 = vmatprep.subr.mxu0 0.0
        %1940 = vmatpush1.msra.mxu0 0.0
        %1941 = vmatprep.subr.mxu0 0.0
        %1942 = vmatpush1.msra.mxu0 0.0
        %1943 = vmatprep.mubr.f32.mxu0 0.0
        %1944 = vmatmul.mubr.f32.gmra.mrb[0].mxu0 %v1522
        %v1945 = vpop.f32.mrb[0].mxu0
        %v1946 = vadd.f32 %v1484, %v1945
        %v1947 = vpop.f32.mrb[0].mxu0
        %v1948 = vadd.f32 %v1488, %v1947
        %1949 = vdwg.mxu0
        %1950 = vmatprep.subr.mxu0 %v1370
        %1951 = vmatpush1.msra.mxu0 %v1369
        %1952 = vmatprep.subr.mxu0 %v1386
        %1953 = vmatpush1.msra.mxu0 %v1385
        %1954 = vmatprep.subr.mxu0 %v1402
        %1955 = vmatpush1.msra.mxu0 %v1401
        %1956 = vmatprep.subr.mxu0 %v1418
        %1957 = vmatpush1.msra.mxu0 %v1417
        %1958 = vmatprep.subr.mxu0 %v1434
        %1959 = vmatpush1.msra.mxu0 %v1433
        %1960 = vmatprep.subr.mxu0 0.0
        %1961 = vmatpush1.msra.mxu0 0.0
        %1962 = vmatprep.subr.mxu0 0.0
        %1963 = vmatpush1.msra.mxu0 0.0
        %1964 = vmatprep.subr.mxu0 0.0
        %1965 = vmatpush1.msra.mxu0 0.0
        %1966 = vmatprep.subr.mxu0 0.0
        %1967 = vmatpush1.msra.mxu0 0.0
        %1968 = vmatprep.subr.mxu0 0.0
        %1969 = vmatpush1.msra.mxu0 0.0
        %1970 = vmatprep.subr.mxu0 0.0
        %1971 = vmatpush1.msra.mxu0 0.0
        %1972 = vmatprep.subr.mxu0 0.0
        %1973 = vmatpush1.msra.mxu0 0.0
        %1974 = vmatprep.subr.mxu0 0.0
        %1975 = vmatpush1.msra.mxu0 0.0
        %1976 = vmatprep.subr.mxu0 0.0
        %1977 = vmatpush1.msra.mxu0 0.0
        %1978 = vmatprep.subr.mxu0 0.0
        %1979 = vmatpush1.msra.mxu0 0.0
        %1980 = vmatprep.subr.mxu0 0.0
        %1981 = vmatpush1.msra.mxu0 0.0
        %1982 = vmatprep.subr.mxu0 0.0
        %1983 = vmatpush1.msra.mxu0 0.0
        %1984 = vmatprep.subr.mxu0 0.0
        %1985 = vmatpush1.msra.mxu0 0.0
        %1986 = vmatprep.subr.mxu0 0.0
        %1987 = vmatpush1.msra.mxu0 0.0
        %1988 = vmatprep.subr.mxu0 0.0
        %1989 = vmatpush1.msra.mxu0 0.0
        %1990 = vmatprep.subr.mxu0 0.0
        %1991 = vmatpush1.msra.mxu0 0.0
        %1992 = vmatprep.subr.mxu0 0.0
        %1993 = vmatpush1.msra.mxu0 0.0
        %1994 = vmatprep.subr.mxu0 0.0
        %1995 = vmatpush1.msra.mxu0 0.0
        %1996 = vmatprep.subr.mxu0 0.0
        %1997 = vmatpush1.msra.mxu0 0.0
        %1998 = vmatprep.subr.mxu0 0.0
        %1999 = vmatpush1.msra.mxu0 0.0
        %2000 = vmatprep.subr.mxu0 0.0
        %2001 = vmatpush1.msra.mxu0 0.0
        %2002 = vmatprep.subr.mxu0 0.0
        %2003 = vmatpush1.msra.mxu0 0.0
        %2004 = vmatprep.subr.mxu0 0.0
        %2005 = vmatpush1.msra.mxu0 0.0
        %2006 = vmatprep.subr.mxu0 0.0
        %2007 = vmatpush1.msra.mxu0 0.0
        %2008 = vmatprep.subr.mxu0 0.0
        %2009 = vmatpush1.msra.mxu0 0.0
        %2010 = vmatprep.subr.mxu0 0.0
        %2011 = vmatpush1.msra.mxu0 0.0
        %2012 = vmatprep.subr.mxu0 0.0
        %2013 = vmatpush1.msra.mxu0 0.0
        %2014 = vmatprep.mubr.f32.mxu0 0.0
        %2015 = vmatmul.mubr.f32.gmra.mrb[0].mxu0 %v1522
        %v2016 = vpop.f32.mrb[0].mxu0
        %v2017 = vadd.f32 %v1492, %v2016
        %v2018 = vpop.f32.mrb[0].mxu0
        %v2019 = vadd.f32 %v1496, %v2018
        %2020 = vdwg.mxu0
        %2021 = vmatprep.subr.mxu0 %v1372
        %2022 = vmatpush1.msra.mxu0 %v1371
        %2023 = vmatprep.subr.mxu0 %v1388
        %2024 = vmatpush1.msra.mxu0 %v1387
        %2025 = vmatprep.subr.mxu0 %v1404
        %2026 = vmatpush1.msra.mxu0 %v1403
        %2027 = vmatprep.subr.mxu0 %v1420
        %2028 = vmatpush1.msra.mxu0 %v1419
        %2029 = vmatprep.subr.mxu0 %v1436
        %2030 = vmatpush1.msra.mxu0 %v1435
        %2031 = vmatprep.subr.mxu0 0.0
        %2032 = vmatpush1.msra.mxu0 0.0
        %2033 = vmatprep.subr.mxu0 0.0
        %2034 = vmatpush1.msra.mxu0 0.0
        %2035 = vmatprep.subr.mxu0 0.0
        %2036 = vmatpush1.msra.mxu0 0.0
        %2037 = vmatprep.subr.mxu0 0.0
        %2038 = vmatpush1.msra.mxu0 0.0
        %2039 = vmatprep.subr.mxu0 0.0
        %2040 = vmatpush1.msra.mxu0 0.0
        %2041 = vmatprep.subr.mxu0 0.0
        %2042 = vmatpush1.msra.mxu0 0.0
        %2043 = vmatprep.subr.mxu0 0.0
        %2044 = vmatpush1.msra.mxu0 0.0
        %2045 = vmatprep.subr.mxu0 0.0
        %2046 = vmatpush1.msra.mxu0 0.0
        %2047 = vmatprep.subr.mxu0 0.0
        %2048 = vmatpush1.msra.mxu0 0.0
        %2049 = vmatprep.subr.mxu0 0.0
        %2050 = vmatpush1.msra.mxu0 0.0
        %2051 = vmatprep.subr.mxu0 0.0
        %2052 = vmatpush1.msra.mxu0 0.0
        %2053 = vmatprep.subr.mxu0 0.0
        %2054 = vmatpush1.msra.mxu0 0.0
        %2055 = vmatprep.subr.mxu0 0.0
        %2056 = vmatpush1.msra.mxu0 0.0
        %2057 = vmatprep.subr.mxu0 0.0
        %2058 = vmatpush1.msra.mxu0 0.0
        %2059 = vmatprep.subr.mxu0 0.0
        %2060 = vmatpush1.msra.mxu0 0.0
        %2061 = vmatprep.subr.mxu0 0.0
        %2062 = vmatpush1.msra.mxu0 0.0
        %2063 = vmatprep.subr.mxu0 0.0
        %2064 = vmatpush1.msra.mxu0 0.0
        %2065 = vmatprep.subr.mxu0 0.0
        %2066 = vmatpush1.msra.mxu0 0.0
        %2067 = vmatprep.subr.mxu0 0.0
        %2068 = vmatpush1.msra.mxu0 0.0
        %2069 = vmatprep.subr.mxu0 0.0
        %2070 = vmatpush1.msra.mxu0 0.0
        %2071 = vmatprep.subr.mxu0 0.0
        %2072 = vmatpush1.msra.mxu0 0.0
        %2073 = vmatprep.subr.mxu0 0.0
        %2074 = vmatpush1.msra.mxu0 0.0
        %2075 = vmatprep.subr.mxu0 0.0
        %2076 = vmatpush1.msra.mxu0 0.0
        %2077 = vmatprep.subr.mxu0 0.0
        %2078 = vmatpush1.msra.mxu0 0.0
        %2079 = vmatprep.subr.mxu0 0.0
        %2080 = vmatpush1.msra.mxu0 0.0
        %2081 = vmatprep.subr.mxu0 0.0
        %2082 = vmatpush1.msra.mxu0 0.0
        %2083 = vmatprep.subr.mxu0 0.0
        %2084 = vmatpush1.msra.mxu0 0.0
        %2085 = vmatprep.mubr.f32.mxu0 0.0
        %2086 = vmatmul.mubr.f32.gmra.mrb[0].mxu0 %v1522
        %v2087 = vpop.f32.mrb[0].mxu0
        %v2088 = vadd.f32 %v1500, %v2087
        %v2089 = vpop.f32.mrb[0].mxu0
        %v2090 = vadd.f32 %v1504, %v2089
        %2091 = vdwg.mxu0
        %v2092 = vmax.f32 %v1591, 0.0
        %v2093 = vmax.f32 %v1593, 0.0
        %v2094 = vmax.f32 %v1662, 0.0
        %v2095 = vmax.f32 %v1664, 0.0
        %v2096 = vmax.f32 %v1733, 0.0
        %v2097 = vmax.f32 %v1735, 0.0
        %v2098 = vmax.f32 %v1804, 0.0
        %v2099 = vmax.f32 %v1806, 0.0
        %v2100 = vmax.f32 %v1875, 0.0
        %v2101 = vmax.f32 %v1877, 0.0
        %v2102 = vmax.f32 %v1946, 0.0
        %v2103 = vmax.f32 %v1948, 0.0
        %v2104 = vmax.f32 %v2017, 0.0
        %v2105 = vmax.f32 %v2019, 0.0
        %v2106 = vmax.f32 %v2088, 0.0
        %v2107 = vmax.f32 %v2090, 0.0
        %v2108 = vld [vmem:[%s9] sm:$0xff]
        %v2109 = vld [vmem:[%s9 + $0x8] sm:$0xff]
        %v2110 = vld [vmem:[%s9 + $0x10] sm:$0xff]
        %v2111 = vld [vmem:[%s9 + $0x18] sm:$0xff]
        %v2112 = vld [vmem:[%s9 + $0x20] sm:$0xff]
        %v2113 = vld [vmem:[%s9 + $0x28] sm:$0xff]
        %v2114 = vld [vmem:[%s9 + $0x30] sm:$0xff]
        %v2115 = vld [vmem:[%s9 + $0x38] sm:$0xff]
        %v2116 = vld [vmem:[%s9 + $0x40] sm:$0xff]
        %v2117 = vld [vmem:[%s9 + $0x48] sm:$0xff]
        %v2118 = vld [vmem:[%s9 + $0x50] sm:$0xff]
        %v2119 = vld [vmem:[%s9 + $0x58] sm:$0xff]
        %v2120 = vld [vmem:[%s9 + $0x60] sm:$0xff]
        %v2121 = vld [vmem:[%s9 + $0x68] sm:$0xff]
        %v2122 = vld [vmem:[%s9 + $0x70] sm:$0xff]
        %v2123 = vld [vmem:[%s9 + $0x78] sm:$0xff]
        %v2124 = vld [vmem:[%s9 + $0x80] sm:$0xff]
        %v2125 = vld [vmem:[%s9 + $0x88] sm:$0xff]
        %v2126 = vld [vmem:[%s9 + $0x90] sm:$0xff]
        %v2127 = vld [vmem:[%s9 + $0x98] sm:$0xff]
        %v2128 = vld [vmem:[%s9 + $0xa0] sm:$0xff]
        %v2129 = vld [vmem:[%s9 + $0xa8] sm:$0xff]
        %v2130 = vld [vmem:[%s9 + $0xb0] sm:$0xff]
        %v2131 = vld [vmem:[%s9 + $0xb8] sm:$0xff]
        %v2132 = vld [vmem:[%s9 + $0xc0] sm:$0xff]
        %v2133 = vld [vmem:[%s9 + $0xc8] sm:$0xff]
        %v2134 = vld [vmem:[%s9 + $0xd0] sm:$0xff]
        %v2135 = vld [vmem:[%s9 + $0xd8] sm:$0xff]
        %v2136 = vld [vmem:[%s9 + $0xe0] sm:$0xff]
        %v2137 = vld [vmem:[%s9 + $0xe8] sm:$0xff]
        %v2138 = vld [vmem:[%s9 + $0xf0] sm:$0xff]
        %v2139 = vld [vmem:[%s9 + $0xf8] sm:$0xff]
        %v2140 = vld [vmem:[%s9 + $0x100] sm:$0xff]
        %v2141 = vld [vmem:[%s9 + $0x108] sm:$0xff]
        %v2142 = vld [vmem:[%s9 + $0x110] sm:$0xff]
        %v2143 = vld [vmem:[%s9 + $0x118] sm:$0xff]
        %v2144 = vld [vmem:[%s9 + $0x120] sm:$0xff]
        %v2145 = vld [vmem:[%s9 + $0x128] sm:$0xff]
        %v2146 = vld [vmem:[%s9 + $0x130] sm:$0xff]
        %v2147 = vld [vmem:[%s9 + $0x138] sm:$0xff]
        %v2148 = vld [vmem:[%s9 + $0x140] sm:$0xff]
        %v2149 = vld [vmem:[%s9 + $0x148] sm:$0xff]
        %v2150 = vld [vmem:[%s9 + $0x150] sm:$0xff]
        %v2151 = vld [vmem:[%s9 + $0x158] sm:$0xff]
        %v2152 = vld [vmem:[%s9 + $0x160] sm:$0xff]
        %v2153 = vld [vmem:[%s9 + $0x168] sm:$0xff]
        %v2154 = vld [vmem:[%s9 + $0x170] sm:$0xff]
        %v2155 = vld [vmem:[%s9 + $0x178] sm:$0xff]
        %v2156 = vld [vmem:[%s9 + $0x180] sm:$0xff]
        %v2157 = vld [vmem:[%s9 + $0x188] sm:$0xff]
        %v2158 = vld [vmem:[%s9 + $0x190] sm:$0xff]
        %v2159 = vld [vmem:[%s9 + $0x198] sm:$0xff]
        %v2160 = vld [vmem:[%s9 + $0x1a0] sm:$0xff]
        %v2161 = vld [vmem:[%s9 + $0x1a8] sm:$0xff]
        %v2162 = vld [vmem:[%s9 + $0x1b0] sm:$0xff]
        %v2163 = vld [vmem:[%s9 + $0x1b8] sm:$0xff]
        %v2164 = vld [vmem:[%s9 + $0x1c0] sm:$0xff]
        %v2165 = vld [vmem:[%s9 + $0x1c8] sm:$0xff]
        %v2166 = vld [vmem:[%s9 + $0x1d0] sm:$0xff]
        %v2167 = vld [vmem:[%s9 + $0x1d8] sm:$0xff]
        %v2168 = vld [vmem:[%s9 + $0x1e0] sm:$0xff]
        %v2169 = vld [vmem:[%s9 + $0x1e8] sm:$0xff]
        %v2170 = vld [vmem:[%s9 + $0x1f0] sm:$0xff]
        %v2171 = vld [vmem:[%s9 + $0x1f8] sm:$0xff]
        %v2172 = vld [vmem:[%s9 + $0x200] sm:$0xff]
        %v2173 = vld [vmem:[%s9 + $0x208] sm:$0xff]
        %v2174 = vld [vmem:[%s9 + $0x210] sm:$0xff]
        %v2175 = vld [vmem:[%s9 + $0x218] sm:$0xff]
        %v2176 = vld [vmem:[%s9 + $0x220] sm:$0xff]
        %v2177 = vld [vmem:[%s9 + $0x228] sm:$0xff]
        %v2178 = vld [vmem:[%s9 + $0x230] sm:$0xff]
        %v2179 = vld [vmem:[%s9 + $0x238] sm:$0xff]
        %v2180 = vld [vmem:[%s9 + $0x240] sm:$0xff]
        %v2181 = vld [vmem:[%s9 + $0x248] sm:$0xff]
        %v2182 = vld [vmem:[%s9 + $0x250] sm:$0xff]
        %v2183 = vld [vmem:[%s9 + $0x258] sm:$0xff]
        %v2184 = vld [vmem:[%s9 + $0x260] sm:$0xff]
        %v2185 = vld [vmem:[%s9 + $0x268] sm:$0xff]
        %v2186 = vld [vmem:[%s9 + $0x270] sm:$0xff]
        %v2187 = vld [vmem:[%s9 + $0x278] sm:$0xff]
        %v2188 = vld [vmem:[%s9 + $0x280] sm:$0xff]
        %v2189 = vld [vmem:[%s9 + $0x288] sm:$0xff]
        %v2190 = vld [vmem:[%s9 + $0x290] sm:$0xff]
        %v2191 = vld [vmem:[%s9 + $0x298] sm:$0xff]
        %v2192 = vld [vmem:[%s9 + $0x2a0] sm:$0xff]
        %v2193 = vld [vmem:[%s9 + $0x2a8] sm:$0xff]
        %v2194 = vld [vmem:[%s9 + $0x2b0] sm:$0xff]
        %v2195 = vld [vmem:[%s9 + $0x2b8] sm:$0xff]
        %v2196 = vld [vmem:[%s9 + $0x2c0] sm:$0xff]
        %v2197 = vld [vmem:[%s9 + $0x2c8] sm:$0xff]
        %v2198 = vld [vmem:[%s9 + $0x2d0] sm:$0xff]
        %v2199 = vld [vmem:[%s9 + $0x2d8] sm:$0xff]
        %v2200 = vld [vmem:[%s9 + $0x2e0] sm:$0xff]
        %v2201 = vld [vmem:[%s9 + $0x2e8] sm:$0xff]
        %v2202 = vld [vmem:[%s9 + $0x2f0] sm:$0xff]
        %v2203 = vld [vmem:[%s9 + $0x2f8] sm:$0xff]
        %v2204 = vld [vmem:[%s9 + $0x300] sm:$0xff]
        %v2205 = vld [vmem:[%s9 + $0x308] sm:$0xff]
        %v2206 = vld [vmem:[%s9 + $0x310] sm:$0xff]
        %v2207 = vld [vmem:[%s9 + $0x318] sm:$0xff]
        %v2208 = vld [vmem:[%s9 + $0x320] sm:$0xff]
        %v2209 = vld [vmem:[%s9 + $0x328] sm:$0xff]
        %v2210 = vld [vmem:[%s9 + $0x330] sm:$0xff]
        %v2211 = vld [vmem:[%s9 + $0x338] sm:$0xff]
        %v2212 = vld [vmem:[%s9 + $0x340] sm:$0xff]
        %v2213 = vld [vmem:[%s9 + $0x348] sm:$0xff]
        %v2214 = vld [vmem:[%s9 + $0x350] sm:$0xff]
        %v2215 = vld [vmem:[%s9 + $0x358] sm:$0xff]
        %v2216 = vld [vmem:[%s9 + $0x360] sm:$0xff]
        %v2217 = vld [vmem:[%s9 + $0x368] sm:$0xff]
        %v2218 = vld [vmem:[%s9 + $0x370] sm:$0xff]
        %v2219 = vld [vmem:[%s9 + $0x378] sm:$0xff]
        %v2220 = vld [vmem:[%s9 + $0x380] sm:$0xff]
        %v2221 = vld [vmem:[%s9 + $0x388] sm:$0xff]
        %v2222 = vld [vmem:[%s9 + $0x390] sm:$0xff]
        %v2223 = vld [vmem:[%s9 + $0x398] sm:$0xff]
        %v2224 = vld [vmem:[%s9 + $0x3a0] sm:$0xff]
        %v2225 = vld [vmem:[%s9 + $0x3a8] sm:$0xff]
        %v2226 = vld [vmem:[%s9 + $0x3b0] sm:$0xff]
        %v2227 = vld [vmem:[%s9 + $0x3b8] sm:$0xff]
        %v2228 = vld [vmem:[%s9 + $0x3c0] sm:$0xff]
        %v2229 = vld [vmem:[%s9 + $0x3c8] sm:$0xff]
        %v2230 = vld [vmem:[%s9 + $0x3d0] sm:$0xff]
        %v2231 = vld [vmem:[%s9 + $0x3d8] sm:$0xff]
        %v2232 = vld [vmem:[%s9 + $0x3e0] sm:$0xff]
        %v2233 = vld [vmem:[%s9 + $0x3e8] sm:$0xff]
        %v2234 = vld [vmem:[%s9 + $0x3f0] sm:$0xff]
        %v2235 = vld [vmem:[%s9 + $0x3f8] sm:$0xff]
        %v2236 = vld [vmem:[%s9 + $0x400] sm:$0xff]
        %v2237 = vld [vmem:[%s9 + $0x408] sm:$0xff]
        %v2238 = vld [vmem:[%s9 + $0x410] sm:$0xff]
        %v2239 = vld [vmem:[%s9 + $0x418] sm:$0xff]
        %v2240 = vld [vmem:[%s9 + $0x420] sm:$0xff]
        %v2241 = vld [vmem:[%s9 + $0x428] sm:$0xff]
        %v2242 = vld [vmem:[%s9 + $0x430] sm:$0xff]
        %v2243 = vld [vmem:[%s9 + $0x438] sm:$0xff]
        %v2244 = vld [vmem:[%s9 + $0x440] sm:$0xff]
        %v2245 = vld [vmem:[%s9 + $0x448] sm:$0xff]
        %v2246 = vld [vmem:[%s9 + $0x450] sm:$0xff]
        %v2247 = vld [vmem:[%s9 + $0x458] sm:$0xff]
        %v2248 = vld [vmem:[%s9 + $0x460] sm:$0xff]
        %v2249 = vld [vmem:[%s9 + $0x468] sm:$0xff]
        %v2250 = vld [vmem:[%s9 + $0x470] sm:$0xff]
        %v2251 = vld [vmem:[%s9 + $0x478] sm:$0xff]
        %v2252 = vld [vmem:[%s9 + $0x480] sm:$0xff]
        %v2253 = vld [vmem:[%s9 + $0x488] sm:$0xff]
        %v2254 = vld [vmem:[%s9 + $0x490] sm:$0xff]
        %v2255 = vld [vmem:[%s9 + $0x498] sm:$0xff]
        %v2256 = vld [vmem:[%s9 + $0x4a0] sm:$0xff]
        %v2257 = vld [vmem:[%s9 + $0x4a8] sm:$0xff]
        %v2258 = vld [vmem:[%s9 + $0x4b0] sm:$0xff]
        %v2259 = vld [vmem:[%s9 + $0x4b8] sm:$0xff]
        %v2260 = vld [vmem:[%s9 + $0x4c0] sm:$0xff]
        %v2261 = vld [vmem:[%s9 + $0x4c8] sm:$0xff]
        %v2262 = vld [vmem:[%s9 + $0x4d0] sm:$0xff]
        %v2263 = vld [vmem:[%s9 + $0x4d8] sm:$0xff]
        %v2264 = vld [vmem:[%s9 + $0x4e0] sm:$0xff]
        %v2265 = vld [vmem:[%s9 + $0x4e8] sm:$0xff]
        %v2266 = vld [vmem:[%s9 + $0x4f0] sm:$0xff]
        %v2267 = vld [vmem:[%s9 + $0x4f8] sm:$0xff]
        %v2268 = vld [vmem:[%s9 + $0x500] sm:$0xff]
        %v2269 = vld [vmem:[%s9 + $0x508] sm:$0xff]
        %v2270 = vld [vmem:[%s9 + $0x510] sm:$0xff]
        %v2271 = vld [vmem:[%s9 + $0x518] sm:$0xff]
        %v2272 = vld [vmem:[%s9 + $0x520] sm:$0xff]
        %v2273 = vld [vmem:[%s9 + $0x528] sm:$0xff]
        %v2274 = vld [vmem:[%s9 + $0x530] sm:$0xff]
        %v2275 = vld [vmem:[%s9 + $0x538] sm:$0xff]
        %v2276 = vld [vmem:[%s9 + $0x540] sm:$0xff]
        %v2277 = vld [vmem:[%s9 + $0x548] sm:$0xff]
        %v2278 = vld [vmem:[%s9 + $0x550] sm:$0xff]
        %v2279 = vld [vmem:[%s9 + $0x558] sm:$0xff]
        %v2280 = vld [vmem:[%s9 + $0x560] sm:$0xff]
        %v2281 = vld [vmem:[%s9 + $0x568] sm:$0xff]
        %v2282 = vld [vmem:[%s9 + $0x570] sm:$0xff]
        %v2283 = vld [vmem:[%s9 + $0x578] sm:$0xff]
        %v2284 = vld [vmem:[%s9 + $0x580] sm:$0xff]
        %v2285 = vld [vmem:[%s9 + $0x588] sm:$0xff]
        %v2286 = vld [vmem:[%s9 + $0x590] sm:$0xff]
        %v2287 = vld [vmem:[%s9 + $0x598] sm:$0xff]
        %v2288 = vld [vmem:[%s9 + $0x5a0] sm:$0xff]
        %v2289 = vld [vmem:[%s9 + $0x5a8] sm:$0xff]
        %v2290 = vld [vmem:[%s9 + $0x5b0] sm:$0xff]
        %v2291 = vld [vmem:[%s9 + $0x5b8] sm:$0xff]
        %v2292 = vld [vmem:[%s9 + $0x5c0] sm:$0xff]
        %v2293 = vld [vmem:[%s9 + $0x5c8] sm:$0xff]
        %v2294 = vld [vmem:[%s9 + $0x5d0] sm:$0xff]
        %v2295 = vld [vmem:[%s9 + $0x5d8] sm:$0xff]
        %v2296 = vld [vmem:[%s9 + $0x5e0] sm:$0xff]
        %v2297 = vld [vmem:[%s9 + $0x5e8] sm:$0xff]
        %v2298 = vld [vmem:[%s9 + $0x5f0] sm:$0xff]
        %v2299 = vld [vmem:[%s9 + $0x5f8] sm:$0xff]
        %v2300 = vld [vmem:[%s9 + $0x600] sm:$0xff]
        %v2301 = vld [vmem:[%s9 + $0x608] sm:$0xff]
        %v2302 = vld [vmem:[%s9 + $0x610] sm:$0xff]
        %v2303 = vld [vmem:[%s9 + $0x618] sm:$0xff]
        %v2304 = vld [vmem:[%s9 + $0x620] sm:$0xff]
        %v2305 = vld [vmem:[%s9 + $0x628] sm:$0xff]
        %v2306 = vld [vmem:[%s9 + $0x630] sm:$0xff]
        %v2307 = vld [vmem:[%s9 + $0x638] sm:$0xff]
        %v2308 = vld [vmem:[%s9 + $0x640] sm:$0xff]
        %v2309 = vld [vmem:[%s9 + $0x648] sm:$0xff]
        %v2310 = vld [vmem:[%s9 + $0x650] sm:$0xff]
        %v2311 = vld [vmem:[%s9 + $0x658] sm:$0xff]
        %v2312 = vld [vmem:[%s9 + $0x660] sm:$0xff]
        %v2313 = vld [vmem:[%s9 + $0x668] sm:$0xff]
        %v2314 = vld [vmem:[%s9 + $0x670] sm:$0xff]
        %v2315 = vld [vmem:[%s9 + $0x678] sm:$0xff]
        %v2316 = vld [vmem:[%s9 + $0x680] sm:$0xff]
        %v2317 = vld [vmem:[%s9 + $0x688] sm:$0xff]
        %v2318 = vld [vmem:[%s9 + $0x690] sm:$0xff]
        %v2319 = vld [vmem:[%s9 + $0x698] sm:$0xff]
        %v2320 = vld [vmem:[%s9 + $0x6a0] sm:$0xff]
        %v2321 = vld [vmem:[%s9 + $0x6a8] sm:$0xff]
        %v2322 = vld [vmem:[%s9 + $0x6b0] sm:$0xff]
        %v2323 = vld [vmem:[%s9 + $0x6b8] sm:$0xff]
        %v2324 = vld [vmem:[%s9 + $0x6c0] sm:$0xff]
        %v2325 = vld [vmem:[%s9 + $0x6c8] sm:$0xff]
        %v2326 = vld [vmem:[%s9 + $0x6d0] sm:$0xff]
        %v2327 = vld [vmem:[%s9 + $0x6d8] sm:$0xff]
        %v2328 = vld [vmem:[%s9 + $0x6e0] sm:$0xff]
        %v2329 = vld [vmem:[%s9 + $0x6e8] sm:$0xff]
        %v2330 = vld [vmem:[%s9 + $0x6f0] sm:$0xff]
        %v2331 = vld [vmem:[%s9 + $0x6f8] sm:$0xff]
        %v2332 = vld [vmem:[%s9 + $0x700] sm:$0xff]
        %v2333 = vld [vmem:[%s9 + $0x708] sm:$0xff]
        %v2334 = vld [vmem:[%s9 + $0x710] sm:$0xff]
        %v2335 = vld [vmem:[%s9 + $0x718] sm:$0xff]
        %v2336 = vld [vmem:[%s9 + $0x720] sm:$0xff]
        %v2337 = vld [vmem:[%s9 + $0x728] sm:$0xff]
        %v2338 = vld [vmem:[%s9 + $0x730] sm:$0xff]
        %v2339 = vld [vmem:[%s9 + $0x738] sm:$0xff]
        %v2340 = vld [vmem:[%s9 + $0x740] sm:$0xff]
        %v2341 = vld [vmem:[%s9 + $0x748] sm:$0xff]
        %v2342 = vld [vmem:[%s9 + $0x750] sm:$0xff]
        %v2343 = vld [vmem:[%s9 + $0x758] sm:$0xff]
        %v2344 = vld [vmem:[%s9 + $0x760] sm:$0xff]
        %v2345 = vld [vmem:[%s9 + $0x768] sm:$0xff]
        %v2346 = vld [vmem:[%s9 + $0x770] sm:$0xff]
        %v2347 = vld [vmem:[%s9 + $0x778] sm:$0xff]
        %v2348 = vld [vmem:[%s9 + $0x780] sm:$0xff]
        %v2349 = vld [vmem:[%s9 + $0x788] sm:$0xff]
        %v2350 = vld [vmem:[%s9 + $0x790] sm:$0xff]
        %v2351 = vld [vmem:[%s9 + $0x798] sm:$0xff]
        %v2352 = vld [vmem:[%s9 + $0x7a0] sm:$0xff]
        %v2353 = vld [vmem:[%s9 + $0x7a8] sm:$0xff]
        %v2354 = vld [vmem:[%s9 + $0x7b0] sm:$0xff]
        %v2355 = vld [vmem:[%s9 + $0x7b8] sm:$0xff]
        %v2356 = vld [vmem:[%s9 + $0x7c0] sm:$0xff]
        %v2357 = vld [vmem:[%s9 + $0x7c8] sm:$0xff]
        %v2358 = vld [vmem:[%s9 + $0x7d0] sm:$0xff]
        %v2359 = vld [vmem:[%s9 + $0x7d8] sm:$0xff]
        %v2360 = vld [vmem:[%s9 + $0x7e0] sm:$0xff]
        %v2361 = vld [vmem:[%s9 + $0x7e8] sm:$0xff]
        %v2362 = vld [vmem:[%s9 + $0x7f0] sm:$0xff]
        %v2363 = vld [vmem:[%s9 + $0x7f8] sm:$0xff]
        %v2364 = vld [vmem:[%s10] sm:$0x1]
        %v2366 = vlaneseq
        %v2367 = vshrl.u32 %v2366, 7
        %v2368 = vsub.s32 0, %v2367
        %v2369 = vrot.slane %v2364, %v2368
        %2371 = vmatprep.subr.mxu0 0.0
        %2372 = vmatpush1.msra.mxu0 %v2108
        %2373 = vmatprep.subr.mxu0 0.0
        %2374 = vmatpush1.msra.mxu0 %v2109
        %2375 = vmatprep.subr.mxu0 0.0
        %2376 = vmatpush1.msra.mxu0 %v2110
        %2377 = vmatprep.subr.mxu0 0.0
        %2378 = vmatpush1.msra.mxu0 %v2111
        %2379 = vmatprep.subr.mxu0 0.0
        %2380 = vmatpush1.msra.mxu0 %v2112
        %2381 = vmatprep.subr.mxu0 0.0
        %2382 = vmatpush1.msra.mxu0 %v2113
        %2383 = vmatprep.subr.mxu0 0.0
        %2384 = vmatpush1.msra.mxu0 %v2114
        %2385 = vmatprep.subr.mxu0 0.0
        %2386 = vmatpush1.msra.mxu0 %v2115
        %2387 = vmatprep.subr.mxu0 0.0
        %2388 = vmatpush1.msra.mxu0 %v2116
        %2389 = vmatprep.subr.mxu0 0.0
        %2390 = vmatpush1.msra.mxu0 %v2117
        %2391 = vmatprep.subr.mxu0 0.0
        %2392 = vmatpush1.msra.mxu0 %v2118
        %2393 = vmatprep.subr.mxu0 0.0
        %2394 = vmatpush1.msra.mxu0 %v2119
        %2395 = vmatprep.subr.mxu0 0.0
        %2396 = vmatpush1.msra.mxu0 %v2120
        %2397 = vmatprep.subr.mxu0 0.0
        %2398 = vmatpush1.msra.mxu0 %v2121
        %2399 = vmatprep.subr.mxu0 0.0
        %2400 = vmatpush1.msra.mxu0 %v2122
        %2401 = vmatprep.subr.mxu0 0.0
        %2402 = vmatpush1.msra.mxu0 %v2123
        %2403 = vmatprep.subr.mxu0 0.0
        %2404 = vmatpush1.msra.mxu0 %v2124
        %2405 = vmatprep.subr.mxu0 0.0
        %2406 = vmatpush1.msra.mxu0 %v2125
        %2407 = vmatprep.subr.mxu0 0.0
        %2408 = vmatpush1.msra.mxu0 %v2126
        %2409 = vmatprep.subr.mxu0 0.0
        %2410 = vmatpush1.msra.mxu0 %v2127
        %2411 = vmatprep.subr.mxu0 0.0
        %2412 = vmatpush1.msra.mxu0 %v2128
        %2413 = vmatprep.subr.mxu0 0.0
        %2414 = vmatpush1.msra.mxu0 %v2129
        %2415 = vmatprep.subr.mxu0 0.0
        %2416 = vmatpush1.msra.mxu0 %v2130
        %2417 = vmatprep.subr.mxu0 0.0
        %2418 = vmatpush1.msra.mxu0 %v2131
        %2419 = vmatprep.subr.mxu0 0.0
        %2420 = vmatpush1.msra.mxu0 %v2132
        %2421 = vmatprep.subr.mxu0 0.0
        %2422 = vmatpush1.msra.mxu0 %v2133
        %2423 = vmatprep.subr.mxu0 0.0
        %2424 = vmatpush1.msra.mxu0 %v2134
        %2425 = vmatprep.subr.mxu0 0.0
        %2426 = vmatpush1.msra.mxu0 %v2135
        %2427 = vmatprep.subr.mxu0 0.0
        %2428 = vmatpush1.msra.mxu0 %v2136
        %2429 = vmatprep.subr.mxu0 0.0
        %2430 = vmatpush1.msra.mxu0 %v2137
        %2431 = vmatprep.subr.mxu0 0.0
        %2432 = vmatpush1.msra.mxu0 %v2138
        %2433 = vmatprep.subr.mxu0 0.0
        %2434 = vmatpush1.msra.mxu0 %v2139
        %2435 = vmatprep.mubr.f32.mxu0 %v2093
        %2436 = vmatmul.mubr.f32.gmra.mrb[0].mxu0 %v2092
        %v2437 = vpop.f32.mrb[0].mxu0
        %v2438 = vadd.f32 %v2369, %v2437
        %v2439 = vpop.f32.mrb[0].mxu0
        %2440 = vdwg.mxu0
        %2441 = vmatprep.subr.mxu0 0.0
        %2442 = vmatpush1.msra.mxu0 %v2140
        %2443 = vmatprep.subr.mxu0 0.0
        %2444 = vmatpush1.msra.mxu0 %v2141
        %2445 = vmatprep.subr.mxu0 0.0
        %2446 = vmatpush1.msra.mxu0 %v2142
        %2447 = vmatprep.subr.mxu0 0.0
        %2448 = vmatpush1.msra.mxu0 %v2143
        %2449 = vmatprep.subr.mxu0 0.0
        %2450 = vmatpush1.msra.mxu0 %v2144
        %2451 = vmatprep.subr.mxu0 0.0
        %2452 = vmatpush1.msra.mxu0 %v2145
        %2453 = vmatprep.subr.mxu0 0.0
        %2454 = vmatpush1.msra.mxu0 %v2146
        %2455 = vmatprep.subr.mxu0 0.0
        %2456 = vmatpush1.msra.mxu0 %v2147
        %2457 = vmatprep.subr.mxu0 0.0
        %2458 = vmatpush1.msra.mxu0 %v2148
        %2459 = vmatprep.subr.mxu0 0.0
        %2460 = vmatpush1.msra.mxu0 %v2149
        %2461 = vmatprep.subr.mxu0 0.0
        %2462 = vmatpush1.msra.mxu0 %v2150
        %2463 = vmatprep.subr.mxu0 0.0
        %2464 = vmatpush1.msra.mxu0 %v2151
        %2465 = vmatprep.subr.mxu0 0.0
        %2466 = vmatpush1.msra.mxu0 %v2152
        %2467 = vmatprep.subr.mxu0 0.0
        %2468 = vmatpush1.msra.mxu0 %v2153
        %2469 = vmatprep.subr.mxu0 0.0
        %2470 = vmatpush1.msra.mxu0 %v2154
        %2471 = vmatprep.subr.mxu0 0.0
        %2472 = vmatpush1.msra.mxu0 %v2155
        %2473 = vmatprep.subr.mxu0 0.0
        %2474 = vmatpush1.msra.mxu0 %v2156
        %2475 = vmatprep.subr.mxu0 0.0
        %2476 = vmatpush1.msra.mxu0 %v2157
        %2477 = vmatprep.subr.mxu0 0.0
        %2478 = vmatpush1.msra.mxu0 %v2158
        %2479 = vmatprep.subr.mxu0 0.0
        %2480 = vmatpush1.msra.mxu0 %v2159
        %2481 = vmatprep.subr.mxu0 0.0
        %2482 = vmatpush1.msra.mxu0 %v2160
        %2483 = vmatprep.subr.mxu0 0.0
        %2484 = vmatpush1.msra.mxu0 %v2161
        %2485 = vmatprep.subr.mxu0 0.0
        %2486 = vmatpush1.msra.mxu0 %v2162
        %2487 = vmatprep.subr.mxu0 0.0
        %2488 = vmatpush1.msra.mxu0 %v2163
        %2489 = vmatprep.subr.mxu0 0.0
        %2490 = vmatpush1.msra.mxu0 %v2164
        %2491 = vmatprep.subr.mxu0 0.0
        %2492 = vmatpush1.msra.mxu0 %v2165
        %2493 = vmatprep.subr.mxu0 0.0
        %2494 = vmatpush1.msra.mxu0 %v2166
        %2495 = vmatprep.subr.mxu0 0.0
        %2496 = vmatpush1.msra.mxu0 %v2167
        %2497 = vmatprep.subr.mxu0 0.0
        %2498 = vmatpush1.msra.mxu0 %v2168
        %2499 = vmatprep.subr.mxu0 0.0
        %2500 = vmatpush1.msra.mxu0 %v2169
        %2501 = vmatprep.subr.mxu0 0.0
        %2502 = vmatpush1.msra.mxu0 %v2170
        %2503 = vmatprep.subr.mxu0 0.0
        %2504 = vmatpush1.msra.mxu0 %v2171
        %2505 = vmatprep.mubr.f32.mxu0 %v2095
        %2506 = vmatmul.mubr.f32.gmra.mrb[0].mxu0 %v2094
        %v2507 = vpop.f32.mrb[0].mxu0
        %v2508 = vadd.f32 %v2438, %v2507
        %v2509 = vpop.f32.mrb[0].mxu0
        %2510 = vdwg.mxu0
        %2511 = vmatprep.subr.mxu0 0.0
        %2512 = vmatpush1.msra.mxu0 %v2172
        %2513 = vmatprep.subr.mxu0 0.0
        %2514 = vmatpush1.msra.mxu0 %v2173
        %2515 = vmatprep.subr.mxu0 0.0
        %2516 = vmatpush1.msra.mxu0 %v2174
        %2517 = vmatprep.subr.mxu0 0.0
        %2518 = vmatpush1.msra.mxu0 %v2175
        %2519 = vmatprep.subr.mxu0 0.0
        %2520 = vmatpush1.msra.mxu0 %v2176
        %2521 = vmatprep.subr.mxu0 0.0
        %2522 = vmatpush1.msra.mxu0 %v2177
        %2523 = vmatprep.subr.mxu0 0.0
        %2524 = vmatpush1.msra.mxu0 %v2178
        %2525 = vmatprep.subr.mxu0 0.0
        %2526 = vmatpush1.msra.mxu0 %v2179
        %2527 = vmatprep.subr.mxu0 0.0
        %2528 = vmatpush1.msra.mxu0 %v2180
        %2529 = vmatprep.subr.mxu0 0.0
        %2530 = vmatpush1.msra.mxu0 %v2181
        %2531 = vmatprep.subr.mxu0 0.0
        %2532 = vmatpush1.msra.mxu0 %v2182
        %2533 = vmatprep.subr.mxu0 0.0
        %2534 = vmatpush1.msra.mxu0 %v2183
        %2535 = vmatprep.subr.mxu0 0.0
        %2536 = vmatpush1.msra.mxu0 %v2184
        %2537 = vmatprep.subr.mxu0 0.0
        %2538 = vmatpush1.msra.mxu0 %v2185
        %2539 = vmatprep.subr.mxu0 0.0
        %2540 = vmatpush1.msra.mxu0 %v2186
        %2541 = vmatprep.subr.mxu0 0.0
        %2542 = vmatpush1.msra.mxu0 %v2187
        %2543 = vmatprep.subr.mxu0 0.0
        %2544 = vmatpush1.msra.mxu0 %v2188
        %2545 = vmatprep.subr.mxu0 0.0
        %2546 = vmatpush1.msra.mxu0 %v2189
        %2547 = vmatprep.subr.mxu0 0.0
        %2548 = vmatpush1.msra.mxu0 %v2190
        %2549 = vmatprep.subr.mxu0 0.0
        %2550 = vmatpush1.msra.mxu0 %v2191
        %2551 = vmatprep.subr.mxu0 0.0
        %2552 = vmatpush1.msra.mxu0 %v2192
        %2553 = vmatprep.subr.mxu0 0.0
        %2554 = vmatpush1.msra.mxu0 %v2193
        %2555 = vmatprep.subr.mxu0 0.0
        %2556 = vmatpush1.msra.mxu0 %v2194
        %2557 = vmatprep.subr.mxu0 0.0
        %2558 = vmatpush1.msra.mxu0 %v2195
        %2559 = vmatprep.subr.mxu0 0.0
        %2560 = vmatpush1.msra.mxu0 %v2196
        %2561 = vmatprep.subr.mxu0 0.0
        %2562 = vmatpush1.msra.mxu0 %v2197
        %2563 = vmatprep.subr.mxu0 0.0
        %2564 = vmatpush1.msra.mxu0 %v2198
        %2565 = vmatprep.subr.mxu0 0.0
        %2566 = vmatpush1.msra.mxu0 %v2199
        %2567 = vmatprep.subr.mxu0 0.0
        %2568 = vmatpush1.msra.mxu0 %v2200
        %2569 = vmatprep.subr.mxu0 0.0
        %2570 = vmatpush1.msra.mxu0 %v2201
        %2571 = vmatprep.subr.mxu0 0.0
        %2572 = vmatpush1.msra.mxu0 %v2202
        %2573 = vmatprep.subr.mxu0 0.0
        %2574 = vmatpush1.msra.mxu0 %v2203
        %2575 = vmatprep.mubr.f32.mxu0 %v2097
        %2576 = vmatmul.mubr.f32.gmra.mrb[0].mxu0 %v2096
        %v2577 = vpop.f32.mrb[0].mxu0
        %v2578 = vadd.f32 %v2508, %v2577
        %v2579 = vpop.f32.mrb[0].mxu0
        %2580 = vdwg.mxu0
        %2581 = vmatprep.subr.mxu0 0.0
        %2582 = vmatpush1.msra.mxu0 %v2204
        %2583 = vmatprep.subr.mxu0 0.0
        %2584 = vmatpush1.msra.mxu0 %v2205
        %2585 = vmatprep.subr.mxu0 0.0
        %2586 = vmatpush1.msra.mxu0 %v2206
        %2587 = vmatprep.subr.mxu0 0.0
        %2588 = vmatpush1.msra.mxu0 %v2207
        %2589 = vmatprep.subr.mxu0 0.0
        %2590 = vmatpush1.msra.mxu0 %v2208
        %2591 = vmatprep.subr.mxu0 0.0
        %2592 = vmatpush1.msra.mxu0 %v2209
        %2593 = vmatprep.subr.mxu0 0.0
        %2594 = vmatpush1.msra.mxu0 %v2210
        %2595 = vmatprep.subr.mxu0 0.0
        %2596 = vmatpush1.msra.mxu0 %v2211
        %2597 = vmatprep.subr.mxu0 0.0
        %2598 = vmatpush1.msra.mxu0 %v2212
        %2599 = vmatprep.subr.mxu0 0.0
        %2600 = vmatpush1.msra.mxu0 %v2213
        %2601 = vmatprep.subr.mxu0 0.0
        %2602 = vmatpush1.msra.mxu0 %v2214
        %2603 = vmatprep.subr.mxu0 0.0
        %2604 = vmatpush1.msra.mxu0 %v2215
        %2605 = vmatprep.subr.mxu0 0.0
        %2606 = vmatpush1.msra.mxu0 %v2216
        %2607 = vmatprep.subr.mxu0 0.0
        %2608 = vmatpush1.msra.mxu0 %v2217
        %2609 = vmatprep.subr.mxu0 0.0
        %2610 = vmatpush1.msra.mxu0 %v2218
        %2611 = vmatprep.subr.mxu0 0.0
        %2612 = vmatpush1.msra.mxu0 %v2219
        %2613 = vmatprep.subr.mxu0 0.0
        %2614 = vmatpush1.msra.mxu0 %v2220
        %2615 = vmatprep.subr.mxu0 0.0
        %2616 = vmatpush1.msra.mxu0 %v2221
        %2617 = vmatprep.subr.mxu0 0.0
        %2618 = vmatpush1.msra.mxu0 %v2222
        %2619 = vmatprep.subr.mxu0 0.0
        %2620 = vmatpush1.msra.mxu0 %v2223
        %2621 = vmatprep.subr.mxu0 0.0
        %2622 = vmatpush1.msra.mxu0 %v2224
        %2623 = vmatprep.subr.mxu0 0.0
        %2624 = vmatpush1.msra.mxu0 %v2225
        %2625 = vmatprep.subr.mxu0 0.0
        %2626 = vmatpush1.msra.mxu0 %v2226
        %2627 = vmatprep.subr.mxu0 0.0
        %2628 = vmatpush1.msra.mxu0 %v2227
        %2629 = vmatprep.subr.mxu0 0.0
        %2630 = vmatpush1.msra.mxu0 %v2228
        %2631 = vmatprep.subr.mxu0 0.0
        %2632 = vmatpush1.msra.mxu0 %v2229
        %2633 = vmatprep.subr.mxu0 0.0
        %2634 = vmatpush1.msra.mxu0 %v2230
        %2635 = vmatprep.subr.mxu0 0.0
        %2636 = vmatpush1.msra.mxu0 %v2231
        %2637 = vmatprep.subr.mxu0 0.0
        %2638 = vmatpush1.msra.mxu0 %v2232
        %2639 = vmatprep.subr.mxu0 0.0
        %2640 = vmatpush1.msra.mxu0 %v2233
        %2641 = vmatprep.subr.mxu0 0.0
        %2642 = vmatpush1.msra.mxu0 %v2234
        %2643 = vmatprep.subr.mxu0 0.0
        %2644 = vmatpush1.msra.mxu0 %v2235
        %2645 = vmatprep.mubr.f32.mxu0 %v2099
        %2646 = vmatmul.mubr.f32.gmra.mrb[0].mxu0 %v2098
        %v2647 = vpop.f32.mrb[0].mxu0
        %v2648 = vadd.f32 %v2578, %v2647
        %v2649 = vpop.f32.mrb[0].mxu0
        %2650 = vdwg.mxu0
        %2651 = vmatprep.subr.mxu0 0.0
        %2652 = vmatpush1.msra.mxu0 %v2236
        %2653 = vmatprep.subr.mxu0 0.0
        %2654 = vmatpush1.msra.mxu0 %v2237
        %2655 = vmatprep.subr.mxu0 0.0
        %2656 = vmatpush1.msra.mxu0 %v2238
        %2657 = vmatprep.subr.mxu0 0.0
        %2658 = vmatpush1.msra.mxu0 %v2239
        %2659 = vmatprep.subr.mxu0 0.0
        %2660 = vmatpush1.msra.mxu0 %v2240
        %2661 = vmatprep.subr.mxu0 0.0
        %2662 = vmatpush1.msra.mxu0 %v2241
        %2663 = vmatprep.subr.mxu0 0.0
        %2664 = vmatpush1.msra.mxu0 %v2242
        %2665 = vmatprep.subr.mxu0 0.0
        %2666 = vmatpush1.msra.mxu0 %v2243
        %2667 = vmatprep.subr.mxu0 0.0
        %2668 = vmatpush1.msra.mxu0 %v2244
        %2669 = vmatprep.subr.mxu0 0.0
        %2670 = vmatpush1.msra.mxu0 %v2245
        %2671 = vmatprep.subr.mxu0 0.0
        %2672 = vmatpush1.msra.mxu0 %v2246
        %2673 = vmatprep.subr.mxu0 0.0
        %2674 = vmatpush1.msra.mxu0 %v2247
        %2675 = vmatprep.subr.mxu0 0.0
        %2676 = vmatpush1.msra.mxu0 %v2248
        %2677 = vmatprep.subr.mxu0 0.0
        %2678 = vmatpush1.msra.mxu0 %v2249
        %2679 = vmatprep.subr.mxu0 0.0
        %2680 = vmatpush1.msra.mxu0 %v2250
        %2681 = vmatprep.subr.mxu0 0.0
        %2682 = vmatpush1.msra.mxu0 %v2251
        %2683 = vmatprep.subr.mxu0 0.0
        %2684 = vmatpush1.msra.mxu0 %v2252
        %2685 = vmatprep.subr.mxu0 0.0
        %2686 = vmatpush1.msra.mxu0 %v2253
        %2687 = vmatprep.subr.mxu0 0.0
        %2688 = vmatpush1.msra.mxu0 %v2254
        %2689 = vmatprep.subr.mxu0 0.0
        %2690 = vmatpush1.msra.mxu0 %v2255
        %2691 = vmatprep.subr.mxu0 0.0
        %2692 = vmatpush1.msra.mxu0 %v2256
        %2693 = vmatprep.subr.mxu0 0.0
        %2694 = vmatpush1.msra.mxu0 %v2257
        %2695 = vmatprep.subr.mxu0 0.0
        %2696 = vmatpush1.msra.mxu0 %v2258
        %2697 = vmatprep.subr.mxu0 0.0
        %2698 = vmatpush1.msra.mxu0 %v2259
        %2699 = vmatprep.subr.mxu0 0.0
        %2700 = vmatpush1.msra.mxu0 %v2260
        %2701 = vmatprep.subr.mxu0 0.0
        %2702 = vmatpush1.msra.mxu0 %v2261
        %2703 = vmatprep.subr.mxu0 0.0
        %2704 = vmatpush1.msra.mxu0 %v2262
        %2705 = vmatprep.subr.mxu0 0.0
        %2706 = vmatpush1.msra.mxu0 %v2263
        %2707 = vmatprep.subr.mxu0 0.0
        %2708 = vmatpush1.msra.mxu0 %v2264
        %2709 = vmatprep.subr.mxu0 0.0
        %2710 = vmatpush1.msra.mxu0 %v2265
        %2711 = vmatprep.subr.mxu0 0.0
        %2712 = vmatpush1.msra.mxu0 %v2266
        %2713 = vmatprep.subr.mxu0 0.0
        %2714 = vmatpush1.msra.mxu0 %v2267
        %2715 = vmatprep.mubr.f32.mxu0 %v2101
        %2716 = vmatmul.mubr.f32.gmra.mrb[0].mxu0 %v2100
        %v2717 = vpop.f32.mrb[0].mxu0
        %v2718 = vadd.f32 %v2648, %v2717
        %v2719 = vpop.f32.mrb[0].mxu0
        %2720 = vdwg.mxu0
        %2721 = vmatprep.subr.mxu0 0.0
        %2722 = vmatpush1.msra.mxu0 %v2268
        %2723 = vmatprep.subr.mxu0 0.0
        %2724 = vmatpush1.msra.mxu0 %v2269
        %2725 = vmatprep.subr.mxu0 0.0
        %2726 = vmatpush1.msra.mxu0 %v2270
        %2727 = vmatprep.subr.mxu0 0.0
        %2728 = vmatpush1.msra.mxu0 %v2271
        %2729 = vmatprep.subr.mxu0 0.0
        %2730 = vmatpush1.msra.mxu0 %v2272
        %2731 = vmatprep.subr.mxu0 0.0
        %2732 = vmatpush1.msra.mxu0 %v2273
        %2733 = vmatprep.subr.mxu0 0.0
        %2734 = vmatpush1.msra.mxu0 %v2274
        %2735 = vmatprep.subr.mxu0 0.0
        %2736 = vmatpush1.msra.mxu0 %v2275
        %2737 = vmatprep.subr.mxu0 0.0
        %2738 = vmatpush1.msra.mxu0 %v2276
        %2739 = vmatprep.subr.mxu0 0.0
        %2740 = vmatpush1.msra.mxu0 %v2277
        %2741 = vmatprep.subr.mxu0 0.0
        %2742 = vmatpush1.msra.mxu0 %v2278
        %2743 = vmatprep.subr.mxu0 0.0
        %2744 = vmatpush1.msra.mxu0 %v2279
        %2745 = vmatprep.subr.mxu0 0.0
        %2746 = vmatpush1.msra.mxu0 %v2280
        %2747 = vmatprep.subr.mxu0 0.0
        %2748 = vmatpush1.msra.mxu0 %v2281
        %2749 = vmatprep.subr.mxu0 0.0
        %2750 = vmatpush1.msra.mxu0 %v2282
        %2751 = vmatprep.subr.mxu0 0.0
        %2752 = vmatpush1.msra.mxu0 %v2283
        %2753 = vmatprep.subr.mxu0 0.0
        %2754 = vmatpush1.msra.mxu0 %v2284
        %2755 = vmatprep.subr.mxu0 0.0
        %2756 = vmatpush1.msra.mxu0 %v2285
        %2757 = vmatprep.subr.mxu0 0.0
        %2758 = vmatpush1.msra.mxu0 %v2286
        %2759 = vmatprep.subr.mxu0 0.0
        %2760 = vmatpush1.msra.mxu0 %v2287
        %2761 = vmatprep.subr.mxu0 0.0
        %2762 = vmatpush1.msra.mxu0 %v2288
        %2763 = vmatprep.subr.mxu0 0.0
        %2764 = vmatpush1.msra.mxu0 %v2289
        %2765 = vmatprep.subr.mxu0 0.0
        %2766 = vmatpush1.msra.mxu0 %v2290
        %2767 = vmatprep.subr.mxu0 0.0
        %2768 = vmatpush1.msra.mxu0 %v2291
        %2769 = vmatprep.subr.mxu0 0.0
        %2770 = vmatpush1.msra.mxu0 %v2292
        %2771 = vmatprep.subr.mxu0 0.0
        %2772 = vmatpush1.msra.mxu0 %v2293
        %2773 = vmatprep.subr.mxu0 0.0
        %2774 = vmatpush1.msra.mxu0 %v2294
        %2775 = vmatprep.subr.mxu0 0.0
        %2776 = vmatpush1.msra.mxu0 %v2295
        %2777 = vmatprep.subr.mxu0 0.0
        %2778 = vmatpush1.msra.mxu0 %v2296
        %2779 = vmatprep.subr.mxu0 0.0
        %2780 = vmatpush1.msra.mxu0 %v2297
        %2781 = vmatprep.subr.mxu0 0.0
        %2782 = vmatpush1.msra.mxu0 %v2298
        %2783 = vmatprep.subr.mxu0 0.0
        %2784 = vmatpush1.msra.mxu0 %v2299
        %2785 = vmatprep.mubr.f32.mxu0 %v2103
        %2786 = vmatmul.mubr.f32.gmra.mrb[0].mxu0 %v2102
        %v2787 = vpop.f32.mrb[0].mxu0
        %v2788 = vadd.f32 %v2718, %v2787
        %v2789 = vpop.f32.mrb[0].mxu0
        %2790 = vdwg.mxu0
        %2791 = vmatprep.subr.mxu0 0.0
        %2792 = vmatpush1.msra.mxu0 %v2300
        %2793 = vmatprep.subr.mxu0 0.0
        %2794 = vmatpush1.msra.mxu0 %v2301
        %2795 = vmatprep.subr.mxu0 0.0
        %2796 = vmatpush1.msra.mxu0 %v2302
        %2797 = vmatprep.subr.mxu0 0.0
        %2798 = vmatpush1.msra.mxu0 %v2303
        %2799 = vmatprep.subr.mxu0 0.0
        %2800 = vmatpush1.msra.mxu0 %v2304
        %2801 = vmatprep.subr.mxu0 0.0
        %2802 = vmatpush1.msra.mxu0 %v2305
        %2803 = vmatprep.subr.mxu0 0.0
        %2804 = vmatpush1.msra.mxu0 %v2306
        %2805 = vmatprep.subr.mxu0 0.0
        %2806 = vmatpush1.msra.mxu0 %v2307
        %2807 = vmatprep.subr.mxu0 0.0
        %2808 = vmatpush1.msra.mxu0 %v2308
        %2809 = vmatprep.subr.mxu0 0.0
        %2810 = vmatpush1.msra.mxu0 %v2309
        %2811 = vmatprep.subr.mxu0 0.0
        %2812 = vmatpush1.msra.mxu0 %v2310
        %2813 = vmatprep.subr.mxu0 0.0
        %2814 = vmatpush1.msra.mxu0 %v2311
        %2815 = vmatprep.subr.mxu0 0.0
        %2816 = vmatpush1.msra.mxu0 %v2312
        %2817 = vmatprep.subr.mxu0 0.0
        %2818 = vmatpush1.msra.mxu0 %v2313
        %2819 = vmatprep.subr.mxu0 0.0
        %2820 = vmatpush1.msra.mxu0 %v2314
        %2821 = vmatprep.subr.mxu0 0.0
        %2822 = vmatpush1.msra.mxu0 %v2315
        %2823 = vmatprep.subr.mxu0 0.0
        %2824 = vmatpush1.msra.mxu0 %v2316
        %2825 = vmatprep.subr.mxu0 0.0
        %2826 = vmatpush1.msra.mxu0 %v2317
        %2827 = vmatprep.subr.mxu0 0.0
        %2828 = vmatpush1.msra.mxu0 %v2318
        %2829 = vmatprep.subr.mxu0 0.0
        %2830 = vmatpush1.msra.mxu0 %v2319
        %2831 = vmatprep.subr.mxu0 0.0
        %2832 = vmatpush1.msra.mxu0 %v2320
        %2833 = vmatprep.subr.mxu0 0.0
        %2834 = vmatpush1.msra.mxu0 %v2321
        %2835 = vmatprep.subr.mxu0 0.0
        %2836 = vmatpush1.msra.mxu0 %v2322
        %2837 = vmatprep.subr.mxu0 0.0
        %2838 = vmatpush1.msra.mxu0 %v2323
        %2839 = vmatprep.subr.mxu0 0.0
        %2840 = vmatpush1.msra.mxu0 %v2324
        %2841 = vmatprep.subr.mxu0 0.0
        %2842 = vmatpush1.msra.mxu0 %v2325
        %2843 = vmatprep.subr.mxu0 0.0
        %2844 = vmatpush1.msra.mxu0 %v2326
        %2845 = vmatprep.subr.mxu0 0.0
        %2846 = vmatpush1.msra.mxu0 %v2327
        %2847 = vmatprep.subr.mxu0 0.0
        %2848 = vmatpush1.msra.mxu0 %v2328
        %2849 = vmatprep.subr.mxu0 0.0
        %2850 = vmatpush1.msra.mxu0 %v2329
        %2851 = vmatprep.subr.mxu0 0.0
        %2852 = vmatpush1.msra.mxu0 %v2330
        %2853 = vmatprep.subr.mxu0 0.0
        %2854 = vmatpush1.msra.mxu0 %v2331
        %2855 = vmatprep.mubr.f32.mxu0 %v2105
        %2856 = vmatmul.mubr.f32.gmra.mrb[0].mxu0 %v2104
        %v2857 = vpop.f32.mrb[0].mxu0
        %v2858 = vadd.f32 %v2788, %v2857
        %v2859 = vpop.f32.mrb[0].mxu0
        %2860 = vdwg.mxu0
        %2861 = vmatprep.subr.mxu0 0.0
        %2862 = vmatpush1.msra.mxu0 %v2332
        %2863 = vmatprep.subr.mxu0 0.0
        %2864 = vmatpush1.msra.mxu0 %v2333
        %2865 = vmatprep.subr.mxu0 0.0
        %2866 = vmatpush1.msra.mxu0 %v2334
        %2867 = vmatprep.subr.mxu0 0.0
        %2868 = vmatpush1.msra.mxu0 %v2335
        %2869 = vmatprep.subr.mxu0 0.0
        %2870 = vmatpush1.msra.mxu0 %v2336
        %2871 = vmatprep.subr.mxu0 0.0
        %2872 = vmatpush1.msra.mxu0 %v2337
        %2873 = vmatprep.subr.mxu0 0.0
        %2874 = vmatpush1.msra.mxu0 %v2338
        %2875 = vmatprep.subr.mxu0 0.0
        %2876 = vmatpush1.msra.mxu0 %v2339
        %2877 = vmatprep.subr.mxu0 0.0
        %2878 = vmatpush1.msra.mxu0 %v2340
        %2879 = vmatprep.subr.mxu0 0.0
        %2880 = vmatpush1.msra.mxu0 %v2341
        %2881 = vmatprep.subr.mxu0 0.0
        %2882 = vmatpush1.msra.mxu0 %v2342
        %2883 = vmatprep.subr.mxu0 0.0
        %2884 = vmatpush1.msra.mxu0 %v2343
        %2885 = vmatprep.subr.mxu0 0.0
        %2886 = vmatpush1.msra.mxu0 %v2344
        %2887 = vmatprep.subr.mxu0 0.0
        %2888 = vmatpush1.msra.mxu0 %v2345
        %2889 = vmatprep.subr.mxu0 0.0
        %2890 = vmatpush1.msra.mxu0 %v2346
        %2891 = vmatprep.subr.mxu0 0.0
        %2892 = vmatpush1.msra.mxu0 %v2347
        %2893 = vmatprep.subr.mxu0 0.0
        %2894 = vmatpush1.msra.mxu0 %v2348
        %2895 = vmatprep.subr.mxu0 0.0
        %2896 = vmatpush1.msra.mxu0 %v2349
        %2897 = vmatprep.subr.mxu0 0.0
        %2898 = vmatpush1.msra.mxu0 %v2350
        %2899 = vmatprep.subr.mxu0 0.0
        %2900 = vmatpush1.msra.mxu0 %v2351
        %2901 = vmatprep.subr.mxu0 0.0
        %2902 = vmatpush1.msra.mxu0 %v2352
        %2903 = vmatprep.subr.mxu0 0.0
        %2904 = vmatpush1.msra.mxu0 %v2353
        %2905 = vmatprep.subr.mxu0 0.0
        %2906 = vmatpush1.msra.mxu0 %v2354
        %2907 = vmatprep.subr.mxu0 0.0
        %2908 = vmatpush1.msra.mxu0 %v2355
        %2909 = vmatprep.subr.mxu0 0.0
        %2910 = vmatpush1.msra.mxu0 %v2356
        %2911 = vmatprep.subr.mxu0 0.0
        %2912 = vmatpush1.msra.mxu0 %v2357
        %2913 = vmatprep.subr.mxu0 0.0
        %2914 = vmatpush1.msra.mxu0 %v2358
        %2915 = vmatprep.subr.mxu0 0.0
        %2916 = vmatpush1.msra.mxu0 %v2359
        %2917 = vmatprep.subr.mxu0 0.0
        %2918 = vmatpush1.msra.mxu0 %v2360
        %2919 = vmatprep.subr.mxu0 0.0
        %2920 = vmatpush1.msra.mxu0 %v2361
        %2921 = vmatprep.subr.mxu0 0.0
        %2922 = vmatpush1.msra.mxu0 %v2362
        %2923 = vmatprep.subr.mxu0 0.0
        %2924 = vmatpush1.msra.mxu0 %v2363
        %2925 = vmatprep.mubr.f32.mxu0 %v2107
        %2926 = vmatmul.mubr.f32.gmra.mrb[0].mxu0 %v2106
        %v2927 = vpop.f32.mrb[0].mxu0
        %v2928 = vadd.f32 %v2858, %v2927
        %v2929 = vpop.f32.mrb[0].mxu0
        %2930 = vdwg.mxu0
        %v2931 = vadd.f32 %v1356, %v2928
        %v2932 = vld [vmem:[%s11] sm:$0x1]
        %v2933 = vld [vmem:[%s12] sm:$0x1]
        %v2934 = vsel %vm603, %v2931, 0.0
        %2935 = vadd.xlane.f32.xlu0 %v2934
        %v2936 = vpop.xlane.xlu0 %2935
        %v2937 = vmul.f32 %v2936, %v1332
        %v2938 = vsub.f32 %v2931, %v2937
        %v2939 = vmul.f32 %v2938, %v2938
        %v2940 = vsel %vm603, %v2939, 0.0
        %2941 = vadd.xlane.f32.xlu0 %v2940
        %v2942 = vpop.xlane.xlu0 %2941
        %v2943 = vmul.f32 %v2942, %v1332
        %v2944 = vadd.f32 %v2943, 1e-05
        %v2945 = vrsqrt.pop %v2944
        %v2946 = vmul.f32 %v2938, %v2945
        %v2948 = vlaneseq
        %v2949 = vshrl.u32 %v2948, 7
        %v2950 = vsub.s32 0, %v2949
        %v2951 = vrot.slane %v2932, %v2950
        %v2953 = vmul.f32 %v2946, %v2951
        %v2955 = vlaneseq
        %v2956 = vshrl.u32 %v2955, 7
        %v2957 = vsub.s32 0, %v2956
        %v2958 = vrot.slane %v2933, %v2957
        %v2960 = vadd.f32 %v2953, %v2958
        %v2961 = vsel %vm603, %v2960, 0.0
        %v2962 = vrot.slane %v2961, 4
        %v2963 = vadd.f32 %v2961, %v2962
        %v2964 = vrot.slane %v2963, 2
        %v2965 = vadd.f32 %v2963, %v2964
        %v2966 = vrot.slane %v2965, 1
        %v2967 = vadd.f32 %v2965, %v2966
        %v2968 = vrcp.pop 8.0
        %v2969 = vmul.f32 %v2967, %v2968
        %v2970 = vld [vmem:[%s13] sm:$0xff]
        %v2971 = vld [vmem:[%s13 + $0x8] sm:$0xff]
        %v2972 = vld [vmem:[%s13 + $0x10] sm:$0xff]
        %v2973 = vld [vmem:[%s13 + $0x18] sm:$0xff]
        %v2974 = vld [vmem:[%s13 + $0x20] sm:$0xff]
        %v2975 = vld [vmem:[%s14] sm:$0x1]
        %v2977 = vsel %vm603, %v2969, 0
        %2979 = vmatprep.subr.mxu0 0.0
        %2980 = vmatpush1.msra.mxu0 %v2970
        %2981 = vmatprep.subr.mxu0 0.0
        %2982 = vmatpush1.msra.mxu0 %v2971
        %2983 = vmatprep.subr.mxu0 0.0
        %2984 = vmatpush1.msra.mxu0 %v2972
        %2985 = vmatprep.subr.mxu0 0.0
        %2986 = vmatpush1.msra.mxu0 %v2973
        %2987 = vmatprep.subr.mxu0 0.0
        %2988 = vmatpush1.msra.mxu0 %v2974
        %2989 = vmatprep.subr.mxu0 0.0
        %2990 = vmatpush1.msra.mxu0 0.0
        %2991 = vmatprep.subr.mxu0 0.0
        %2992 = vmatpush1.msra.mxu0 0.0
        %2993 = vmatprep.subr.mxu0 0.0
        %2994 = vmatpush1.msra.mxu0 0.0
        %2995 = vmatprep.subr.mxu0 0.0
        %2996 = vmatpush1.msra.mxu0 0.0
        %2997 = vmatprep.subr.mxu0 0.0
        %2998 = vmatpush1.msra.mxu0 0.0
        %2999 = vmatprep.subr.mxu0 0.0
        %3000 = vmatpush1.msra.mxu0 0.0
        %3001 = vmatprep.subr.mxu0 0.0
        %3002 = vmatpush1.msra.mxu0 0.0
        %3003 = vmatprep.subr.mxu0 0.0
        %3004 = vmatpush1.msra.mxu0 0.0
        %3005 = vmatprep.subr.mxu0 0.0
        %3006 = vmatpush1.msra.mxu0 0.0
        %3007 = vmatprep.subr.mxu0 0.0
        %3008 = vmatpush1.msra.mxu0 0.0
        %3009 = vmatprep.subr.mxu0 0.0
        %3010 = vmatpush1.msra.mxu0 0.0
        %3011 = vmatprep.subr.mxu0 0.0
        %3012 = vmatpush1.msra.mxu0 0.0
        %3013 = vmatprep.subr.mxu0 0.0
        %3014 = vmatpush1.msra.mxu0 0.0
        %3015 = vmatprep.subr.mxu0 0.0
        %3016 = vmatpush1.msra.mxu0 0.0
        %3017 = vmatprep.subr.mxu0 0.0
        %3018 = vmatpush1.msra.mxu0 0.0
        %3019 = vmatprep.subr.mxu0 0.0
        %3020 = vmatpush1.msra.mxu0 0.0
        %3021 = vmatprep.subr.mxu0 0.0
        %3022 = vmatpush1.msra.mxu0 0.0
        %3023 = vmatprep.subr.mxu0 0.0
        %3024 = vmatpush1.msra.mxu0 0.0
        %3025 = vmatprep.subr.mxu0 0.0
        %3026 = vmatpush1.msra.mxu0 0.0
        %3027 = vmatprep.subr.mxu0 0.0
        %3028 = vmatpush1.msra.mxu0 0.0
        %3029 = vmatprep.subr.mxu0 0.0
        %3030 = vmatpush1.msra.mxu0 0.0
        %3031 = vmatprep.subr.mxu0 0.0
        %3032 = vmatpush1.msra.mxu0 0.0
        %3033 = vmatprep.subr.mxu0 0.0
        %3034 = vmatpush1.msra.mxu0 0.0
        %3035 = vmatprep.subr.mxu0 0.0
        %3036 = vmatpush1.msra.mxu0 0.0
        %3037 = vmatprep.subr.mxu0 0.0
        %3038 = vmatpush1.msra.mxu0 0.0
        %3039 = vmatprep.subr.mxu0 0.0
        %3040 = vmatpush1.msra.mxu0 0.0
        %3041 = vmatprep.subr.mxu0 0.0
        %3042 = vmatpush1.msra.mxu0 0.0
        %3043 = vmatprep.mubr.f32.mxu0 0.0
        %3044 = vmatmul.mubr.f32.gmra.mrb[0].mxu0 %v2977
        %v3045 = vpop.f32.mrb[0].mxu0
        %v3046 = vadd.f32 %v2975, %v3045
        %v3047 = vpop.f32.mrb[0].mxu0
        %3048 = vdwg.mxu0
        %3049 = vst [vmem:[%s565] sm:$0x1] %v3046
        %s3050 = sand.u32 %s423, 1
        %s3051 = scalar_lea.sflag [#allocation3], %s3050
        %s3052 = sand.u32 %s423, 1
        %s3053 = scalar_lea.vmem [#allocation2], %s3052
        // Predicated region
        $region93: #{tpu_custom_call.1} parent=91 // pred_check
          %p3054 = pneg %p433
        $region94: #{tpu_custom_call.1} parent=91 // pred_check_branch
          %3056 = sbr.rel (%p3054) target = $region96
        $region95: #{tpu_custom_call.1} parent=91 // pred_region
          %s3058 = ssub.s32 16, 16
          %3059 = vsyncadd %s3051, %s3058
          %s3060 = smul.addr %s32, 16
          %s3061 = scalar_lea.hbm %s18, %s3060
          %s3063 = sshll.u32 %s3053, 4
          %s3064 = int_to_ptr.vmem [resolvable:$true] %s3063
          %3066 = dma.vmem_to_hbm [thread:$0]  %s3064, 16, %s3061, %s3051
        $region96: #{tpu_custom_call.1} parent=91 // pred_fallthru
          _
      $region92: #{tpu_custom_call.1} parent=5 // pred_fallthru
        _
      %p3067 = scmp.le.s32.totalorder 2, %s27
      // Predicated region
      $region97: #{tpu_custom_call.1} parent=5 // pred_check
        %p3068 = pneg %p3067
      $region98: #{tpu_custom_call.1} parent=5 // pred_check_branch
        %3070 = sbr.rel (%p3068) target = $region100
      $region99: #{tpu_custom_call.1} parent=5 // pred_region
        %s3071 = ssub.s32 %s27, 2
        // Predicated region
        $region101: #{tpu_custom_call.1} parent=99 // pred_check
          %p3072 = pneg %p439
        $region102: #{tpu_custom_call.1} parent=99 // pred_check_branch
          %3074 = sbr.rel (%p3072) target = $region104
        $region103: #{tpu_custom_call.1} parent=99 // pred_region
          %s3075 = sand.u32 %s424, 1
          %s3076 = scalar_lea.sflag [#allocation3], %s3075
          %s3077 = sand.u32 %s424, 1
          %s3078 = scalar_lea.vmem [#allocation2], %s3077
          %3079 = dma.done %s3076, 16
        $region104: #{tpu_custom_call.1} parent=99 // pred_fallthru
          _
      $region100: #{tpu_custom_call.1} parent=5 // pred_fallthru
        _
    $region6: #{tpu_custom_call.1} parent=1 // loop_footer
      %s31 = sadd.s32 1, %s27
    $region7: #{tpu_custom_call.1} parent=1 // loop_footer_branch
      %26 = sbr.rel target = $region3
    $region8: #{tpu_custom_call.1} parent=1 // loop_exit
      _
    %3080 = vsyncpa [#allocation3], 1
    %s3081 = scalar_lea.sflag [#allocation3], 1
    %3082 = vsyncpa %s3081, 1

</llo_original>
